<compile_context>
chip_gen: v5e
topology: v5e:2x2
jax: 0.10.0
libtpu: 0.0.40
codegen_flags: <defaults>
</compile_context>

<pallas_src>
import functools

import jax
import jax.numpy as jnp
from jax import lax
from jax.experimental import pallas as pl
from jax.experimental.pallas import tpu as pltpu

LANE = 128                      # channel dims are padded to a multiple of the lane width
_EPS = 1e-5                     # nn.BatchNorm2d default eps


def _default_vmem_limit():
    """Generation-aware VMEM budget: ~3/4 of physical VMEM (96 MiB on v5e/v6e's
    128 MiB, 48 MiB on v7x's 64 MiB), conservative fallback if the query fails."""
    try:
        cap = int(pltpu.get_tpu_info().vmem_capacity_bytes)
    except Exception:
        cap = 64 * 1024 * 1024
    return max(32 * 1024 * 1024, min(3 * cap // 4, 100 * 1024 * 1024))


_VMEM_LIMIT = _default_vmem_limit()


def _round_up(x, m):
    return (x + m - 1) // m * m


def _flat_tile(m, cap=2048):
    """Largest multiple-of-8 divisor of m that is <= cap.  Big tiles keep the
    mem-bound elementwise kernels near the HBM roofline and amortize grid-step
    overhead; the search avoids a pathological single-(M, C) block."""
    best = 0
    for t in range(8, min(m, cap) + 1, 8):
        if m % t == 0:
            best = t
    if best:
        return best
    # TODO(synk): masked tail tile for M not divisible by 8.
    return m


def _row_tile(oh, ow, max_rows=256):
    """Largest divisor toh of OH with toh*OW <= max_rows and toh*OW % 8 == 0."""
    best = 0
    for t in range(1, oh + 1):
        if oh % t == 0 and t * ow <= max_rows and (t * ow) % 8 == 0:
            best = t
    if best:
        return best
    if ow % 8 == 0:
        return 1
    if (oh * ow) % 8 == 0:
        return oh
    raise NotImplementedError(
        "TODO(synk): ragged spatial tiles (toh*OW % 8 != 0) need a masked tail")


# ---------------------------------------------------------------------------
# Spatial conv (K-packed tap accumulation) + partial BatchNorm statistics
# ---------------------------------------------------------------------------

def _make_conv_tap_kernel(kh, kw, sh, sw, toh, ow):
    tm = toh * ow
    span = (toh - 1) * sh + 1          # contiguous input rows needed per tap row

    def kernel(img_ref, w_ref, y_ref, stat_ref, acc_ref):
        cin_p = img_ref.shape[-1]
        t = pl.program_id(1)
        row0 = t * (toh * sh)
        for i in range(kh):
            # bf16 rows straight from VMEM -> MXU; no fp32 upcast/downcast churn.
            rows = img_ref[0, pl.ds(row0 + i, span)]            # (span, Wp, cin_p)
            if sh > 1:
                rows = rows[::sh]                               # (toh, Wp, cin_p)
            # Pack the kw taps of this kernel row along K: one deep MXU dot
            # (K = kw*cin_p) instead of kw shallow dots + VPU accumulates.
            taps = [rows[:, j:j + (ow - 1) * sw + 1:sw, :].reshape(tm, cin_p)
                    for j in range(kw)]
            lhs = taps[0] if kw == 1 else jnp.concatenate(taps, axis=-1)
            contrib = jnp.dot(lhs, w_ref[i], preferred_element_type=jnp.float32)
            if i == 0:
                acc_ref[...] = contrib        # fp32 accumulation lives in VMEM scratch
            else:
                acc_ref[...] += contrib
        acc = acc_ref[...]
        y_ref[...] = acc.astype(y_ref.dtype)                    # bf16 to HBM
        # Per-block partial BatchNorm statistics from the fp32 accumulator.
        stat_ref[0, pl.ds(0, 1), :] = jnp.sum(acc, axis=0, keepdims=True)
        stat_ref[0, pl.ds(1, 1), :] = jnp.sum(acc * acc, axis=0, keepdims=True)

    return kernel


def conv2d_bn_stats(img, w_rows, kh, kw, sh, sw, oh, ow, toh):
    """img: (N, Hp, Wp, Cin_p) bf16, spatially + channel padded.
    w_rows: (kh, kw*Cin_p, Cout_p) bf16 (the kw taps of each kernel row packed along K).
    Returns y: (N*OH*OW, Cout_p) bf16 (flattened NHWC rows) and per-grid-block
    stats: (G, 2, Cout_p) fp32 = per-channel (sum, sum of squares) of the fp32 conv."""
    n, hp, wp, cin_p = img.shape
    cout_p = w_rows.shape[-1]
    assert oh % toh == 0, "row tile must divide OH"
    tm = toh * ow
    assert tm % 8 == 0, "toh*OW must be a multiple of 8 for a legal BlockSpec"
    t_blocks = oh // toh
    m = n * oh * ow

    y, stats = pl.pallas_call(
        _make_conv_tap_kernel(kh, kw, sh, sw, toh, ow),
        out_shape=(jax.ShapeDtypeStruct((m, cout_p), jnp.bfloat16),
                   jax.ShapeDtypeStruct((n * t_blocks, 2, cout_p), jnp.float32)),
        grid_spec=pltpu.PrefetchScalarGridSpec(
            num_scalar_prefetch=0,
            grid=(n, t_blocks),
            in_specs=[
                # Whole padded image of batch element `nb`: DMA'd once, resident
                # while t varies.
                # TODO(synk): very large feature maps on v7x (64 MiB VMEM) want a
                # single-buffered or halo'd-row manual-DMA variant of this spec.
                pl.BlockSpec((1, hp, wp, cin_p), lambda nb, t: (nb, 0, 0, 0)),
                pl.BlockSpec((kh, kw * cin_p, cout_p), lambda nb, t: (0, 0, 0)),
            ],
            out_specs=[
                pl.BlockSpec((tm, cout_p), lambda nb, t: (nb * t_blocks + t, 0)),
                pl.BlockSpec((1, 2, cout_p), lambda nb, t: (nb * t_blocks + t, 0, 0)),
            ],
            scratch_shapes=[pltpu.VMEM((tm, cout_p), jnp.float32)]),
        compiler_params=pltpu.CompilerParams(
            dimension_semantics=("parallel", "parallel"),
            vmem_limit_bytes=_VMEM_LIMIT),
    )(img, w_rows)
    return y, stats


# ---------------------------------------------------------------------------
# 1x1 conv with BN2+ReLU fused into its input path (+ partial stats)
# ---------------------------------------------------------------------------

def _affine_relu_matmul_kernel(y2_ref, sc_ref, sf_ref, w_ref, y3_ref, stat_ref):
    # Exact fusion: the 1x1 conv has no padding, so rows map one-to-one.
    h = jnp.maximum(y2_ref[...].astype(jnp.float32) * sc_ref[...] + sf_ref[...], 0.0)
    acc = jnp.dot(h.astype(jnp.bfloat16), w_ref[...],
                  preferred_element_type=jnp.float32)
    y3_ref[...] = acc.astype(y3_ref.dtype)
    stat_ref[0, pl.ds(0, 1), :] = jnp.sum(acc, axis=0, keepdims=True)
    stat_ref[0, pl.ds(1, 1), :] = jnp.sum(acc * acc, axis=0, keepdims=True)


def conv1x1_fused_bn_relu_stats(y2, scale2, shift2, w3):
    m, cin_p = y2.shape
    cout_p = w3.shape[-1]
    tm = _flat_tile(m)
    g = m // tm
    y3, stats = pl.pallas_call(
        _affine_relu_matmul_kernel,
        out_shape=(jax.ShapeDtypeStruct((m, cout_p), jnp.bfloat16),
                   jax.ShapeDtypeStruct((g, 2, cout_p), jnp.float32)),
        grid_spec=pltpu.PrefetchScalarGridSpec(
            num_scalar_prefetch=0,
            grid=(g,),
            in_specs=[pl.BlockSpec((tm, cin_p), lambda i: (i, 0)),
                      pl.BlockSpec((1, cin_p), lambda i: (0, 0)),
                      pl.BlockSpec((1, cin_p), lambda i: (0, 0)),
                      pl.BlockSpec((cin_p, cout_p), lambda i: (0, 0))],
            out_specs=[pl.BlockSpec((tm, cout_p), lambda i: (i, 0)),
                       pl.BlockSpec((1, 2, cout_p), lambda i: (i, 0, 0))]),
        compiler_params=pltpu.CompilerParams(
            dimension_semantics=("parallel",),
            vmem_limit_bytes=_VMEM_LIMIT),
    )(y2, scale2.reshape(1, cin_p), shift2.reshape(1, cin_p), w3)
    return y3, stats


# ---------------------------------------------------------------------------
# Elementwise BN epilogues (bf16 in / bf16 out, fp32 math)
# ---------------------------------------------------------------------------

def _bn_relu_kernel(y_ref, sc_ref, sf_ref, o_ref):
    v = y_ref[...].astype(jnp.float32) * sc_ref[...] + sf_ref[...]
    o_ref[...] = jnp.maximum(v, 0.0).astype(o_ref.dtype)


def bn_relu(y, scale, shift, out_dtype=jnp.bfloat16):
    m, c = y.shape
    tm = _flat_tile(m)
    return pl.pallas_call(
        _bn_relu_kernel,
        out_shape=jax.ShapeDtypeStruct((m, c), out_dtype),
        grid_spec=pltpu.PrefetchScalarGridSpec(
            num_scalar_prefetch=0,
            grid=(m // tm,),
            in_specs=[pl.BlockSpec((tm, c), lambda i: (i, 0)),
                      pl.BlockSpec((1, c), lambda i: (0, 0)),
                      pl.BlockSpec((1, c), lambda i: (0, 0))],
            out_specs=pl.BlockSpec((tm, c), lambda i: (i, 0))),
        compiler_params=pltpu.CompilerParams(
            dimension_semantics=("parallel",),
            vmem_limit_bytes=_VMEM_LIMIT),
    )(y, scale.reshape(1, c), shift.reshape(1, c))


def _bn_residual_relu_kernel(y_ref, sc_ref, sf_ref, r_ref, o_ref):
    v = (y_ref[...].astype(jnp.float32) * sc_ref[...] + sf_ref[...]
         + r_ref[...].astype(jnp.float32))
    o_ref[...] = jnp.maximum(v, 0.0).astype(o_ref.dtype)


def bn_residual_relu(y, scale, shift, residual):
    m, c = y.shape
    tm = _flat_tile(m)
    return pl.pallas_call(
        _bn_residual_relu_kernel,
        out_shape=jax.ShapeDtypeStruct((m, c), jnp.bfloat16),
        grid_spec=pltpu.PrefetchScalarGridSpec(
            num_scalar_prefetch=0,
            grid=(m // tm,),
            in_specs=[pl.BlockSpec((tm, c), lambda i: (i, 0)),
                      pl.BlockSpec((1, c), lambda i: (0, 0)),
                      pl.BlockSpec((1, c), lambda i: (0, 0)),
                      pl.BlockSpec((tm, c), lambda i: (i, 0))],
            out_specs=pl.BlockSpec((tm, c), lambda i: (i, 0))),
        compiler_params=pltpu.CompilerParams(
            dimension_semantics=("parallel",),
            vmem_limit_bytes=_VMEM_LIMIT),
        input_output_aliases={0: 0},   # reuse the bf16 y3 buffer for the output
    )(y, scale.reshape(1, c), shift.reshape(1, c), residual)


# ---------------------------------------------------------------------------
# BatchNorm affine from per-block statistics (Chan parallel-variance combine)
# ---------------------------------------------------------------------------

def _bn_affine(block_stats, rows_per_block, gamma, beta, c_pad, eps=_EPS):
    """Training-mode BatchNorm folded into y*scale + shift (biased batch variance,
    matching nn.BatchNorm2d's normalization).  block_stats: (G, 2, C_pad) fp32
    per-block (sum, sum-of-squares), combined with Chan's parallel formula (better
    conditioned than a global E[y^2]-E[y]^2).  Padded channels keep gamma=beta=0 so
    their scale/shift stay exactly zero."""
    c = gamma.shape[0]
    g = jnp.zeros((c_pad,), jnp.float32).at[:c].set(gamma.astype(jnp.float32))
    b = jnp.zeros((c_pad,), jnp.float32).at[:c].set(beta.astype(jnp.float32))
    s = block_stats[:, 0, :]                       # (G, C_pad)
    ss = block_stats[:, 1, :]
    nb = float(rows_per_block)
    count = rows_per_block * block_stats.shape[0]
    mean_b = s / nb
    m2_b = jnp.maximum(ss - s * mean_b, 0.0)       # per-block sum of squared deviations
    mean = jnp.sum(s, axis=0) / count
    m2 = jnp.sum(m2_b, axis=0) + nb * jnp.sum(jnp.square(mean_b - mean), axis=0)
    var = jnp.maximum(m2 / count, 0.0)
    scale = g * lax.rsqrt(var + eps)
    shift = b - mean * scale
    return scale, shift


# ---------------------------------------------------------------------------
# ResBN parameters & forward
# ---------------------------------------------------------------------------

def init_resbn_params(key, in_c, out_c, k_size, bias):
    kh, kw = k_size
    mid = out_c // 2
    ks = jax.random.split(key, 12)

    def w(k, kh_, kw_, cin, cout):
        return jax.random.normal(k, (kh_, kw_, cin, cout), jnp.float32) * 0.1

    def b(k, c):
        return (jax.random.normal(k, (c,), jnp.float32) * 0.1) if bias \
            else jnp.zeros((c,), jnp.float32)

    return {
        'w1': w(ks[0], kh, kw, in_c, out_c), 'b1': b(ks[1], out_c),
        'g1': 1.0 + 0.1 * jax.random.normal(ks[2], (out_c,), jnp.float32),
        'be1': 0.1 * jax.random.normal(ks[3], (out_c,), jnp.float32),
        'w2': w(ks[4], 3, 3, out_c, mid), 'b2': b(ks[5], mid),
        'g2': 1.0 + 0.1 * jax.random.normal(ks[6], (mid,), jnp.float32),
        'be2': 0.1 * jax.random.normal(ks[7], (mid,), jnp.float32),
        'w3': w(ks[8], 1, 1, mid, out_c), 'b3': b(ks[9], out_c),
        'g3': 1.0 + 0.1 * jax.random.normal(ks[10], (out_c,), jnp.float32),
        'be3': 0.1 * jax.random.normal(ks[11], (out_c,), jnp.float32),
    }


def _pack_conv_weights(w, cin_p, cout_p):
    """(kh, kw, Cin, Cout) -> (kh, kw*Cin_p, Cout_p) bf16, kw taps packed along K."""
    kh, kw, cin, cout = w.shape
    wp = jnp.pad(w, ((0, 0), (0, 0), (0, cin_p - cin), (0, cout_p - cout)))
    return wp.reshape(kh, kw * cin_p, cout_p).astype(jnp.bfloat16)


def resbn_forward(x_nchw, p, k_size, stride, pad):
    kh, kw = k_size
    sh, sw = stride
    ph, pw = pad

    x = jnp.transpose(x_nchw, (0, 2, 3, 1)).astype(jnp.float32)     # NHWC
    n, h, w, in_c = x.shape
    out_c = p['w1'].shape[-1]
    mid = p['w2'].shape[-1]

    cin_p = _round_up(in_c, LANE)
    cout_p = _round_up(out_c, LANE)
    mid_p = _round_up(mid, LANE)

    oh = (h + 2 * ph - kh) // sh + 1
    ow = (w + 2 * pw - kw) // sw + 1
    m = n * oh * ow

    # ---- model1: conv(k_size, stride, pad) -> BN -> ReLU --------------------
    # Conv biases are dropped: a bias added right before training-mode BN cancels.
    # TODO(synk): fold the spatial zero-padding (jnp.pad below) into the producing
    # kernels' writeback to save one activation HBM round trip per conv.
    xpad = jnp.pad(x.astype(jnp.bfloat16),
                   ((0, 0), (ph, ph), (pw, pw), (0, cin_p - in_c)))
    w1 = _pack_conv_weights(p['w1'], cin_p, cout_p)
    toh1 = _row_tile(oh, ow)
    y1, st1 = conv2d_bn_stats(xpad, w1, kh, kw, sh, sw, oh, ow, toh1)
    sc1, sf1 = _bn_affine(st1, toh1 * ow, p['g1'], p['be1'], cout_p)
    x1 = bn_relu(y1, sc1, sf1)                                      # (m, cout_p) bf16

    # ---- model2: conv 3x3 s1 p1 -> BN -> ReLU (BN2+ReLU fused into conv3) ---
    x1_pad = jnp.pad(x1.reshape(n, oh, ow, cout_p), ((0, 0), (1, 1), (1, 1), (0, 0)))
    w2 = _pack_conv_weights(p['w2'], cout_p, mid_p)
    toh2 = _row_tile(oh, ow)
    y2, st2 = conv2d_bn_stats(x1_pad, w2, 3, 3, 1, 1, oh, ow, toh2)
    sc2, sf2 = _bn_affine(st2, toh2 * ow, p['g2'], p['be2'], mid_p)

    # ---- model2: conv 1x1 -> BN3 (affine+ReLU of BN2 fused into the kernel) --
    w3 = jnp.pad(p['w3'].reshape(mid, out_c),
                 ((0, mid_p - mid), (0, cout_p - out_c))).astype(jnp.bfloat16)
    y3, st3 = conv1x1_fused_bn_relu_stats(y2, sc2, sf2, w3)
    sc3, sf3 = _bn_affine(st3, m // st3.shape[0], p['g3'], p['be3'], cout_p)

    # ---- residual add + final ReLU ------------------------------------------
    out = bn_residual_relu(y3, sc3, sf3, x1)                        # (m, cout_p) bf16
    out = out[:, :out_c].astype(jnp.float32).reshape(n, oh, ow, out_c)
    return jnp.transpose(out, (0, 3, 1, 2))                         # back to NCHW


# ---------------------------------------------------------------------------
# Pure-JAX reference
# ---------------------------------------------------------------------------

def ref_forward(x_nchw, p, k_size, stride, pad, gemm_dtype=jnp.float32,
                round_intermediates=False, eps=_EPS):
    """Reference.  With gemm_dtype=bfloat16 the conv inputs are rounded like in the
    Pallas path; with round_intermediates=True the stored activations (conv outputs,
    post-ReLU activations, final output) are also rounded to bf16 like the kernel
    path.  Conv biases ARE applied here; the kernel path drops them since
    training-mode BN cancels them exactly."""
    x = jnp.transpose(x_nchw, (0, 2, 3, 1)).astype(jnp.float32)

    def rnd(t):
        return t.astype(jnp.bfloat16).astype(jnp.float32) if round_intermediates else t

    def conv(inp, wgt, bias_, st, pd):
        y = lax.conv_general_dilated(
            inp.astype(gemm_dtype), wgt.astype(gemm_dtype),
            window_strides=st,
            padding=[(pd[0], pd[0]), (pd[1], pd[1])],
            dimension_numbers=('NHWC', 'HWIO', 'NHWC'),
            preferred_element_type=jnp.float32)
        return y + bias_.reshape(1, 1, 1, -1)

    def bn(y, g, b):
        mu = y.mean(axis=(0, 1, 2))
        var = y.var(axis=(0, 1, 2))
        return (y - mu) * (g * lax.rsqrt(var + eps)) + b

    y1 = rnd(conv(x, p['w1'], p['b1'], stride, pad))
    x1 = rnd(jax.nn.relu(bn(y1, p['g1'], p['be1'])))
    y2 = rnd(conv(x1, p['w2'], p['b2'], (1, 1), (1, 1)))
    hh = jax.nn.relu(bn(y2, p['g2'], p['be2']))      # not stored by the kernel path
    y3 = rnd(conv(hh, p['w3'], p['b3'], (1, 1), (0, 0)))
    rr = bn(y3, p['g3'], p['be3'])
    out = rnd(jax.nn.relu(x1 + rr))
    return jnp.transpose(out, (0, 3, 1, 2))


if __name__ == "__main__":
    key = jax.random.PRNGKey(0)
    kx, kp = jax.random.split(key)

    in_c, out_c = 4, 32
    k_size, stride, pad, bias = (3, 3), (1, 1), (1, 1), True

    x = jax.random.normal(kx, (2, in_c, 16, 16), jnp.float32)
    params = init_resbn_params(kp, in_c, out_c, k_size, bias)

    fwd = jax.jit(functools.partial(resbn_forward, k_size=k_size,
                                    stride=stride, pad=pad))
    out = jax.block_until_ready(fwd(x, params))
    assert out.shape == (2, out_c, 16, 16)

    # Structural check: reference whose conv inputs AND stored intermediates are
    # rounded to bf16 like the kernel path (catches any indexing/fusion/BN mistake).
    ref_bf = ref_forward(x, params, k_size, stride, pad,
                         gemm_dtype=jnp.bfloat16, round_intermediates=True)
    # Semantic sanity check: full-fp32 reference (loose tol covers all bf16 rounding).
    ref_f32 = ref_forward(x, params, k_size, stride, pad, gemm_dtype=jnp.float32)

    if not jnp.allclose(out, ref_bf, atol=5e-2, rtol=5e-2):
        raise AssertionError(
            "mismatch vs bf16-matched reference, max abs err "
            f"{jnp.max(jnp.abs(out - ref_bf))}")
    if not jnp.allclose(out, ref_f32, atol=1.5e-1, rtol=1e-1):
        raise AssertionError(
            "mismatch vs fp32 reference, max abs err "
            f"{jnp.max(jnp.abs(out - ref_f32))}")
    print("KERNEL_OK")
</pallas_src>

<mosaic_0001>
module attributes {stable_mosaic.version = 11 : i64} {
  func.func @kernel(%arg0: i32, %arg1: i32, %arg2: memref<1x18x18x128xbf16, #tpu.memory_space<vmem>>, %arg3: memref<3x384x128xbf16, #tpu.memory_space<vmem>>, %arg4: memref<256x128xbf16, #tpu.memory_space<vmem>>, %arg5: memref<1x2x128xf32, #tpu.memory_space<vmem>>, %arg6: memref<256x128xf32, #tpu.memory_space<vmem>>) attributes {dimension_semantics = [#tpu.dimension_semantics<parallel>, #tpu.dimension_semantics<parallel>], iteration_bounds = array<i64: 2, 1>, scalar_prefetch = 0 : i64, scratch_operands = 1 : i64, tpu.core_type = #tpu.core_type<tc>, window_params = [{transform_indices = @transform_0, window_bounds = array<i64: 1, 18, 18, 128>}, {pipeline_mode = #tpu.pipeline_mode<synchronous>, transform_indices = @transform_1, window_bounds = array<i64: 3, 384, 128>}, {transform_indices = @transform_2, window_bounds = array<i64: 256, 128>}, {transform_indices = @transform_3, window_bounds = array<i64: 1, 2, 128>}]} {
    %c16_i32 = arith.constant 16 : i32
    %0 = arith.muli %arg1, %c16_i32 : i32
    %c0_i32 = arith.constant 0 : i32
    %1 = arith.addi %0, %c0_i32 : i32
    %c0 = arith.constant 0 : index
    %2 = arith.index_cast %1 : i32 to index
    %c0_0 = arith.constant 0 : index
    %c0_1 = arith.constant 0 : index
    %3 = vector.load %arg2[%c0, %2, %c0_0, %c0_1] : memref<1x18x18x128xbf16, #tpu.memory_space<vmem>>, vector<1x16x18x128xbf16>
    %4 = vector.shape_cast %3 : vector<1x16x18x128xbf16> to vector<16x18x128xbf16>
    %5 = vector.extract_strided_slice %4 {offsets = [0, 0, 0], sizes = [16, 16, 128], strides = [1, 1, 1]} : vector<16x18x128xbf16> to vector<16x16x128xbf16>
    %6 = vector.shape_cast %5 : vector<16x16x128xbf16> to vector<256x128xbf16>
    %7 = vector.extract_strided_slice %4 {offsets = [0, 1, 0], sizes = [16, 16, 128], strides = [1, 1, 1]} : vector<16x18x128xbf16> to vector<16x16x128xbf16>
    %8 = vector.shape_cast %7 : vector<16x16x128xbf16> to vector<256x128xbf16>
    %9 = vector.extract_strided_slice %4 {offsets = [0, 2, 0], sizes = [16, 16, 128], strides = [1, 1, 1]} : vector<16x18x128xbf16> to vector<16x16x128xbf16>
    %10 = vector.shape_cast %9 : vector<16x16x128xbf16> to vector<256x128xbf16>
    %11 = tpu.concatenate %6, %8, %10 in 1 : vector<256x128xbf16>, vector<256x128xbf16>, vector<256x128xbf16> -> vector<256x384xbf16>
    %c0_2 = arith.constant 0 : index
    %c0_3 = arith.constant 0 : index
    %c0_4 = arith.constant 0 : index
    %12 = vector.load %arg3[%c0_2, %c0_3, %c0_4] : memref<3x384x128xbf16, #tpu.memory_space<vmem>>, vector<1x384x128xbf16>
    %13 = vector.shape_cast %12 : vector<1x384x128xbf16> to vector<384x128xbf16>
    %cst = arith.constant dense<0.000000e+00> : vector<256x128xf32>
    %14 = tpu.matmul %11, %13, %cst {dimension_numbers = #tpu.dot_dimension_numbers<[1], [0], [0], [1], [0, 0, 1, 1], [], []>} : vector<256x384xbf16>, vector<384x128xbf16>, vector<256x128xf32> -> vector<256x128xf32>
    %c0_5 = arith.constant 0 : index
    %c0_6 = arith.constant 0 : index
    %15 = vector.load %arg6[%c0_5, %c0_6] : memref<256x128xf32, #tpu.memory_space<vmem>>, vector<256x128xf32>
    tpu.vector_store %arg6[%c0_5, %c0_6], %14 {strides = array<i32>} : memref<256x128xf32, #tpu.memory_space<vmem>>, vector<256x128xf32>,
    %c1_i32 = arith.constant 1 : i32
    %16 = arith.addi %0, %c1_i32 : i32
    %c0_7 = arith.constant 0 : index
    %17 = arith.index_cast %16 : i32 to index
    %c0_8 = arith.constant 0 : index
    %c0_9 = arith.constant 0 : index
    %18 = vector.load %arg2[%c0_7, %17, %c0_8, %c0_9] : memref<1x18x18x128xbf16, #tpu.memory_space<vmem>>, vector<1x16x18x128xbf16>
    %19 = vector.shape_cast %18 : vector<1x16x18x128xbf16> to vector<16x18x128xbf16>
    %20 = vector.extract_strided_slice %19 {offsets = [0, 0, 0], sizes = [16, 16, 128], strides = [1, 1, 1]} : vector<16x18x128xbf16> to vector<16x16x128xbf16>
    %21 = vector.shape_cast %20 : vector<16x16x128xbf16> to vector<256x128xbf16>
    %22 = vector.extract_strided_slice %19 {offsets = [0, 1, 0], sizes = [16, 16, 128], strides = [1, 1, 1]} : vector<16x18x128xbf16> to vector<16x16x128xbf16>
    %23 = vector.shape_cast %22 : vector<16x16x128xbf16> to vector<256x128xbf16>
    %24 = vector.extract_strided_slice %19 {offsets = [0, 2, 0], sizes = [16, 16, 128], strides = [1, 1, 1]} : vector<16x18x128xbf16> to vector<16x16x128xbf16>
    %25 = vector.shape_cast %24 : vector<16x16x128xbf16> to vector<256x128xbf16>
    %26 = tpu.concatenate %21, %23, %25 in 1 : vector<256x128xbf16>, vector<256x128xbf16>, vector<256x128xbf16> -> vector<256x384xbf16>
    %c1 = arith.constant 1 : index
    %c0_10 = arith.constant 0 : index
    %c0_11 = arith.constant 0 : index
    %27 = vector.load %arg3[%c1, %c0_10, %c0_11] : memref<3x384x128xbf16, #tpu.memory_space<vmem>>, vector<1x384x128xbf16>
    %28 = vector.shape_cast %27 : vector<1x384x128xbf16> to vector<384x128xbf16>
    %cst_12 = arith.constant dense<0.000000e+00> : vector<256x128xf32>
    %29 = tpu.matmul %26, %28, %cst_12 {dimension_numbers = #tpu.dot_dimension_numbers<[1], [0], [0], [1], [0, 0, 1, 1], [], []>} : vector<256x384xbf16>, vector<384x128xbf16>, vector<256x128xf32> -> vector<256x128xf32>
    %c0_13 = arith.constant 0 : index
    %c0_14 = arith.constant 0 : index
    %30 = vector.load %arg6[%c0_13, %c0_14] : memref<256x128xf32, #tpu.memory_space<vmem>>, vector<256x128xf32>
    %31 = arith.addf %30, %29 : vector<256x128xf32>
    %c0_15 = arith.constant 0 : index
    %c0_16 = arith.constant 0 : index
    %32 = vector.load %arg6[%c0_15, %c0_16] : memref<256x128xf32, #tpu.memory_space<vmem>>, vector<256x128xf32>
    tpu.vector_store %arg6[%c0_15, %c0_16], %31 {strides = array<i32>} : memref<256x128xf32, #tpu.memory_space<vmem>>, vector<256x128xf32>,
    %c2_i32 = arith.constant 2 : i32
    %33 = arith.addi %0, %c2_i32 : i32
    %c0_17 = arith.constant 0 : index
    %34 = arith.index_cast %33 : i32 to index
    %c0_18 = arith.constant 0 : index
    %c0_19 = arith.constant 0 : index
    %35 = vector.load %arg2[%c0_17, %34, %c0_18, %c0_19] : memref<1x18x18x128xbf16, #tpu.memory_space<vmem>>, vector<1x16x18x128xbf16>
    %36 = vector.shape_cast %35 : vector<1x16x18x128xbf16> to vector<16x18x128xbf16>
    %37 = vector.extract_strided_slice %36 {offsets = [0, 0, 0], sizes = [16, 16, 128], strides = [1, 1, 1]} : vector<16x18x128xbf16> to vector<16x16x128xbf16>
    %38 = vector.shape_cast %37 : vector<16x16x128xbf16> to vector<256x128xbf16>
    %39 = vector.extract_strided_slice %36 {offsets = [0, 1, 0], sizes = [16, 16, 128], strides = [1, 1, 1]} : vector<16x18x128xbf16> to vector<16x16x128xbf16>
    %40 = vector.shape_cast %39 : vector<16x16x128xbf16> to vector<256x128xbf16>
    %41 = vector.extract_strided_slice %36 {offsets = [0, 2, 0], sizes = [16, 16, 128], strides = [1, 1, 1]} : vector<16x18x128xbf16> to vector<16x16x128xbf16>
    %42 = vector.shape_cast %41 : vector<16x16x128xbf16> to vector<256x128xbf16>
    %43 = tpu.concatenate %38, %40, %42 in 1 : vector<256x128xbf16>, vector<256x128xbf16>, vector<256x128xbf16> -> vector<256x384xbf16>
    %c2 = arith.constant 2 : index
    %c0_20 = arith.constant 0 : index
    %c0_21 = arith.constant 0 : index
    %44 = vector.load %arg3[%c2, %c0_20, %c0_21] : memref<3x384x128xbf16, #tpu.memory_space<vmem>>, vector<1x384x128xbf16>
    %45 = vector.shape_cast %44 : vector<1x384x128xbf16> to vector<384x128xbf16>
    %cst_22 = arith.constant dense<0.000000e+00> : vector<256x128xf32>
    %46 = tpu.matmul %43, %45, %cst_22 {dimension_numbers = #tpu.dot_dimension_numbers<[1], [0], [0], [1], [0, 0, 1, 1], [], []>} : vector<256x384xbf16>, vector<384x128xbf16>, vector<256x128xf32> -> vector<256x128xf32>
    %c0_23 = arith.constant 0 : index
    %c0_24 = arith.constant 0 : index
    %47 = vector.load %arg6[%c0_23, %c0_24] : memref<256x128xf32, #tpu.memory_space<vmem>>, vector<256x128xf32>
    %48 = arith.addf %47, %46 : vector<256x128xf32>
    %c0_25 = arith.constant 0 : index
    %c0_26 = arith.constant 0 : index
    %49 = vector.load %arg6[%c0_25, %c0_26] : memref<256x128xf32, #tpu.memory_space<vmem>>, vector<256x128xf32>
    tpu.vector_store %arg6[%c0_25, %c0_26], %48 {strides = array<i32>} : memref<256x128xf32, #tpu.memory_space<vmem>>, vector<256x128xf32>,
    %c0_27 = arith.constant 0 : index
    %c0_28 = arith.constant 0 : index
    %50 = vector.load %arg6[%c0_27, %c0_28] : memref<256x128xf32, #tpu.memory_space<vmem>>, vector<256x128xf32>
    %51 = arith.truncf %50 : vector<256x128xf32> to vector<256x128xbf16>
    %c0_29 = arith.constant 0 : index
    %c0_30 = arith.constant 0 : index
    %52 = vector.load %arg4[%c0_29, %c0_30] : memref<256x128xbf16, #tpu.memory_space<vmem>>, vector<256x128xbf16>
    tpu.vector_store %arg4[%c0_29, %c0_30], %51 {strides = array<i32>} : memref<256x128xbf16, #tpu.memory_space<vmem>>, vector<256x128xbf16>,
    %cst_31 = arith.constant dense<0.000000e+00> : vector<128xf32>
    %53 = vector.multi_reduction <add>, %50, %cst_31 [0] : vector<256x128xf32> to vector<128xf32>
    %54 = vector.shape_cast %53 : vector<128xf32> to vector<1x128xf32>
    %c0_32 = arith.constant 0 : index
    %c0_33 = arith.constant 0 : index
    %c0_34 = arith.constant 0 : index
    %55 = vector.load %arg5[%c0_32, %c0_33, %c0_34] : memref<1x2x128xf32, #tpu.memory_space<vmem>>, vector<1x1x128xf32>
    %56 = vector.shape_cast %55 : vector<1x1x128xf32> to vector<1x128xf32>
    %57 = vector.shape_cast %54 : vector<1x128xf32> to vector<1x1x128xf32>
    tpu.vector_store %arg5[%c0_32, %c0_33, %c0_34], %57 {strides = array<i32>} : memref<1x2x128xf32, #tpu.memory_space<vmem>>, vector<1x1x128xf32>,
    %58 = arith.mulf %50, %50 : vector<256x128xf32>
    %cst_35 = arith.constant dense<0.000000e+00> : vector<128xf32>
    %59 = vector.multi_reduction <add>, %58, %cst_35 [0] : vector<256x128xf32> to vector<128xf32>
    %60 = vector.shape_cast %59 : vector<128xf32> to vector<1x128xf32>
    %c0_36 = arith.constant 0 : index
    %c1_37 = arith.constant 1 : index
    %c0_38 = arith.constant 0 : index
    %61 = vector.load %arg5[%c0_36, %c1_37, %c0_38] : memref<1x2x128xf32, #tpu.memory_space<vmem>>, vector<1x1x128xf32>
    %62 = vector.shape_cast %61 : vector<1x1x128xf32> to vector<1x128xf32>
    %63 = vector.shape_cast %60 : vector<1x128xf32> to vector<1x1x128xf32>
    tpu.vector_store %arg5[%c0_36, %c1_37, %c0_38], %63 {strides = array<i32>} : memref<1x2x128xf32, #tpu.memory_space<vmem>>, vector<1x1x128xf32>,
    return
  }
  func.func @transform_0(%arg0: i32, %arg1: i32) -> (i32, i32, i32, i32) {
    %c0_i32 = arith.constant 0 : i32
    %c0_i32_0 = arith.constant 0 : i32
    %c0_i32_1 = arith.constant 0 : i32
    %c0_i32_2 = arith.constant 0 : i32
    return %arg0, %c0_i32, %c0_i32_0, %c0_i32_1 : i32, i32, i32, i32
  }
  func.func @transform_1(%arg0: i32, %arg1: i32) -> (i32, i32, i32) {
    %c0_i32 = arith.constant 0 : i32
    %c0_i32_0 = arith.constant 0 : i32
    %c0_i32_1 = arith.constant 0 : i32
    %c0_i32_2 = arith.constant 0 : i32
    return %c0_i32, %c0_i32_0, %c0_i32_1 : i32, i32, i32
  }
  func.func @transform_2(%arg0: i32, %arg1: i32) -> (i32, i32) {
    %c1_i32 = arith.constant 1 : i32
    %0 = arith.muli %arg0, %c1_i32 : i32
    %1 = arith.addi %0, %arg1 : i32
    %c0_i32 = arith.constant 0 : i32
    %c0_i32_0 = arith.constant 0 : i32
    return %1, %c0_i32 : i32, i32
  }
  func.func @transform_3(%arg0: i32, %arg1: i32) -> (i32, i32, i32) {
    %c1_i32 = arith.constant 1 : i32
    %0 = arith.muli %arg0, %c1_i32 : i32
    %1 = arith.addi %0, %arg1 : i32
    %c0_i32 = arith.constant 0 : i32
    %c0_i32_0 = arith.constant 0 : i32
    %c0_i32_1 = arith.constant 0 : i32
    return %1, %c0_i32, %c0_i32_0 : i32, i32, i32
  }
}

module attributes {stable_mosaic.version = 11 : i64} {
  func.func @_bn_relu_kernel(%arg0: i32, %arg1: memref<512x128xbf16, #tpu.memory_space<vmem>>, %arg2: memref<1x128xf32, #tpu.memory_space<vmem>>, %arg3: memref<1x128xf32, #tpu.memory_space<vmem>>, %arg4: memref<512x128xbf16, #tpu.memory_space<vmem>>) attributes {dimension_semantics = [#tpu.dimension_semantics<parallel>], iteration_bounds = array<i64: 1>, scalar_prefetch = 0 : i64, scratch_operands = 0 : i64, tpu.core_type = #tpu.core_type<tc>, window_params = [{transform_indices = @transform_0, window_bounds = array<i64: 512, 128>}, {pipeline_mode = #tpu.pipeline_mode<synchronous>, transform_indices = @transform_1, window_bounds = array<i64: 1, 128>}, {pipeline_mode = #tpu.pipeline_mode<synchronous>, transform_indices = @transform_2, window_bounds = array<i64: 1, 128>}, {transform_indices = @transform_3, window_bounds = array<i64: 512, 128>}]} {
    %c0 = arith.constant 0 : index
    %c0_0 = arith.constant 0 : index
    %0 = vector.load %arg1[%c0, %c0_0] : memref<512x128xbf16, #tpu.memory_space<vmem>>, vector<512x128xbf16>
    %1 = arith.extf %0 : vector<512x128xbf16> to vector<512x128xf32>
    %c0_1 = arith.constant 0 : index
    %c0_2 = arith.constant 0 : index
    %2 = vector.load %arg2[%c0_1, %c0_2] : memref<1x128xf32, #tpu.memory_space<vmem>>, vector<1x128xf32>
    %3 = vector.broadcast %2 : vector<1x128xf32> to vector<512x128xf32>
    %4 = arith.mulf %1, %3 : vector<512x128xf32>
    %c0_3 = arith.constant 0 : index
    %c0_4 = arith.constant 0 : index
    %5 = vector.load %arg3[%c0_3, %c0_4] : memref<1x128xf32, #tpu.memory_space<vmem>>, vector<1x128xf32>
    %6 = vector.broadcast %5 : vector<1x128xf32> to vector<512x128xf32>
    %7 = arith.addf %4, %6 : vector<512x128xf32>
    %cst = arith.constant 0.000000e+00 : f32
    %8 = vector.broadcast %cst : f32 to vector<512x128xf32>
    %9 = arith.maximumf %7, %8 : vector<512x128xf32>
    %10 = arith.truncf %9 : vector<512x128xf32> to vector<512x128xbf16>
    %c0_5 = arith.constant 0 : index
    %c0_6 = arith.constant 0 : index
    %11 = vector.load %arg4[%c0_5, %c0_6] : memref<512x128xbf16, #tpu.memory_space<vmem>>, vector<512x128xbf16>
    tpu.vector_store %arg4[%c0_5, %c0_6], %10 {strides = array<i32>} : memref<512x128xbf16, #tpu.memory_space<vmem>>, vector<512x128xbf16>,
    return
  }
  func.func @transform_0(%arg0: i32) -> (i32, i32) {
    %c0_i32 = arith.constant 0 : i32
    %c0_i32_0 = arith.constant 0 : i32
    return %arg0, %c0_i32 : i32, i32
  }
  func.func @transform_1(%arg0: i32) -> (i32, i32) {
    %c0_i32 = arith.constant 0 : i32
    %c0_i32_0 = arith.constant 0 : i32
    %c0_i32_1 = arith.constant 0 : i32
    return %c0_i32, %c0_i32_0 : i32, i32
  }
  func.func @transform_2(%arg0: i32) -> (i32, i32) {
    %c0_i32 = arith.constant 0 : i32
    %c0_i32_0 = arith.constant 0 : i32
    %c0_i32_1 = arith.constant 0 : i32
    return %c0_i32, %c0_i32_0 : i32, i32
  }
  func.func @transform_3(%arg0: i32) -> (i32, i32) {
    %c0_i32 = arith.constant 0 : i32
    %c0_i32_0 = arith.constant 0 : i32
    return %arg0, %c0_i32 : i32, i32
  }
}

module attributes {stable_mosaic.version = 11 : i64} {
  func.func @_affine_relu_matmul_kernel(%arg0: i32, %arg1: memref<512x128xbf16, #tpu.memory_space<vmem>>, %arg2: memref<1x128xf32, #tpu.memory_space<vmem>>, %arg3: memref<1x128xf32, #tpu.memory_space<vmem>>, %arg4: memref<128x128xbf16, #tpu.memory_space<vmem>>, %arg5: memref<512x128xbf16, #tpu.memory_space<vmem>>, %arg6: memref<1x2x128xf32, #tpu.memory_space<vmem>>) attributes {dimension_semantics = [#tpu.dimension_semantics<parallel>], iteration_bounds = array<i64: 1>, scalar_prefetch = 0 : i64, scratch_operands = 0 : i64, tpu.core_type = #tpu.core_type<tc>, window_params = [{transform_indices = @transform_0, window_bounds = array<i64: 512, 128>}, {pipeline_mode = #tpu.pipeline_mode<synchronous>, transform_indices = @transform_1, window_bounds = array<i64: 1, 128>}, {pipeline_mode = #tpu.pipeline_mode<synchronous>, transform_indices = @transform_2, window_bounds = array<i64: 1, 128>}, {pipeline_mode = #tpu.pipeline_mode<synchronous>, transform_indices = @transform_3, window_bounds = array<i64: 128, 128>}, {transform_indices = @transform_4, window_bounds = array<i64: 512, 128>}, {transform_indices = @transform_5, window_bounds = array<i64: 1, 2, 128>}]} {
    %c0 = arith.constant 0 : index
    %c0_0 = arith.constant 0 : index
    %0 = vector.load %arg1[%c0, %c0_0] : memref<512x128xbf16, #tpu.memory_space<vmem>>, vector<512x128xbf16>
    %1 = arith.extf %0 : vector<512x128xbf16> to vector<512x128xf32>
    %c0_1 = arith.constant 0 : index
    %c0_2 = arith.constant 0 : index
    %2 = vector.load %arg2[%c0_1, %c0_2] : memref<1x128xf32, #tpu.memory_space<vmem>>, vector<1x128xf32>
    %3 = vector.broadcast %2 : vector<1x128xf32> to vector<512x128xf32>
    %4 = arith.mulf %1, %3 : vector<512x128xf32>
    %c0_3 = arith.constant 0 : index
    %c0_4 = arith.constant 0 : index
    %5 = vector.load %arg3[%c0_3, %c0_4] : memref<1x128xf32, #tpu.memory_space<vmem>>, vector<1x128xf32>
    %6 = vector.broadcast %5 : vector<1x128xf32> to vector<512x128xf32>
    %7 = arith.addf %4, %6 : vector<512x128xf32>
    %cst = arith.constant 0.000000e+00 : f32
    %8 = vector.broadcast %cst : f32 to vector<512x128xf32>
    %9 = arith.maximumf %7, %8 : vector<512x128xf32>
    %10 = arith.truncf %9 : vector<512x128xf32> to vector<512x128xbf16>
    %c0_5 = arith.constant 0 : index
    %c0_6 = arith.constant 0 : index
    %11 = vector.load %arg4[%c0_5, %c0_6] : memref<128x128xbf16, #tpu.memory_space<vmem>>, vector<128x128xbf16>
    %cst_7 = arith.constant dense<0.000000e+00> : vector<512x128xf32>
    %12 = tpu.matmul %10, %11, %cst_7 {dimension_numbers = #tpu.dot_dimension_numbers<[1], [0], [0], [1], [0, 0, 1, 1], [], []>} : vector<512x128xbf16>, vector<128x128xbf16>, vector<512x128xf32> -> vector<512x128xf32>
    %13 = arith.truncf %12 : vector<512x128xf32> to vector<512x128xbf16>
    %c0_8 = arith.constant 0 : index
    %c0_9 = arith.constant 0 : index
    %14 = vector.load %arg5[%c0_8, %c0_9] : memref<512x128xbf16, #tpu.memory_space<vmem>>, vector<512x128xbf16>
    tpu.vector_store %arg5[%c0_8, %c0_9], %13 {strides = array<i32>} : memref<512x128xbf16, #tpu.memory_space<vmem>>, vector<512x128xbf16>,
    %cst_10 = arith.constant dense<0.000000e+00> : vector<128xf32>
    %15 = vector.multi_reduction <add>, %12, %cst_10 [0] : vector<512x128xf32> to vector<128xf32>
    %16 = vector.shape_cast %15 : vector<128xf32> to vector<1x128xf32>
    %c0_11 = arith.constant 0 : index
    %c0_12 = arith.constant 0 : index
    %c0_13 = arith.constant 0 : index
    %17 = vector.load %arg6[%c0_11, %c0_12, %c0_13] : memref<1x2x128xf32, #tpu.memory_space<vmem>>, vector<1x1x128xf32>
    %18 = vector.shape_cast %17 : vector<1x1x128xf32> to vector<1x128xf32>
    %19 = vector.shape_cast %16 : vector<1x128xf32> to vector<1x1x128xf32>
    tpu.vector_store %arg6[%c0_11, %c0_12, %c0_13], %19 {strides = array<i32>} : memref<1x2x128xf32, #tpu.memory_space<vmem>>, vector<1x1x128xf32>,
    %20 = arith.mulf %12, %12 : vector<512x128xf32>
    %cst_14 = arith.constant dense<0.000000e+00> : vector<128xf32>
    %21 = vector.multi_reduction <add>, %20, %cst_14 [0] : vector<512x128xf32> to vector<128xf32>
    %22 = vector.shape_cast %21 : vector<128xf32> to vector<1x128xf32>
    %c0_15 = arith.constant 0 : index
    %c1 = arith.constant 1 : index
    %c0_16 = arith.constant 0 : index
    %23 = vector.load %arg6[%c0_15, %c1, %c0_16] : memref<1x2x128xf32, #tpu.memory_space<vmem>>, vector<1x1x128xf32>
    %24 = vector.shape_cast %23 : vector<1x1x128xf32> to vector<1x128xf32>
    %25 = vector.shape_cast %22 : vector<1x128xf32> to vector<1x1x128xf32>
    tpu.vector_store %arg6[%c0_15, %c1, %c0_16], %25 {strides = array<i32>} : memref<1x2x128xf32, #tpu.memory_space<vmem>>, vector<1x1x128xf32>,
    return
  }
  func.func @transform_0(%arg0: i32) -> (i32, i32) {
    %c0_i32 = arith.constant 0 : i32
    %c0_i32_0 = arith.constant 0 : i32
    return %arg0, %c0_i32 : i32, i32
  }
  func.func @transform_1(%arg0: i32) -> (i32, i32) {
    %c0_i32 = arith.constant 0 : i32
    %c0_i32_0 = arith.constant 0 : i32
    %c0_i32_1 = arith.constant 0 : i32
    return %c0_i32, %c0_i32_0 : i32, i32
  }
  func.func @transform_2(%arg0: i32) -> (i32, i32) {
    %c0_i32 = arith.constant 0 : i32
    %c0_i32_0 = arith.constant 0 : i32
    %c0_i32_1 = arith.constant 0 : i32
    return %c0_i32, %c0_i32_0 : i32, i32
  }
  func.func @transform_3(%arg0: i32) -> (i32, i32) {
    %c0_i32 = arith.constant 0 : i32
    %c0_i32_0 = arith.constant 0 : i32
    %c0_i32_1 = arith.constant 0 : i32
    return %c0_i32, %c0_i32_0 : i32, i32
  }
  func.func @transform_4(%arg0: i32) -> (i32, i32) {
    %c0_i32 = arith.constant 0 : i32
    %c0_i32_0 = arith.constant 0 : i32
    return %arg0, %c0_i32 : i32, i32
  }
  func.func @transform_5(%arg0: i32) -> (i32, i32, i32) {
    %c0_i32 = arith.constant 0 : i32
    %c0_i32_0 = arith.constant 0 : i32
    %c0_i32_1 = arith.constant 0 : i32
    return %arg0, %c0_i32, %c0_i32_0 : i32, i32, i32
  }
}

module attributes {stable_mosaic.version = 11 : i64} {
  func.func @_bn_residual_relu_kernel(%arg0: i32, %arg1: memref<512x128xbf16, #tpu.memory_space<vmem>>, %arg2: memref<1x128xf32, #tpu.memory_space<vmem>>, %arg3: memref<1x128xf32, #tpu.memory_space<vmem>>, %arg4: memref<512x128xbf16, #tpu.memory_space<vmem>>, %arg5: memref<512x128xbf16, #tpu.memory_space<vmem>>) attributes {dimension_semantics = [#tpu.dimension_semantics<parallel>], iteration_bounds = array<i64: 1>, scalar_prefetch = 0 : i64, scratch_operands = 0 : i64, tpu.core_type = #tpu.core_type<tc>, window_params = [{transform_indices = @transform_0, window_bounds = array<i64: 512, 128>}, {pipeline_mode = #tpu.pipeline_mode<synchronous>, transform_indices = @transform_1, window_bounds = array<i64: 1, 128>}, {pipeline_mode = #tpu.pipeline_mode<synchronous>, transform_indices = @transform_2, window_bounds = array<i64: 1, 128>}, {transform_indices = @transform_3, window_bounds = array<i64: 512, 128>}, {transform_indices = @transform_4, window_bounds = array<i64: 512, 128>}]} {
    %c0 = arith.constant 0 : index
    %c0_0 = arith.constant 0 : index
    %0 = vector.load %arg1[%c0, %c0_0] : memref<512x128xbf16, #tpu.memory_space<vmem>>, vector<512x128xbf16>
    %1 = arith.extf %0 : vector<512x128xbf16> to vector<512x128xf32>
    %c0_1 = arith.constant 0 : index
    %c0_2 = arith.constant 0 : index
    %2 = vector.load %arg2[%c0_1, %c0_2] : memref<1x128xf32, #tpu.memory_space<vmem>>, vector<1x128xf32>
    %3 = vector.broadcast %2 : vector<1x128xf32> to vector<512x128xf32>
    %4 = arith.mulf %1, %3 : vector<512x128xf32>
    %c0_3 = arith.constant 0 : index
    %c0_4 = arith.constant 0 : index
    %5 = vector.load %arg3[%c0_3, %c0_4] : memref<1x128xf32, #tpu.memory_space<vmem>>, vector<1x128xf32>
    %6 = vector.broadcast %5 : vector<1x128xf32> to vector<512x128xf32>
    %7 = arith.addf %4, %6 : vector<512x128xf32>
    %c0_5 = arith.constant 0 : index
    %c0_6 = arith.constant 0 : index
    %8 = vector.load %arg4[%c0_5, %c0_6] : memref<512x128xbf16, #tpu.memory_space<vmem>>, vector<512x128xbf16>
    %9 = arith.extf %8 : vector<512x128xbf16> to vector<512x128xf32>
    %10 = arith.addf %7, %9 : vector<512x128xf32>
    %cst = arith.constant 0.000000e+00 : f32
    %11 = vector.broadcast %cst : f32 to vector<512x128xf32>
    %12 = arith.maximumf %10, %11 : vector<512x128xf32>
    %13 = arith.truncf %12 : vector<512x128xf32> to vector<512x128xbf16>
    %c0_7 = arith.constant 0 : index
    %c0_8 = arith.constant 0 : index
    %14 = vector.load %arg5[%c0_7, %c0_8] : memref<512x128xbf16, #tpu.memory_space<vmem>>, vector<512x128xbf16>
    tpu.vector_store %arg5[%c0_7, %c0_8], %13 {strides = array<i32>} : memref<512x128xbf16, #tpu.memory_space<vmem>>, vector<512x128xbf16>,
    return
  }
  func.func @transform_0(%arg0: i32) -> (i32, i32) {
    %c0_i32 = arith.constant 0 : i32
    %c0_i32_0 = arith.constant 0 : i32
    return %arg0, %c0_i32 : i32, i32
  }
  func.func @transform_1(%arg0: i32) -> (i32, i32) {
    %c0_i32 = arith.constant 0 : i32
    %c0_i32_0 = arith.constant 0 : i32
    %c0_i32_1 = arith.constant 0 : i32
    return %c0_i32, %c0_i32_0 : i32, i32
  }
  func.func @transform_2(%arg0: i32) -> (i32, i32) {
    %c0_i32 = arith.constant 0 : i32
    %c0_i32_0 = arith.constant 0 : i32
    %c0_i32_1 = arith.constant 0 : i32
    return %c0_i32, %c0_i32_0 : i32, i32
  }
  func.func @transform_3(%arg0: i32) -> (i32, i32) {
    %c0_i32 = arith.constant 0 : i32
    %c0_i32_0 = arith.constant 0 : i32
    return %arg0, %c0_i32 : i32, i32
  }
  func.func @transform_4(%arg0: i32) -> (i32, i32) {
    %c0_i32 = arith.constant 0 : i32
    %c0_i32_0 = arith.constant 0 : i32
    return %arg0, %c0_i32 : i32, i32
  }
}

</mosaic_0001>

<llo_original>
// kernel: resbn_forward.6
$region0: #{resbn_forward.6}
  #allocation0 [shape = 'u32[]', space=smem, size = 0x4, offset = 0x4, fixed_abs, tag = 'smem constant byte address 0x4 - core index']
  #allocation1 [shape = 'u32[72,128]{1,0:T(1,128)}', space=vmem, size = 0x9000, scoped, tag = 'internal scratch']
  %s0 = inlined_call_operand.vmem [shape: bf16[512,128], index: 0, kind: input, shape index: {}]
  %s1 = inlined_call_operand.vmem [shape: f32[1,128], index: 1, kind: input, shape index: {}]
  %s2 = inlined_call_operand.vmem [shape: f32[1,128], index: 2, kind: input, shape index: {}]
  %s3 = inlined_call_operand.vmem [shape: bf16[512,128], index: 3, kind: output, shape index: {}]
  %s4 = sld [smem:[#allocation0]]
  $region22: #{resbn_forward.6} parent=0
    _
  %s6 = ssub.s32 1, %s4
  %s7 = scalar_select 0, %s6, %s4
  // Predicated region
  $region2: #{resbn_forward.6} parent=0 // pred_check
    _
  $region3: #{resbn_forward.6} parent=0 // pred_check_branch
    %9 = sbr.rel (0) target = $region5
  $region4: #{resbn_forward.6} parent=0 // pred_region
    _
  $region5: #{resbn_forward.6} parent=0 // pred_fallthru
    _
  // Predicated region
  $region6: #{resbn_forward.6} parent=0 // pred_check
    _
  $region7: #{resbn_forward.6} parent=0 // pred_check_branch
    %11 = sbr.rel (0) target = $region9
  $region8: #{resbn_forward.6} parent=0 // pred_region
    _
  $region9: #{resbn_forward.6} parent=0 // pred_fallthru
    _
  // Predicated region
  $region10: #{resbn_forward.6} parent=0 // pred_check
    _
  $region11: #{resbn_forward.6} parent=0 // pred_check_branch
    %13 = sbr.rel (0) target = $region13
  $region12: #{resbn_forward.6} parent=0 // pred_region
    _
  $region13: #{resbn_forward.6} parent=0 // pred_fallthru
    _
  %v14 = vld [vmem:[%s0] sm:$0xf]
  %v15 = vld [vmem:[%s0 + $0x4] sm:$0xf]
  %v16 = vld [vmem:[%s0 + $0x8] sm:$0xf]
  %v17 = vld [vmem:[%s0 + $0xc] sm:$0xf]
  %v18 = vld [vmem:[%s0 + $0x10] sm:$0xf]
  %v19 = vld [vmem:[%s0 + $0x14] sm:$0xf]
  %v20 = vld [vmem:[%s0 + $0x18] sm:$0xf]
  %v21 = vld [vmem:[%s0 + $0x1c] sm:$0xf]
  %v22 = vld [vmem:[%s0 + $0x20] sm:$0xf]
  %v23 = vld [vmem:[%s0 + $0x24] sm:$0xf]
  %v24 = vld [vmem:[%s0 + $0x28] sm:$0xf]
  %v25 = vld [vmem:[%s0 + $0x2c] sm:$0xf]
  %v26 = vld [vmem:[%s0 + $0x30] sm:$0xf]
  %v27 = vld [vmem:[%s0 + $0x34] sm:$0xf]
  %v28 = vld [vmem:[%s0 + $0x38] sm:$0xf]
  %v29 = vld [vmem:[%s0 + $0x3c] sm:$0xf]
  %v30 = vld [vmem:[%s0 + $0x40] sm:$0xf]
  %v31 = vld [vmem:[%s0 + $0x44] sm:$0xf]
  %v32 = vld [vmem:[%s0 + $0x48] sm:$0xf]
  %v33 = vld [vmem:[%s0 + $0x4c] sm:$0xf]
  %v34 = vld [vmem:[%s0 + $0x50] sm:$0xf]
  %v35 = vld [vmem:[%s0 + $0x54] sm:$0xf]
  %v36 = vld [vmem:[%s0 + $0x58] sm:$0xf]
  %v37 = vld [vmem:[%s0 + $0x5c] sm:$0xf]
  %v38 = vld [vmem:[%s0 + $0x60] sm:$0xf]
  %v39 = vld [vmem:[%s0 + $0x64] sm:$0xf]
  %v40 = vld [vmem:[%s0 + $0x68] sm:$0xf]
  %v41 = vld [vmem:[%s0 + $0x6c] sm:$0xf]
  %v42 = vld [vmem:[%s0 + $0x70] sm:$0xf]
  %v43 = vld [vmem:[%s0 + $0x74] sm:$0xf]
  %v44 = vld [vmem:[%s0 + $0x78] sm:$0xf]
  %v45 = vld [vmem:[%s0 + $0x7c] sm:$0xf]
  %v46 = vld [vmem:[%s0 + $0x80] sm:$0xf]
  %v47 = vld [vmem:[%s0 + $0x84] sm:$0xf]
  %v48 = vld [vmem:[%s0 + $0x88] sm:$0xf]
  %v49 = vld [vmem:[%s0 + $0x8c] sm:$0xf]
  %v50 = vld [vmem:[%s0 + $0x90] sm:$0xf]
  %v51 = vld [vmem:[%s0 + $0x94] sm:$0xf]
  %v52 = vld [vmem:[%s0 + $0x98] sm:$0xf]
  %v53 = vld [vmem:[%s0 + $0x9c] sm:$0xf]
  %v54 = vld [vmem:[%s0 + $0xa0] sm:$0xf]
  %v55 = vld [vmem:[%s0 + $0xa4] sm:$0xf]
  %v56 = vld [vmem:[%s0 + $0xa8] sm:$0xf]
  %v57 = vld [vmem:[%s0 + $0xac] sm:$0xf]
  %v58 = vld [vmem:[%s0 + $0xb0] sm:$0xf]
  %v59 = vld [vmem:[%s0 + $0xb4] sm:$0xf]
  %v60 = vld [vmem:[%s0 + $0xb8] sm:$0xf]
  %v61 = vld [vmem:[%s0 + $0xbc] sm:$0xf]
  %v62 = vld [vmem:[%s0 + $0xc0] sm:$0xf]
  %v63 = vld [vmem:[%s0 + $0xc4] sm:$0xf]
  %v64 = vld [vmem:[%s0 + $0xc8] sm:$0xf]
  %v65 = vld [vmem:[%s0 + $0xcc] sm:$0xf]
  %v66 = vld [vmem:[%s0 + $0xd0] sm:$0xf]
  %v67 = vld [vmem:[%s0 + $0xd4] sm:$0xf]
  %v68 = vld [vmem:[%s0 + $0xd8] sm:$0xf]
  %v69 = vld [vmem:[%s0 + $0xdc] sm:$0xf]
  %v70 = vld [vmem:[%s0 + $0xe0] sm:$0xf]
  %v71 = vld [vmem:[%s0 + $0xe4] sm:$0xf]
  %v72 = vld [vmem:[%s0 + $0xe8] sm:$0xf]
  %v73 = vld [vmem:[%s0 + $0xec] sm:$0xf]
  %v74 = vld [vmem:[%s0 + $0xf0] sm:$0xf]
  %v75 = vld [vmem:[%s0 + $0xf4] sm:$0xf]
  %v76 = vld [vmem:[%s0 + $0xf8] sm:$0xf]
  %v77 = vld [vmem:[%s0 + $0xfc] sm:$0xf]
  %v78 = vunpack.c.l.bf16 %v14
  %v79 = vunpack.c.l.bf16 %v15
  %v80 = vunpack.c.l.bf16 %v16
  %v81 = vunpack.c.l.bf16 %v17
  %v82 = vunpack.c.l.bf16 %v18
  %v83 = vunpack.c.l.bf16 %v19
  %v84 = vunpack.c.l.bf16 %v20
  %v85 = vunpack.c.l.bf16 %v21
  %v86 = vunpack.c.l.bf16 %v22
  %v87 = vunpack.c.l.bf16 %v23
  %v88 = vunpack.c.l.bf16 %v24
  %v89 = vunpack.c.l.bf16 %v25
  %v90 = vunpack.c.l.bf16 %v26
  %v91 = vunpack.c.l.bf16 %v27
  %v92 = vunpack.c.l.bf16 %v28
  %v93 = vunpack.c.l.bf16 %v29
  %v94 = vunpack.c.l.bf16 %v30
  %v95 = vunpack.c.l.bf16 %v31
  %v96 = vunpack.c.l.bf16 %v32
  %v97 = vunpack.c.l.bf16 %v33
  %v98 = vunpack.c.l.bf16 %v34
  %v99 = vunpack.c.l.bf16 %v35
  %v100 = vunpack.c.l.bf16 %v36
  %v101 = vunpack.c.l.bf16 %v37
  %v102 = vunpack.c.l.bf16 %v38
  %v103 = vunpack.c.l.bf16 %v39
  %v104 = vunpack.c.l.bf16 %v40
  %v105 = vunpack.c.l.bf16 %v41
  %v106 = vunpack.c.l.bf16 %v42
  %v107 = vunpack.c.l.bf16 %v43
  %v108 = vunpack.c.l.bf16 %v44
  %v109 = vunpack.c.l.bf16 %v45
  %v110 = vunpack.c.l.bf16 %v46
  %v111 = vunpack.c.l.bf16 %v47
  %v112 = vunpack.c.l.bf16 %v48
  %v113 = vunpack.c.l.bf16 %v49
  %v114 = vunpack.c.l.bf16 %v50
  %v115 = vunpack.c.l.bf16 %v51
  %v116 = vunpack.c.l.bf16 %v52
  %v117 = vunpack.c.l.bf16 %v53
  %v118 = vunpack.c.l.bf16 %v54
  %v119 = vunpack.c.l.bf16 %v55
  %v120 = vunpack.c.l.bf16 %v56
  %v121 = vunpack.c.l.bf16 %v57
  %v122 = vunpack.c.l.bf16 %v58
  %v123 = vunpack.c.l.bf16 %v59
  %v124 = vunpack.c.l.bf16 %v60
  %v125 = vunpack.c.l.bf16 %v61
  %v126 = vunpack.c.l.bf16 %v62
  %v127 = vunpack.c.l.bf16 %v63
  %v128 = vunpack.c.l.bf16 %v64
  %v129 = vunpack.c.l.bf16 %v65
  %v130 = vunpack.c.l.bf16 %v66
  %v131 = vunpack.c.l.bf16 %v67
  %v132 = vunpack.c.l.bf16 %v68
  %v133 = vunpack.c.l.bf16 %v69
  %v134 = vunpack.c.l.bf16 %v70
  %v135 = vunpack.c.l.bf16 %v71
  %v136 = vunpack.c.l.bf16 %v72
  %v137 = vunpack.c.l.bf16 %v73
  %v138 = vunpack.c.l.bf16 %v74
  %v139 = vunpack.c.l.bf16 %v75
  %v140 = vunpack.c.l.bf16 %v76
  %v141 = vunpack.c.l.bf16 %v77
  %v142 = vld [vmem:[%s1] sm:$0x1]
  %v144 = vperm.slane %v142, 0
  %v146 = vmul.f32 %v78, %v144
  %v147 = vmul.f32 %v79, %v144
  %v148 = vmul.f32 %v80, %v144
  %v149 = vmul.f32 %v81, %v144
  %v150 = vmul.f32 %v82, %v144
  %v151 = vmul.f32 %v83, %v144
  %v152 = vmul.f32 %v84, %v144
  %v153 = vmul.f32 %v85, %v144
  %v154 = vmul.f32 %v86, %v144
  %v155 = vmul.f32 %v87, %v144
  %v156 = vmul.f32 %v88, %v144
  %v157 = vmul.f32 %v89, %v144
  %v158 = vmul.f32 %v90, %v144
  %v159 = vmul.f32 %v91, %v144
  %v160 = vmul.f32 %v92, %v144
  %v161 = vmul.f32 %v93, %v144
  %v162 = vmul.f32 %v94, %v144
  %v163 = vmul.f32 %v95, %v144
  %v164 = vmul.f32 %v96, %v144
  %v165 = vmul.f32 %v97, %v144
  %v166 = vmul.f32 %v98, %v144
  %v167 = vmul.f32 %v99, %v144
  %v168 = vmul.f32 %v100, %v144
  %v169 = vmul.f32 %v101, %v144
  %v170 = vmul.f32 %v102, %v144
  %v171 = vmul.f32 %v103, %v144
  %v172 = vmul.f32 %v104, %v144
  %v173 = vmul.f32 %v105, %v144
  %v174 = vmul.f32 %v106, %v144
  %v175 = vmul.f32 %v107, %v144
  %v176 = vmul.f32 %v108, %v144
  %v177 = vmul.f32 %v109, %v144
  %v178 = vmul.f32 %v110, %v144
  %v179 = vmul.f32 %v111, %v144
  %v180 = vmul.f32 %v112, %v144
  %v181 = vmul.f32 %v113, %v144
  %v182 = vmul.f32 %v114, %v144
  %v183 = vmul.f32 %v115, %v144
  %v184 = vmul.f32 %v116, %v144
  %v185 = vmul.f32 %v117, %v144
  %v186 = vmul.f32 %v118, %v144
  %v187 = vmul.f32 %v119, %v144
  %v188 = vmul.f32 %v120, %v144
  %v189 = vmul.f32 %v121, %v144
  %v190 = vmul.f32 %v122, %v144
  %v191 = vmul.f32 %v123, %v144
  %v192 = vmul.f32 %v124, %v144
  %v193 = vmul.f32 %v125, %v144
  %v194 = vmul.f32 %v126, %v144
  %v195 = vmul.f32 %v127, %v144
  %v196 = vmul.f32 %v128, %v144
  %v197 = vmul.f32 %v129, %v144
  %v198 = vmul.f32 %v130, %v144
  %v199 = vmul.f32 %v131, %v144
  %v200 = vmul.f32 %v132, %v144
  %v201 = vmul.f32 %v133, %v144
  %v202 = vmul.f32 %v134, %v144
  %v203 = vmul.f32 %v135, %v144
  %v204 = vmul.f32 %v136, %v144
  %v205 = vmul.f32 %v137, %v144
  %v206 = vmul.f32 %v138, %v144
  %v207 = vmul.f32 %v139, %v144
  %v208 = vmul.f32 %v140, %v144
  %v209 = vmul.f32 %v141, %v144
  %v210 = vld [vmem:[%s2] sm:$0x1]
  %v212 = vperm.slane %v210, 0
  %v214 = vadd.f32 %v146, %v212
  %v215 = vadd.f32 %v147, %v212
  %v216 = vadd.f32 %v148, %v212
  %v217 = vadd.f32 %v149, %v212
  %v218 = vadd.f32 %v150, %v212
  %v219 = vadd.f32 %v151, %v212
  %v220 = vadd.f32 %v152, %v212
  %v221 = vadd.f32 %v153, %v212
  %v222 = vadd.f32 %v154, %v212
  %v223 = vadd.f32 %v155, %v212
  %v224 = vadd.f32 %v156, %v212
  %v225 = vadd.f32 %v157, %v212
  %v226 = vadd.f32 %v158, %v212
  %v227 = vadd.f32 %v159, %v212
  %v228 = vadd.f32 %v160, %v212
  %v229 = vadd.f32 %v161, %v212
  %v230 = vadd.f32 %v162, %v212
  %v231 = vadd.f32 %v163, %v212
  %v232 = vadd.f32 %v164, %v212
  %v233 = vadd.f32 %v165, %v212
  %v234 = vadd.f32 %v166, %v212
  %v235 = vadd.f32 %v167, %v212
  %v236 = vadd.f32 %v168, %v212
  %v237 = vadd.f32 %v169, %v212
  %v238 = vadd.f32 %v170, %v212
  %v239 = vadd.f32 %v171, %v212
  %v240 = vadd.f32 %v172, %v212
  %v241 = vadd.f32 %v173, %v212
  %v242 = vadd.f32 %v174, %v212
  %v243 = vadd.f32 %v175, %v212
  %v244 = vadd.f32 %v176, %v212
  %v245 = vadd.f32 %v177, %v212
  %v246 = vadd.f32 %v178, %v212
  %v247 = vadd.f32 %v179, %v212
  %v248 = vadd.f32 %v180, %v212
  %v249 = vadd.f32 %v181, %v212
  %v250 = vadd.f32 %v182, %v212
  %v251 = vadd.f32 %v183, %v212
  %v252 = vadd.f32 %v184, %v212
  %v253 = vadd.f32 %v185, %v212
  %v254 = vadd.f32 %v186, %v212
  %v255 = vadd.f32 %v187, %v212
  %v256 = vadd.f32 %v188, %v212
  %v257 = vadd.f32 %v189, %v212
  %v258 = vadd.f32 %v190, %v212
  %v259 = vadd.f32 %v191, %v212
  %v260 = vadd.f32 %v192, %v212
  %v261 = vadd.f32 %v193, %v212
  %v262 = vadd.f32 %v194, %v212
  %v263 = vadd.f32 %v195, %v212
  %v264 = vadd.f32 %v196, %v212
  %v265 = vadd.f32 %v197, %v212
  %v266 = vadd.f32 %v198, %v212
  %v267 = vadd.f32 %v199, %v212
  %v268 = vadd.f32 %v200, %v212
  %v269 = vadd.f32 %v201, %v212
  %v270 = vadd.f32 %v202, %v212
  %v271 = vadd.f32 %v203, %v212
  %v272 = vadd.f32 %v204, %v212
  %v273 = vadd.f32 %v205, %v212
  %v274 = vadd.f32 %v206, %v212
  %v275 = vadd.f32 %v207, %v212
  %v276 = vadd.f32 %v208, %v212
  %v277 = vadd.f32 %v209, %v212
  %v278 = vmax.f32 %v214, 0.0
  %v279 = vmax.f32 %v215, 0.0
  %v280 = vmax.f32 %v216, 0.0
  %v281 = vmax.f32 %v217, 0.0
  %v282 = vmax.f32 %v218, 0.0
  %v283 = vmax.f32 %v219, 0.0
  %v284 = vmax.f32 %v220, 0.0
  %v285 = vmax.f32 %v221, 0.0
  %v286 = vmax.f32 %v222, 0.0
  %v287 = vmax.f32 %v223, 0.0
  %v288 = vmax.f32 %v224, 0.0
  %v289 = vmax.f32 %v225, 0.0
  %v290 = vmax.f32 %v226, 0.0
  %v291 = vmax.f32 %v227, 0.0
  %v292 = vmax.f32 %v228, 0.0
  %v293 = vmax.f32 %v229, 0.0
  %v294 = vmax.f32 %v230, 0.0
  %v295 = vmax.f32 %v231, 0.0
  %v296 = vmax.f32 %v232, 0.0
  %v297 = vmax.f32 %v233, 0.0
  %v298 = vmax.f32 %v234, 0.0
  %v299 = vmax.f32 %v235, 0.0
  %v300 = vmax.f32 %v236, 0.0
  %v301 = vmax.f32 %v237, 0.0
  %v302 = vmax.f32 %v238, 0.0
  %v303 = vmax.f32 %v239, 0.0
  %v304 = vmax.f32 %v240, 0.0
  %v305 = vmax.f32 %v241, 0.0
  %v306 = vmax.f32 %v242, 0.0
  %v307 = vmax.f32 %v243, 0.0
  %v308 = vmax.f32 %v244, 0.0
  %v309 = vmax.f32 %v245, 0.0
  %v310 = vmax.f32 %v246, 0.0
  %v311 = vmax.f32 %v247, 0.0
  %v312 = vmax.f32 %v248, 0.0
  %v313 = vmax.f32 %v249, 0.0
  %v314 = vmax.f32 %v250, 0.0
  %v315 = vmax.f32 %v251, 0.0
  %v316 = vmax.f32 %v252, 0.0
  %v317 = vmax.f32 %v253, 0.0
  %v318 = vmax.f32 %v254, 0.0
  %v319 = vmax.f32 %v255, 0.0
  %v320 = vmax.f32 %v256, 0.0
  %v321 = vmax.f32 %v257, 0.0
  %v322 = vmax.f32 %v258, 0.0
  %v323 = vmax.f32 %v259, 0.0
  %v324 = vmax.f32 %v260, 0.0
  %v325 = vmax.f32 %v261, 0.0
  %v326 = vmax.f32 %v262, 0.0
  %v327 = vmax.f32 %v263, 0.0
  %v328 = vmax.f32 %v264, 0.0
  %v329 = vmax.f32 %v265, 0.0
  %v330 = vmax.f32 %v266, 0.0
  %v331 = vmax.f32 %v267, 0.0
  %v332 = vmax.f32 %v268, 0.0
  %v333 = vmax.f32 %v269, 0.0
  %v334 = vmax.f32 %v270, 0.0
  %v335 = vmax.f32 %v271, 0.0
  %v336 = vmax.f32 %v272, 0.0
  %v337 = vmax.f32 %v273, 0.0
  %v338 = vmax.f32 %v274, 0.0
  %v339 = vmax.f32 %v275, 0.0
  %v340 = vmax.f32 %v276, 0.0
  %v341 = vmax.f32 %v277, 0.0
  %v342 = vpack.c.bf16 %v278, %v278
  %v343 = vpack.c.bf16 %v279, %v279
  %v344 = vpack.c.bf16 %v280, %v280
  %v345 = vpack.c.bf16 %v281, %v281
  %v346 = vpack.c.bf16 %v282, %v282
  %v347 = vpack.c.bf16 %v283, %v283
  %v348 = vpack.c.bf16 %v284, %v284
  %v349 = vpack.c.bf16 %v285, %v285
  %v350 = vpack.c.bf16 %v286, %v286
  %v351 = vpack.c.bf16 %v287, %v287
  %v352 = vpack.c.bf16 %v288, %v288
  %v353 = vpack.c.bf16 %v289, %v289
  %v354 = vpack.c.bf16 %v290, %v290
  %v355 = vpack.c.bf16 %v291, %v291
  %v356 = vpack.c.bf16 %v292, %v292
  %v357 = vpack.c.bf16 %v293, %v293
  %v358 = vpack.c.bf16 %v294, %v294
  %v359 = vpack.c.bf16 %v295, %v295
  %v360 = vpack.c.bf16 %v296, %v296
  %v361 = vpack.c.bf16 %v297, %v297
  %v362 = vpack.c.bf16 %v298, %v298
  %v363 = vpack.c.bf16 %v299, %v299
  %v364 = vpack.c.bf16 %v300, %v300
  %v365 = vpack.c.bf16 %v301, %v301
  %v366 = vpack.c.bf16 %v302, %v302
  %v367 = vpack.c.bf16 %v303, %v303
  %v368 = vpack.c.bf16 %v304, %v304
  %v369 = vpack.c.bf16 %v305, %v305
  %v370 = vpack.c.bf16 %v306, %v306
  %v371 = vpack.c.bf16 %v307, %v307
  %v372 = vpack.c.bf16 %v308, %v308
  %v373 = vpack.c.bf16 %v309, %v309
  %v374 = vpack.c.bf16 %v310, %v310
  %v375 = vpack.c.bf16 %v311, %v311
  %v376 = vpack.c.bf16 %v312, %v312
  %v377 = vpack.c.bf16 %v313, %v313
  %v378 = vpack.c.bf16 %v314, %v314
  %v379 = vpack.c.bf16 %v315, %v315
  %v380 = vpack.c.bf16 %v316, %v316
  %v381 = vpack.c.bf16 %v317, %v317
  %v382 = vpack.c.bf16 %v318, %v318
  %v383 = vpack.c.bf16 %v319, %v319
  %v384 = vpack.c.bf16 %v320, %v320
  %v385 = vpack.c.bf16 %v321, %v321
  %v386 = vpack.c.bf16 %v322, %v322
  %v387 = vpack.c.bf16 %v323, %v323
  %v388 = vpack.c.bf16 %v324, %v324
  %v389 = vpack.c.bf16 %v325, %v325
  %v390 = vpack.c.bf16 %v326, %v326
  %v391 = vpack.c.bf16 %v327, %v327
  %v392 = vpack.c.bf16 %v328, %v328
  %v393 = vpack.c.bf16 %v329, %v329
  %v394 = vpack.c.bf16 %v330, %v330
  %v395 = vpack.c.bf16 %v331, %v331
  %v396 = vpack.c.bf16 %v332, %v332
  %v397 = vpack.c.bf16 %v333, %v333
  %v398 = vpack.c.bf16 %v334, %v334
  %v399 = vpack.c.bf16 %v335, %v335
  %v400 = vpack.c.bf16 %v336, %v336
  %v401 = vpack.c.bf16 %v337, %v337
  %v402 = vpack.c.bf16 %v338, %v338
  %v403 = vpack.c.bf16 %v339, %v339
  %v404 = vpack.c.bf16 %v340, %v340
  %v405 = vpack.c.bf16 %v341, %v341
  %406 = vst [vmem:[%s3] sm:$0xf] %v342
  %407 = vst [vmem:[%s3 + $0x4] sm:$0xf] %v343
  %408 = vst [vmem:[%s3 + $0x8] sm:$0xf] %v344
  %409 = vst [vmem:[%s3 + $0xc] sm:$0xf] %v345
  %410 = vst [vmem:[%s3 + $0x10] sm:$0xf] %v346
  %411 = vst [vmem:[%s3 + $0x14] sm:$0xf] %v347
  %412 = vst [vmem:[%s3 + $0x18] sm:$0xf] %v348
  %413 = vst [vmem:[%s3 + $0x1c] sm:$0xf] %v349
  %414 = vst [vmem:[%s3 + $0x20] sm:$0xf] %v350
  %415 = vst [vmem:[%s3 + $0x24] sm:$0xf] %v351
  %416 = vst [vmem:[%s3 + $0x28] sm:$0xf] %v352
  %417 = vst [vmem:[%s3 + $0x2c] sm:$0xf] %v353
  %418 = vst [vmem:[%s3 + $0x30] sm:$0xf] %v354
  %419 = vst [vmem:[%s3 + $0x34] sm:$0xf] %v355
  %420 = vst [vmem:[%s3 + $0x38] sm:$0xf] %v356
  %421 = vst [vmem:[%s3 + $0x3c] sm:$0xf] %v357
  %422 = vst [vmem:[%s3 + $0x40] sm:$0xf] %v358
  %423 = vst [vmem:[%s3 + $0x44] sm:$0xf] %v359
  %424 = vst [vmem:[%s3 + $0x48] sm:$0xf] %v360
  %425 = vst [vmem:[%s3 + $0x4c] sm:$0xf] %v361
  %426 = vst [vmem:[%s3 + $0x50] sm:$0xf] %v362
  %427 = vst [vmem:[%s3 + $0x54] sm:$0xf] %v363
  %428 = vst [vmem:[%s3 + $0x58] sm:$0xf] %v364
  %429 = vst [vmem:[%s3 + $0x5c] sm:$0xf] %v365
  %430 = vst [vmem:[%s3 + $0x60] sm:$0xf] %v366
  %431 = vst [vmem:[%s3 + $0x64] sm:$0xf] %v367
  %432 = vst [vmem:[%s3 + $0x68] sm:$0xf] %v368
  %433 = vst [vmem:[%s3 + $0x6c] sm:$0xf] %v369
  %434 = vst [vmem:[%s3 + $0x70] sm:$0xf] %v370
  %435 = vst [vmem:[%s3 + $0x74] sm:$0xf] %v371
  %436 = vst [vmem:[%s3 + $0x78] sm:$0xf] %v372
  %437 = vst [vmem:[%s3 + $0x7c] sm:$0xf] %v373
  %438 = vst [vmem:[%s3 + $0x80] sm:$0xf] %v374
  %439 = vst [vmem:[%s3 + $0x84] sm:$0xf] %v375
  %440 = vst [vmem:[%s3 + $0x88] sm:$0xf] %v376
  %441 = vst [vmem:[%s3 + $0x8c] sm:$0xf] %v377
  %442 = vst [vmem:[%s3 + $0x90] sm:$0xf] %v378
  %443 = vst [vmem:[%s3 + $0x94] sm:$0xf] %v379
  %444 = vst [vmem:[%s3 + $0x98] sm:$0xf] %v380
  %445 = vst [vmem:[%s3 + $0x9c] sm:$0xf] %v381
  %446 = vst [vmem:[%s3 + $0xa0] sm:$0xf] %v382
  %447 = vst [vmem:[%s3 + $0xa4] sm:$0xf] %v383
  %448 = vst [vmem:[%s3 + $0xa8] sm:$0xf] %v384
  %449 = vst [vmem:[%s3 + $0xac] sm:$0xf] %v385
  %450 = vst [vmem:[%s3 + $0xb0] sm:$0xf] %v386
  %451 = vst [vmem:[%s3 + $0xb4] sm:$0xf] %v387
  %452 = vst [vmem:[%s3 + $0xb8] sm:$0xf] %v388
  %453 = vst [vmem:[%s3 + $0xbc] sm:$0xf] %v389
  %454 = vst [vmem:[%s3 + $0xc0] sm:$0xf] %v390
  %455 = vst [vmem:[%s3 + $0xc4] sm:$0xf] %v391
  %456 = vst [vmem:[%s3 + $0xc8] sm:$0xf] %v392
  %457 = vst [vmem:[%s3 + $0xcc] sm:$0xf] %v393
  %458 = vst [vmem:[%s3 + $0xd0] sm:$0xf] %v394
  %459 = vst [vmem:[%s3 + $0xd4] sm:$0xf] %v395
  %460 = vst [vmem:[%s3 + $0xd8] sm:$0xf] %v396
  %461 = vst [vmem:[%s3 + $0xdc] sm:$0xf] %v397
  %462 = vst [vmem:[%s3 + $0xe0] sm:$0xf] %v398
  %463 = vst [vmem:[%s3 + $0xe4] sm:$0xf] %v399
  %464 = vst [vmem:[%s3 + $0xe8] sm:$0xf] %v400
  %465 = vst [vmem:[%s3 + $0xec] sm:$0xf] %v401
  %466 = vst [vmem:[%s3 + $0xf0] sm:$0xf] %v402
  %467 = vst [vmem:[%s3 + $0xf4] sm:$0xf] %v403
  %468 = vst [vmem:[%s3 + $0xf8] sm:$0xf] %v404
  %469 = vst [vmem:[%s3 + $0xfc] sm:$0xf] %v405
  // Predicated region
  $region14: #{resbn_forward.6} parent=0 // pred_check
    _
  $region15: #{resbn_forward.6} parent=0 // pred_check_branch
    %471 = sbr.rel (0) target = $region17
  $region16: #{resbn_forward.6} parent=0 // pred_region
    _
  $region17: #{resbn_forward.6} parent=0 // pred_fallthru
    _
  // Predicated region
  $region18: #{resbn_forward.6} parent=0 // pred_check
    _
  $region19: #{resbn_forward.6} parent=0 // pred_check_branch
    %473 = sbr.rel (0) target = $region21
  $region20: #{resbn_forward.6} parent=0 // pred_region
    _
  $region21: #{resbn_forward.6} parent=0 // pred_fallthru
    _

// kernel: resbn_forward.9
$region0: #{resbn_forward.9}
  #allocation0 [shape = 'u32[]', space=smem, size = 0x4, offset = 0x4, fixed_abs, tag = 'smem constant byte address 0x4 - core index']
  #allocation1 [shape = 'u32[72,128]{1,0:T(1,128)}', space=vmem, size = 0x9000, scoped, tag = 'internal scratch']
  %s0 = inlined_call_operand.vmem [shape: bf16[512,128], index: 0, kind: input, shape index: {}, may-alias: {0,4}]
  %s1 = inlined_call_operand.vmem [shape: f32[1,128], index: 1, kind: input, shape index: {}]
  %s2 = inlined_call_operand.vmem [shape: f32[1,128], index: 2, kind: input, shape index: {}]
  %s3 = inlined_call_operand.vmem [shape: bf16[512,128], index: 3, kind: input, shape index: {}]
  %s4 = inlined_call_operand.vmem [shape: bf16[512,128], index: 4, kind: output, shape index: {}, may-alias: {0,4}]
  %s5 = sld [smem:[#allocation0]]
  $region26: #{resbn_forward.9} parent=0
    _
  %s7 = ssub.s32 1, %s5
  %s8 = scalar_select 0, %s7, %s5
  // Predicated region
  $region2: #{resbn_forward.9} parent=0 // pred_check
    _
  $region3: #{resbn_forward.9} parent=0 // pred_check_branch
    %10 = sbr.rel (0) target = $region5
  $region4: #{resbn_forward.9} parent=0 // pred_region
    _
  $region5: #{resbn_forward.9} parent=0 // pred_fallthru
    _
  // Predicated region
  $region6: #{resbn_forward.9} parent=0 // pred_check
    _
  $region7: #{resbn_forward.9} parent=0 // pred_check_branch
    %12 = sbr.rel (0) target = $region9
  $region8: #{resbn_forward.9} parent=0 // pred_region
    _
  $region9: #{resbn_forward.9} parent=0 // pred_fallthru
    _
  // Predicated region
  $region10: #{resbn_forward.9} parent=0 // pred_check
    _
  $region11: #{resbn_forward.9} parent=0 // pred_check_branch
    %14 = sbr.rel (0) target = $region13
  $region12: #{resbn_forward.9} parent=0 // pred_region
    _
  $region13: #{resbn_forward.9} parent=0 // pred_fallthru
    _
  // Predicated region
  $region14: #{resbn_forward.9} parent=0 // pred_check
    _
  $region15: #{resbn_forward.9} parent=0 // pred_check_branch
    %16 = sbr.rel (0) target = $region17
  $region16: #{resbn_forward.9} parent=0 // pred_region
    _
  $region17: #{resbn_forward.9} parent=0 // pred_fallthru
    _
  %v17 = vld [vmem:[%s0] sm:$0xf]
  %v18 = vld [vmem:[%s0 + $0x4] sm:$0xf]
  %v19 = vld [vmem:[%s0 + $0x8] sm:$0xf]
  %v20 = vld [vmem:[%s0 + $0xc] sm:$0xf]
  %v21 = vld [vmem:[%s0 + $0x10] sm:$0xf]
  %v22 = vld [vmem:[%s0 + $0x14] sm:$0xf]
  %v23 = vld [vmem:[%s0 + $0x18] sm:$0xf]
  %v24 = vld [vmem:[%s0 + $0x1c] sm:$0xf]
  %v25 = vld [vmem:[%s0 + $0x20] sm:$0xf]
  %v26 = vld [vmem:[%s0 + $0x24] sm:$0xf]
  %v27 = vld [vmem:[%s0 + $0x28] sm:$0xf]
  %v28 = vld [vmem:[%s0 + $0x2c] sm:$0xf]
  %v29 = vld [vmem:[%s0 + $0x30] sm:$0xf]
  %v30 = vld [vmem:[%s0 + $0x34] sm:$0xf]
  %v31 = vld [vmem:[%s0 + $0x38] sm:$0xf]
  %v32 = vld [vmem:[%s0 + $0x3c] sm:$0xf]
  %v33 = vld [vmem:[%s0 + $0x40] sm:$0xf]
  %v34 = vld [vmem:[%s0 + $0x44] sm:$0xf]
  %v35 = vld [vmem:[%s0 + $0x48] sm:$0xf]
  %v36 = vld [vmem:[%s0 + $0x4c] sm:$0xf]
  %v37 = vld [vmem:[%s0 + $0x50] sm:$0xf]
  %v38 = vld [vmem:[%s0 + $0x54] sm:$0xf]
  %v39 = vld [vmem:[%s0 + $0x58] sm:$0xf]
  %v40 = vld [vmem:[%s0 + $0x5c] sm:$0xf]
  %v41 = vld [vmem:[%s0 + $0x60] sm:$0xf]
  %v42 = vld [vmem:[%s0 + $0x64] sm:$0xf]
  %v43 = vld [vmem:[%s0 + $0x68] sm:$0xf]
  %v44 = vld [vmem:[%s0 + $0x6c] sm:$0xf]
  %v45 = vld [vmem:[%s0 + $0x70] sm:$0xf]
  %v46 = vld [vmem:[%s0 + $0x74] sm:$0xf]
  %v47 = vld [vmem:[%s0 + $0x78] sm:$0xf]
  %v48 = vld [vmem:[%s0 + $0x7c] sm:$0xf]
  %v49 = vld [vmem:[%s0 + $0x80] sm:$0xf]
  %v50 = vld [vmem:[%s0 + $0x84] sm:$0xf]
  %v51 = vld [vmem:[%s0 + $0x88] sm:$0xf]
  %v52 = vld [vmem:[%s0 + $0x8c] sm:$0xf]
  %v53 = vld [vmem:[%s0 + $0x90] sm:$0xf]
  %v54 = vld [vmem:[%s0 + $0x94] sm:$0xf]
  %v55 = vld [vmem:[%s0 + $0x98] sm:$0xf]
  %v56 = vld [vmem:[%s0 + $0x9c] sm:$0xf]
  %v57 = vld [vmem:[%s0 + $0xa0] sm:$0xf]
  %v58 = vld [vmem:[%s0 + $0xa4] sm:$0xf]
  %v59 = vld [vmem:[%s0 + $0xa8] sm:$0xf]
  %v60 = vld [vmem:[%s0 + $0xac] sm:$0xf]
  %v61 = vld [vmem:[%s0 + $0xb0] sm:$0xf]
  %v62 = vld [vmem:[%s0 + $0xb4] sm:$0xf]
  %v63 = vld [vmem:[%s0 + $0xb8] sm:$0xf]
  %v64 = vld [vmem:[%s0 + $0xbc] sm:$0xf]
  %v65 = vld [vmem:[%s0 + $0xc0] sm:$0xf]
  %v66 = vld [vmem:[%s0 + $0xc4] sm:$0xf]
  %v67 = vld [vmem:[%s0 + $0xc8] sm:$0xf]
  %v68 = vld [vmem:[%s0 + $0xcc] sm:$0xf]
  %v69 = vld [vmem:[%s0 + $0xd0] sm:$0xf]
  %v70 = vld [vmem:[%s0 + $0xd4] sm:$0xf]
  %v71 = vld [vmem:[%s0 + $0xd8] sm:$0xf]
  %v72 = vld [vmem:[%s0 + $0xdc] sm:$0xf]
  %v73 = vld [vmem:[%s0 + $0xe0] sm:$0xf]
  %v74 = vld [vmem:[%s0 + $0xe4] sm:$0xf]
  %v75 = vld [vmem:[%s0 + $0xe8] sm:$0xf]
  %v76 = vld [vmem:[%s0 + $0xec] sm:$0xf]
  %v77 = vld [vmem:[%s0 + $0xf0] sm:$0xf]
  %v78 = vld [vmem:[%s0 + $0xf4] sm:$0xf]
  %v79 = vld [vmem:[%s0 + $0xf8] sm:$0xf]
  %v80 = vld [vmem:[%s0 + $0xfc] sm:$0xf]
  %v81 = vunpack.c.l.bf16 %v17
  %v82 = vunpack.c.l.bf16 %v18
  %v83 = vunpack.c.l.bf16 %v19
  %v84 = vunpack.c.l.bf16 %v20
  %v85 = vunpack.c.l.bf16 %v21
  %v86 = vunpack.c.l.bf16 %v22
  %v87 = vunpack.c.l.bf16 %v23
  %v88 = vunpack.c.l.bf16 %v24
  %v89 = vunpack.c.l.bf16 %v25
  %v90 = vunpack.c.l.bf16 %v26
  %v91 = vunpack.c.l.bf16 %v27
  %v92 = vunpack.c.l.bf16 %v28
  %v93 = vunpack.c.l.bf16 %v29
  %v94 = vunpack.c.l.bf16 %v30
  %v95 = vunpack.c.l.bf16 %v31
  %v96 = vunpack.c.l.bf16 %v32
  %v97 = vunpack.c.l.bf16 %v33
  %v98 = vunpack.c.l.bf16 %v34
  %v99 = vunpack.c.l.bf16 %v35
  %v100 = vunpack.c.l.bf16 %v36
  %v101 = vunpack.c.l.bf16 %v37
  %v102 = vunpack.c.l.bf16 %v38
  %v103 = vunpack.c.l.bf16 %v39
  %v104 = vunpack.c.l.bf16 %v40
  %v105 = vunpack.c.l.bf16 %v41
  %v106 = vunpack.c.l.bf16 %v42
  %v107 = vunpack.c.l.bf16 %v43
  %v108 = vunpack.c.l.bf16 %v44
  %v109 = vunpack.c.l.bf16 %v45
  %v110 = vunpack.c.l.bf16 %v46
  %v111 = vunpack.c.l.bf16 %v47
  %v112 = vunpack.c.l.bf16 %v48
  %v113 = vunpack.c.l.bf16 %v49
  %v114 = vunpack.c.l.bf16 %v50
  %v115 = vunpack.c.l.bf16 %v51
  %v116 = vunpack.c.l.bf16 %v52
  %v117 = vunpack.c.l.bf16 %v53
  %v118 = vunpack.c.l.bf16 %v54
  %v119 = vunpack.c.l.bf16 %v55
  %v120 = vunpack.c.l.bf16 %v56
  %v121 = vunpack.c.l.bf16 %v57
  %v122 = vunpack.c.l.bf16 %v58
  %v123 = vunpack.c.l.bf16 %v59
  %v124 = vunpack.c.l.bf16 %v60
  %v125 = vunpack.c.l.bf16 %v61
  %v126 = vunpack.c.l.bf16 %v62
  %v127 = vunpack.c.l.bf16 %v63
  %v128 = vunpack.c.l.bf16 %v64
  %v129 = vunpack.c.l.bf16 %v65
  %v130 = vunpack.c.l.bf16 %v66
  %v131 = vunpack.c.l.bf16 %v67
  %v132 = vunpack.c.l.bf16 %v68
  %v133 = vunpack.c.l.bf16 %v69
  %v134 = vunpack.c.l.bf16 %v70
  %v135 = vunpack.c.l.bf16 %v71
  %v136 = vunpack.c.l.bf16 %v72
  %v137 = vunpack.c.l.bf16 %v73
  %v138 = vunpack.c.l.bf16 %v74
  %v139 = vunpack.c.l.bf16 %v75
  %v140 = vunpack.c.l.bf16 %v76
  %v141 = vunpack.c.l.bf16 %v77
  %v142 = vunpack.c.l.bf16 %v78
  %v143 = vunpack.c.l.bf16 %v79
  %v144 = vunpack.c.l.bf16 %v80
  %v145 = vld [vmem:[%s1] sm:$0x1]
  %v147 = vperm.slane %v145, 0
  %v149 = vmul.f32 %v81, %v147
  %v150 = vmul.f32 %v82, %v147
  %v151 = vmul.f32 %v83, %v147
  %v152 = vmul.f32 %v84, %v147
  %v153 = vmul.f32 %v85, %v147
  %v154 = vmul.f32 %v86, %v147
  %v155 = vmul.f32 %v87, %v147
  %v156 = vmul.f32 %v88, %v147
  %v157 = vmul.f32 %v89, %v147
  %v158 = vmul.f32 %v90, %v147
  %v159 = vmul.f32 %v91, %v147
  %v160 = vmul.f32 %v92, %v147
  %v161 = vmul.f32 %v93, %v147
  %v162 = vmul.f32 %v94, %v147
  %v163 = vmul.f32 %v95, %v147
  %v164 = vmul.f32 %v96, %v147
  %v165 = vmul.f32 %v97, %v147
  %v166 = vmul.f32 %v98, %v147
  %v167 = vmul.f32 %v99, %v147
  %v168 = vmul.f32 %v100, %v147
  %v169 = vmul.f32 %v101, %v147
  %v170 = vmul.f32 %v102, %v147
  %v171 = vmul.f32 %v103, %v147
  %v172 = vmul.f32 %v104, %v147
  %v173 = vmul.f32 %v105, %v147
  %v174 = vmul.f32 %v106, %v147
  %v175 = vmul.f32 %v107, %v147
  %v176 = vmul.f32 %v108, %v147
  %v177 = vmul.f32 %v109, %v147
  %v178 = vmul.f32 %v110, %v147
  %v179 = vmul.f32 %v111, %v147
  %v180 = vmul.f32 %v112, %v147
  %v181 = vmul.f32 %v113, %v147
  %v182 = vmul.f32 %v114, %v147
  %v183 = vmul.f32 %v115, %v147
  %v184 = vmul.f32 %v116, %v147
  %v185 = vmul.f32 %v117, %v147
  %v186 = vmul.f32 %v118, %v147
  %v187 = vmul.f32 %v119, %v147
  %v188 = vmul.f32 %v120, %v147
  %v189 = vmul.f32 %v121, %v147
  %v190 = vmul.f32 %v122, %v147
  %v191 = vmul.f32 %v123, %v147
  %v192 = vmul.f32 %v124, %v147
  %v193 = vmul.f32 %v125, %v147
  %v194 = vmul.f32 %v126, %v147
  %v195 = vmul.f32 %v127, %v147
  %v196 = vmul.f32 %v128, %v147
  %v197 = vmul.f32 %v129, %v147
  %v198 = vmul.f32 %v130, %v147
  %v199 = vmul.f32 %v131, %v147
  %v200 = vmul.f32 %v132, %v147
  %v201 = vmul.f32 %v133, %v147
  %v202 = vmul.f32 %v134, %v147
  %v203 = vmul.f32 %v135, %v147
  %v204 = vmul.f32 %v136, %v147
  %v205 = vmul.f32 %v137, %v147
  %v206 = vmul.f32 %v138, %v147
  %v207 = vmul.f32 %v139, %v147
  %v208 = vmul.f32 %v140, %v147
  %v209 = vmul.f32 %v141, %v147
  %v210 = vmul.f32 %v142, %v147
  %v211 = vmul.f32 %v143, %v147
  %v212 = vmul.f32 %v144, %v147
  %v213 = vld [vmem:[%s2] sm:$0x1]
  %v215 = vperm.slane %v213, 0
  %v217 = vadd.f32 %v149, %v215
  %v218 = vadd.f32 %v150, %v215
  %v219 = vadd.f32 %v151, %v215
  %v220 = vadd.f32 %v152, %v215
  %v221 = vadd.f32 %v153, %v215
  %v222 = vadd.f32 %v154, %v215
  %v223 = vadd.f32 %v155, %v215
  %v224 = vadd.f32 %v156, %v215
  %v225 = vadd.f32 %v157, %v215
  %v226 = vadd.f32 %v158, %v215
  %v227 = vadd.f32 %v159, %v215
  %v228 = vadd.f32 %v160, %v215
  %v229 = vadd.f32 %v161, %v215
  %v230 = vadd.f32 %v162, %v215
  %v231 = vadd.f32 %v163, %v215
  %v232 = vadd.f32 %v164, %v215
  %v233 = vadd.f32 %v165, %v215
  %v234 = vadd.f32 %v166, %v215
  %v235 = vadd.f32 %v167, %v215
  %v236 = vadd.f32 %v168, %v215
  %v237 = vadd.f32 %v169, %v215
  %v238 = vadd.f32 %v170, %v215
  %v239 = vadd.f32 %v171, %v215
  %v240 = vadd.f32 %v172, %v215
  %v241 = vadd.f32 %v173, %v215
  %v242 = vadd.f32 %v174, %v215
  %v243 = vadd.f32 %v175, %v215
  %v244 = vadd.f32 %v176, %v215
  %v245 = vadd.f32 %v177, %v215
  %v246 = vadd.f32 %v178, %v215
  %v247 = vadd.f32 %v179, %v215
  %v248 = vadd.f32 %v180, %v215
  %v249 = vadd.f32 %v181, %v215
  %v250 = vadd.f32 %v182, %v215
  %v251 = vadd.f32 %v183, %v215
  %v252 = vadd.f32 %v184, %v215
  %v253 = vadd.f32 %v185, %v215
  %v254 = vadd.f32 %v186, %v215
  %v255 = vadd.f32 %v187, %v215
  %v256 = vadd.f32 %v188, %v215
  %v257 = vadd.f32 %v189, %v215
  %v258 = vadd.f32 %v190, %v215
  %v259 = vadd.f32 %v191, %v215
  %v260 = vadd.f32 %v192, %v215
  %v261 = vadd.f32 %v193, %v215
  %v262 = vadd.f32 %v194, %v215
  %v263 = vadd.f32 %v195, %v215
  %v264 = vadd.f32 %v196, %v215
  %v265 = vadd.f32 %v197, %v215
  %v266 = vadd.f32 %v198, %v215
  %v267 = vadd.f32 %v199, %v215
  %v268 = vadd.f32 %v200, %v215
  %v269 = vadd.f32 %v201, %v215
  %v270 = vadd.f32 %v202, %v215
  %v271 = vadd.f32 %v203, %v215
  %v272 = vadd.f32 %v204, %v215
  %v273 = vadd.f32 %v205, %v215
  %v274 = vadd.f32 %v206, %v215
  %v275 = vadd.f32 %v207, %v215
  %v276 = vadd.f32 %v208, %v215
  %v277 = vadd.f32 %v209, %v215
  %v278 = vadd.f32 %v210, %v215
  %v279 = vadd.f32 %v211, %v215
  %v280 = vadd.f32 %v212, %v215
  %v281 = vld [vmem:[%s3] sm:$0xf]
  %v282 = vld [vmem:[%s3 + $0x4] sm:$0xf]
  %v283 = vld [vmem:[%s3 + $0x8] sm:$0xf]
  %v284 = vld [vmem:[%s3 + $0xc] sm:$0xf]
  %v285 = vld [vmem:[%s3 + $0x10] sm:$0xf]
  %v286 = vld [vmem:[%s3 + $0x14] sm:$0xf]
  %v287 = vld [vmem:[%s3 + $0x18] sm:$0xf]
  %v288 = vld [vmem:[%s3 + $0x1c] sm:$0xf]
  %v289 = vld [vmem:[%s3 + $0x20] sm:$0xf]
  %v290 = vld [vmem:[%s3 + $0x24] sm:$0xf]
  %v291 = vld [vmem:[%s3 + $0x28] sm:$0xf]
  %v292 = vld [vmem:[%s3 + $0x2c] sm:$0xf]
  %v293 = vld [vmem:[%s3 + $0x30] sm:$0xf]
  %v294 = vld [vmem:[%s3 + $0x34] sm:$0xf]
  %v295 = vld [vmem:[%s3 + $0x38] sm:$0xf]
  %v296 = vld [vmem:[%s3 + $0x3c] sm:$0xf]
  %v297 = vld [vmem:[%s3 + $0x40] sm:$0xf]
  %v298 = vld [vmem:[%s3 + $0x44] sm:$0xf]
  %v299 = vld [vmem:[%s3 + $0x48] sm:$0xf]
  %v300 = vld [vmem:[%s3 + $0x4c] sm:$0xf]
  %v301 = vld [vmem:[%s3 + $0x50] sm:$0xf]
  %v302 = vld [vmem:[%s3 + $0x54] sm:$0xf]
  %v303 = vld [vmem:[%s3 + $0x58] sm:$0xf]
  %v304 = vld [vmem:[%s3 + $0x5c] sm:$0xf]
  %v305 = vld [vmem:[%s3 + $0x60] sm:$0xf]
  %v306 = vld [vmem:[%s3 + $0x64] sm:$0xf]
  %v307 = vld [vmem:[%s3 + $0x68] sm:$0xf]
  %v308 = vld [vmem:[%s3 + $0x6c] sm:$0xf]
  %v309 = vld [vmem:[%s3 + $0x70] sm:$0xf]
  %v310 = vld [vmem:[%s3 + $0x74] sm:$0xf]
  %v311 = vld [vmem:[%s3 + $0x78] sm:$0xf]
  %v312 = vld [vmem:[%s3 + $0x7c] sm:$0xf]
  %v313 = vld [vmem:[%s3 + $0x80] sm:$0xf]
  %v314 = vld [vmem:[%s3 + $0x84] sm:$0xf]
  %v315 = vld [vmem:[%s3 + $0x88] sm:$0xf]
  %v316 = vld [vmem:[%s3 + $0x8c] sm:$0xf]
  %v317 = vld [vmem:[%s3 + $0x90] sm:$0xf]
  %v318 = vld [vmem:[%s3 + $0x94] sm:$0xf]
  %v319 = vld [vmem:[%s3 + $0x98] sm:$0xf]
  %v320 = vld [vmem:[%s3 + $0x9c] sm:$0xf]
  %v321 = vld [vmem:[%s3 + $0xa0] sm:$0xf]
  %v322 = vld [vmem:[%s3 + $0xa4] sm:$0xf]
  %v323 = vld [vmem:[%s3 + $0xa8] sm:$0xf]
  %v324 = vld [vmem:[%s3 + $0xac] sm:$0xf]
  %v325 = vld [vmem:[%s3 + $0xb0] sm:$0xf]
  %v326 = vld [vmem:[%s3 + $0xb4] sm:$0xf]
  %v327 = vld [vmem:[%s3 + $0xb8] sm:$0xf]
  %v328 = vld [vmem:[%s3 + $0xbc] sm:$0xf]
  %v329 = vld [vmem:[%s3 + $0xc0] sm:$0xf]
  %v330 = vld [vmem:[%s3 + $0xc4] sm:$0xf]
  %v331 = vld [vmem:[%s3 + $0xc8] sm:$0xf]
  %v332 = vld [vmem:[%s3 + $0xcc] sm:$0xf]
  %v333 = vld [vmem:[%s3 + $0xd0] sm:$0xf]
  %v334 = vld [vmem:[%s3 + $0xd4] sm:$0xf]
  %v335 = vld [vmem:[%s3 + $0xd8] sm:$0xf]
  %v336 = vld [vmem:[%s3 + $0xdc] sm:$0xf]
  %v337 = vld [vmem:[%s3 + $0xe0] sm:$0xf]
  %v338 = vld [vmem:[%s3 + $0xe4] sm:$0xf]
  %v339 = vld [vmem:[%s3 + $0xe8] sm:$0xf]
  %v340 = vld [vmem:[%s3 + $0xec] sm:$0xf]
  %v341 = vld [vmem:[%s3 + $0xf0] sm:$0xf]
  %v342 = vld [vmem:[%s3 + $0xf4] sm:$0xf]
  %v343 = vld [vmem:[%s3 + $0xf8] sm:$0xf]
  %v344 = vld [vmem:[%s3 + $0xfc] sm:$0xf]
  %v345 = vunpack.c.l.bf16 %v281
  %v346 = vunpack.c.l.bf16 %v282
  %v347 = vunpack.c.l.bf16 %v283
  %v348 = vunpack.c.l.bf16 %v284
  %v349 = vunpack.c.l.bf16 %v285
  %v350 = vunpack.c.l.bf16 %v286
  %v351 = vunpack.c.l.bf16 %v287
  %v352 = vunpack.c.l.bf16 %v288
  %v353 = vunpack.c.l.bf16 %v289
  %v354 = vunpack.c.l.bf16 %v290
  %v355 = vunpack.c.l.bf16 %v291
  %v356 = vunpack.c.l.bf16 %v292
  %v357 = vunpack.c.l.bf16 %v293
  %v358 = vunpack.c.l.bf16 %v294
  %v359 = vunpack.c.l.bf16 %v295
  %v360 = vunpack.c.l.bf16 %v296
  %v361 = vunpack.c.l.bf16 %v297
  %v362 = vunpack.c.l.bf16 %v298
  %v363 = vunpack.c.l.bf16 %v299
  %v364 = vunpack.c.l.bf16 %v300
  %v365 = vunpack.c.l.bf16 %v301
  %v366 = vunpack.c.l.bf16 %v302
  %v367 = vunpack.c.l.bf16 %v303
  %v368 = vunpack.c.l.bf16 %v304
  %v369 = vunpack.c.l.bf16 %v305
  %v370 = vunpack.c.l.bf16 %v306
  %v371 = vunpack.c.l.bf16 %v307
  %v372 = vunpack.c.l.bf16 %v308
  %v373 = vunpack.c.l.bf16 %v309
  %v374 = vunpack.c.l.bf16 %v310
  %v375 = vunpack.c.l.bf16 %v311
  %v376 = vunpack.c.l.bf16 %v312
  %v377 = vunpack.c.l.bf16 %v313
  %v378 = vunpack.c.l.bf16 %v314
  %v379 = vunpack.c.l.bf16 %v315
  %v380 = vunpack.c.l.bf16 %v316
  %v381 = vunpack.c.l.bf16 %v317
  %v382 = vunpack.c.l.bf16 %v318
  %v383 = vunpack.c.l.bf16 %v319
  %v384 = vunpack.c.l.bf16 %v320
  %v385 = vunpack.c.l.bf16 %v321
  %v386 = vunpack.c.l.bf16 %v322
  %v387 = vunpack.c.l.bf16 %v323
  %v388 = vunpack.c.l.bf16 %v324
  %v389 = vunpack.c.l.bf16 %v325
  %v390 = vunpack.c.l.bf16 %v326
  %v391 = vunpack.c.l.bf16 %v327
  %v392 = vunpack.c.l.bf16 %v328
  %v393 = vunpack.c.l.bf16 %v329
  %v394 = vunpack.c.l.bf16 %v330
  %v395 = vunpack.c.l.bf16 %v331
  %v396 = vunpack.c.l.bf16 %v332
  %v397 = vunpack.c.l.bf16 %v333
  %v398 = vunpack.c.l.bf16 %v334
  %v399 = vunpack.c.l.bf16 %v335
  %v400 = vunpack.c.l.bf16 %v336
  %v401 = vunpack.c.l.bf16 %v337
  %v402 = vunpack.c.l.bf16 %v338
  %v403 = vunpack.c.l.bf16 %v339
  %v404 = vunpack.c.l.bf16 %v340
  %v405 = vunpack.c.l.bf16 %v341
  %v406 = vunpack.c.l.bf16 %v342
  %v407 = vunpack.c.l.bf16 %v343
  %v408 = vunpack.c.l.bf16 %v344
  %v409 = vadd.f32 %v217, %v345
  %v410 = vadd.f32 %v218, %v346
  %v411 = vadd.f32 %v219, %v347
  %v412 = vadd.f32 %v220, %v348
  %v413 = vadd.f32 %v221, %v349
  %v414 = vadd.f32 %v222, %v350
  %v415 = vadd.f32 %v223, %v351
  %v416 = vadd.f32 %v224, %v352
  %v417 = vadd.f32 %v225, %v353
  %v418 = vadd.f32 %v226, %v354
  %v419 = vadd.f32 %v227, %v355
  %v420 = vadd.f32 %v228, %v356
  %v421 = vadd.f32 %v229, %v357
  %v422 = vadd.f32 %v230, %v358
  %v423 = vadd.f32 %v231, %v359
  %v424 = vadd.f32 %v232, %v360
  %v425 = vadd.f32 %v233, %v361
  %v426 = vadd.f32 %v234, %v362
  %v427 = vadd.f32 %v235, %v363
  %v428 = vadd.f32 %v236, %v364
  %v429 = vadd.f32 %v237, %v365
  %v430 = vadd.f32 %v238, %v366
  %v431 = vadd.f32 %v239, %v367
  %v432 = vadd.f32 %v240, %v368
  %v433 = vadd.f32 %v241, %v369
  %v434 = vadd.f32 %v242, %v370
  %v435 = vadd.f32 %v243, %v371
  %v436 = vadd.f32 %v244, %v372
  %v437 = vadd.f32 %v245, %v373
  %v438 = vadd.f32 %v246, %v374
  %v439 = vadd.f32 %v247, %v375
  %v440 = vadd.f32 %v248, %v376
  %v441 = vadd.f32 %v249, %v377
  %v442 = vadd.f32 %v250, %v378
  %v443 = vadd.f32 %v251, %v379
  %v444 = vadd.f32 %v252, %v380
  %v445 = vadd.f32 %v253, %v381
  %v446 = vadd.f32 %v254, %v382
  %v447 = vadd.f32 %v255, %v383
  %v448 = vadd.f32 %v256, %v384
  %v449 = vadd.f32 %v257, %v385
  %v450 = vadd.f32 %v258, %v386
  %v451 = vadd.f32 %v259, %v387
  %v452 = vadd.f32 %v260, %v388
  %v453 = vadd.f32 %v261, %v389
  %v454 = vadd.f32 %v262, %v390
  %v455 = vadd.f32 %v263, %v391
  %v456 = vadd.f32 %v264, %v392
  %v457 = vadd.f32 %v265, %v393
  %v458 = vadd.f32 %v266, %v394
  %v459 = vadd.f32 %v267, %v395
  %v460 = vadd.f32 %v268, %v396
  %v461 = vadd.f32 %v269, %v397
  %v462 = vadd.f32 %v270, %v398
  %v463 = vadd.f32 %v271, %v399
  %v464 = vadd.f32 %v272, %v400
  %v465 = vadd.f32 %v273, %v401
  %v466 = vadd.f32 %v274, %v402
  %v467 = vadd.f32 %v275, %v403
  %v468 = vadd.f32 %v276, %v404
  %v469 = vadd.f32 %v277, %v405
  %v470 = vadd.f32 %v278, %v406
  %v471 = vadd.f32 %v279, %v407
  %v472 = vadd.f32 %v280, %v408
  %v473 = vmax.f32 %v409, 0.0
  %v474 = vmax.f32 %v410, 0.0
  %v475 = vmax.f32 %v411, 0.0
  %v476 = vmax.f32 %v412, 0.0
  %v477 = vmax.f32 %v413, 0.0
  %v478 = vmax.f32 %v414, 0.0
  %v479 = vmax.f32 %v415, 0.0
  %v480 = vmax.f32 %v416, 0.0
  %v481 = vmax.f32 %v417, 0.0
  %v482 = vmax.f32 %v418, 0.0
  %v483 = vmax.f32 %v419, 0.0
  %v484 = vmax.f32 %v420, 0.0
  %v485 = vmax.f32 %v421, 0.0
  %v486 = vmax.f32 %v422, 0.0
  %v487 = vmax.f32 %v423, 0.0
  %v488 = vmax.f32 %v424, 0.0
  %v489 = vmax.f32 %v425, 0.0
  %v490 = vmax.f32 %v426, 0.0
  %v491 = vmax.f32 %v427, 0.0
  %v492 = vmax.f32 %v428, 0.0
  %v493 = vmax.f32 %v429, 0.0
  %v494 = vmax.f32 %v430, 0.0
  %v495 = vmax.f32 %v431, 0.0
  %v496 = vmax.f32 %v432, 0.0
  %v497 = vmax.f32 %v433, 0.0
  %v498 = vmax.f32 %v434, 0.0
  %v499 = vmax.f32 %v435, 0.0
  %v500 = vmax.f32 %v436, 0.0
  %v501 = vmax.f32 %v437, 0.0
  %v502 = vmax.f32 %v438, 0.0
  %v503 = vmax.f32 %v439, 0.0
  %v504 = vmax.f32 %v440, 0.0
  %v505 = vmax.f32 %v441, 0.0
  %v506 = vmax.f32 %v442, 0.0
  %v507 = vmax.f32 %v443, 0.0
  %v508 = vmax.f32 %v444, 0.0
  %v509 = vmax.f32 %v445, 0.0
  %v510 = vmax.f32 %v446, 0.0
  %v511 = vmax.f32 %v447, 0.0
  %v512 = vmax.f32 %v448, 0.0
  %v513 = vmax.f32 %v449, 0.0
  %v514 = vmax.f32 %v450, 0.0
  %v515 = vmax.f32 %v451, 0.0
  %v516 = vmax.f32 %v452, 0.0
  %v517 = vmax.f32 %v453, 0.0
  %v518 = vmax.f32 %v454, 0.0
  %v519 = vmax.f32 %v455, 0.0
  %v520 = vmax.f32 %v456, 0.0
  %v521 = vmax.f32 %v457, 0.0
  %v522 = vmax.f32 %v458, 0.0
  %v523 = vmax.f32 %v459, 0.0
  %v524 = vmax.f32 %v460, 0.0
  %v525 = vmax.f32 %v461, 0.0
  %v526 = vmax.f32 %v462, 0.0
  %v527 = vmax.f32 %v463, 0.0
  %v528 = vmax.f32 %v464, 0.0
  %v529 = vmax.f32 %v465, 0.0
  %v530 = vmax.f32 %v466, 0.0
  %v531 = vmax.f32 %v467, 0.0
  %v532 = vmax.f32 %v468, 0.0
  %v533 = vmax.f32 %v469, 0.0
  %v534 = vmax.f32 %v470, 0.0
  %v535 = vmax.f32 %v471, 0.0
  %v536 = vmax.f32 %v472, 0.0
  %v537 = vpack.c.bf16 %v473, %v473
  %v538 = vpack.c.bf16 %v474, %v474
  %v539 = vpack.c.bf16 %v475, %v475
  %v540 = vpack.c.bf16 %v476, %v476
  %v541 = vpack.c.bf16 %v477, %v477
  %v542 = vpack.c.bf16 %v478, %v478
  %v543 = vpack.c.bf16 %v479, %v479
  %v544 = vpack.c.bf16 %v480, %v480
  %v545 = vpack.c.bf16 %v481, %v481
  %v546 = vpack.c.bf16 %v482, %v482
  %v547 = vpack.c.bf16 %v483, %v483
  %v548 = vpack.c.bf16 %v484, %v484
  %v549 = vpack.c.bf16 %v485, %v485
  %v550 = vpack.c.bf16 %v486, %v486
  %v551 = vpack.c.bf16 %v487, %v487
  %v552 = vpack.c.bf16 %v488, %v488
  %v553 = vpack.c.bf16 %v489, %v489
  %v554 = vpack.c.bf16 %v490, %v490
  %v555 = vpack.c.bf16 %v491, %v491
  %v556 = vpack.c.bf16 %v492, %v492
  %v557 = vpack.c.bf16 %v493, %v493
  %v558 = vpack.c.bf16 %v494, %v494
  %v559 = vpack.c.bf16 %v495, %v495
  %v560 = vpack.c.bf16 %v496, %v496
  %v561 = vpack.c.bf16 %v497, %v497
  %v562 = vpack.c.bf16 %v498, %v498
  %v563 = vpack.c.bf16 %v499, %v499
  %v564 = vpack.c.bf16 %v500, %v500
  %v565 = vpack.c.bf16 %v501, %v501
  %v566 = vpack.c.bf16 %v502, %v502
  %v567 = vpack.c.bf16 %v503, %v503
  %v568 = vpack.c.bf16 %v504, %v504
  %v569 = vpack.c.bf16 %v505, %v505
  %v570 = vpack.c.bf16 %v506, %v506
  %v571 = vpack.c.bf16 %v507, %v507
  %v572 = vpack.c.bf16 %v508, %v508
  %v573 = vpack.c.bf16 %v509, %v509
  %v574 = vpack.c.bf16 %v510, %v510
  %v575 = vpack.c.bf16 %v511, %v511
  %v576 = vpack.c.bf16 %v512, %v512
  %v577 = vpack.c.bf16 %v513, %v513
  %v578 = vpack.c.bf16 %v514, %v514
  %v579 = vpack.c.bf16 %v515, %v515
  %v580 = vpack.c.bf16 %v516, %v516
  %v581 = vpack.c.bf16 %v517, %v517
  %v582 = vpack.c.bf16 %v518, %v518
  %v583 = vpack.c.bf16 %v519, %v519
  %v584 = vpack.c.bf16 %v520, %v520
  %v585 = vpack.c.bf16 %v521, %v521
  %v586 = vpack.c.bf16 %v522, %v522
  %v587 = vpack.c.bf16 %v523, %v523
  %v588 = vpack.c.bf16 %v524, %v524
  %v589 = vpack.c.bf16 %v525, %v525
  %v590 = vpack.c.bf16 %v526, %v526
  %v591 = vpack.c.bf16 %v527, %v527
  %v592 = vpack.c.bf16 %v528, %v528
  %v593 = vpack.c.bf16 %v529, %v529
  %v594 = vpack.c.bf16 %v530, %v530
  %v595 = vpack.c.bf16 %v531, %v531
  %v596 = vpack.c.bf16 %v532, %v532
  %v597 = vpack.c.bf16 %v533, %v533
  %v598 = vpack.c.bf16 %v534, %v534
  %v599 = vpack.c.bf16 %v535, %v535
  %v600 = vpack.c.bf16 %v536, %v536
  %601 = vst [vmem:[%s4] sm:$0xf] %v537
  %602 = vst [vmem:[%s4 + $0x4] sm:$0xf] %v538
  %603 = vst [vmem:[%s4 + $0x8] sm:$0xf] %v539
  %604 = vst [vmem:[%s4 + $0xc] sm:$0xf] %v540
  %605 = vst [vmem:[%s4 + $0x10] sm:$0xf] %v541
  %606 = vst [vmem:[%s4 + $0x14] sm:$0xf] %v542
  %607 = vst [vmem:[%s4 + $0x18] sm:$0xf] %v543
  %608 = vst [vmem:[%s4 + $0x1c] sm:$0xf] %v544
  %609 = vst [vmem:[%s4 + $0x20] sm:$0xf] %v545
  %610 = vst [vmem:[%s4 + $0x24] sm:$0xf] %v546
  %611 = vst [vmem:[%s4 + $0x28] sm:$0xf] %v547
  %612 = vst [vmem:[%s4 + $0x2c] sm:$0xf] %v548
  %613 = vst [vmem:[%s4 + $0x30] sm:$0xf] %v549
  %614 = vst [vmem:[%s4 + $0x34] sm:$0xf] %v550
  %615 = vst [vmem:[%s4 + $0x38] sm:$0xf] %v551
  %616 = vst [vmem:[%s4 + $0x3c] sm:$0xf] %v552
  %617 = vst [vmem:[%s4 + $0x40] sm:$0xf] %v553
  %618 = vst [vmem:[%s4 + $0x44] sm:$0xf] %v554
  %619 = vst [vmem:[%s4 + $0x48] sm:$0xf] %v555
  %620 = vst [vmem:[%s4 + $0x4c] sm:$0xf] %v556
  %621 = vst [vmem:[%s4 + $0x50] sm:$0xf] %v557
  %622 = vst [vmem:[%s4 + $0x54] sm:$0xf] %v558
  %623 = vst [vmem:[%s4 + $0x58] sm:$0xf] %v559
  %624 = vst [vmem:[%s4 + $0x5c] sm:$0xf] %v560
  %625 = vst [vmem:[%s4 + $0x60] sm:$0xf] %v561
  %626 = vst [vmem:[%s4 + $0x64] sm:$0xf] %v562
  %627 = vst [vmem:[%s4 + $0x68] sm:$0xf] %v563
  %628 = vst [vmem:[%s4 + $0x6c] sm:$0xf] %v564
  %629 = vst [vmem:[%s4 + $0x70] sm:$0xf] %v565
  %630 = vst [vmem:[%s4 + $0x74] sm:$0xf] %v566
  %631 = vst [vmem:[%s4 + $0x78] sm:$0xf] %v567
  %632 = vst [vmem:[%s4 + $0x7c] sm:$0xf] %v568
  %633 = vst [vmem:[%s4 + $0x80] sm:$0xf] %v569
  %634 = vst [vmem:[%s4 + $0x84] sm:$0xf] %v570
  %635 = vst [vmem:[%s4 + $0x88] sm:$0xf] %v571
  %636 = vst [vmem:[%s4 + $0x8c] sm:$0xf] %v572
  %637 = vst [vmem:[%s4 + $0x90] sm:$0xf] %v573
  %638 = vst [vmem:[%s4 + $0x94] sm:$0xf] %v574
  %639 = vst [vmem:[%s4 + $0x98] sm:$0xf] %v575
  %640 = vst [vmem:[%s4 + $0x9c] sm:$0xf] %v576
  %641 = vst [vmem:[%s4 + $0xa0] sm:$0xf] %v577
  %642 = vst [vmem:[%s4 + $0xa4] sm:$0xf] %v578
  %643 = vst [vmem:[%s4 + $0xa8] sm:$0xf] %v579
  %644 = vst [vmem:[%s4 + $0xac] sm:$0xf] %v580
  %645 = vst [vmem:[%s4 + $0xb0] sm:$0xf] %v581
  %646 = vst [vmem:[%s4 + $0xb4] sm:$0xf] %v582
  %647 = vst [vmem:[%s4 + $0xb8] sm:$0xf] %v583
  %648 = vst [vmem:[%s4 + $0xbc] sm:$0xf] %v584
  %649 = vst [vmem:[%s4 + $0xc0] sm:$0xf] %v585
  %650 = vst [vmem:[%s4 + $0xc4] sm:$0xf] %v586
  %651 = vst [vmem:[%s4 + $0xc8] sm:$0xf] %v587
  %652 = vst [vmem:[%s4 + $0xcc] sm:$0xf] %v588
  %653 = vst [vmem:[%s4 + $0xd0] sm:$0xf] %v589
  %654 = vst [vmem:[%s4 + $0xd4] sm:$0xf] %v590
  %655 = vst [vmem:[%s4 + $0xd8] sm:$0xf] %v591
  %656 = vst [vmem:[%s4 + $0xdc] sm:$0xf] %v592
  %657 = vst [vmem:[%s4 + $0xe0] sm:$0xf] %v593
  %658 = vst [vmem:[%s4 + $0xe4] sm:$0xf] %v594
  %659 = vst [vmem:[%s4 + $0xe8] sm:$0xf] %v595
  %660 = vst [vmem:[%s4 + $0xec] sm:$0xf] %v596
  %661 = vst [vmem:[%s4 + $0xf0] sm:$0xf] %v597
  %662 = vst [vmem:[%s4 + $0xf4] sm:$0xf] %v598
  %663 = vst [vmem:[%s4 + $0xf8] sm:$0xf] %v599
  %664 = vst [vmem:[%s4 + $0xfc] sm:$0xf] %v600
  // Predicated region
  $region18: #{resbn_forward.9} parent=0 // pred_check
    _
  $region19: #{resbn_forward.9} parent=0 // pred_check_branch
    %666 = sbr.rel (0) target = $region21
  $region20: #{resbn_forward.9} parent=0 // pred_region
    _
  $region21: #{resbn_forward.9} parent=0 // pred_fallthru
    _
  // Predicated region
  $region22: #{resbn_forward.9} parent=0 // pred_check
    _
  $region23: #{resbn_forward.9} parent=0 // pred_check_branch
    %668 = sbr.rel (0) target = $region25
  $region24: #{resbn_forward.9} parent=0 // pred_region
    _
  $region25: #{resbn_forward.9} parent=0 // pred_fallthru
    _

// kernel: resbn_forward.8
$region0: #{resbn_forward.8}
  #allocation0 [shape = 'u32[]', space=smem, size = 0x4, offset = 0x4, fixed_abs, tag = 'smem constant byte address 0x4 - core index']
  #allocation1 [shape = 'u32[72,128]{1,0:T(1,128)}', space=vmem, size = 0x9000, scoped, tag = 'internal scratch']
  %s0 = inlined_call_operand.vmem [shape: bf16[512,128], index: 0, kind: input, shape index: {}]
  %s1 = inlined_call_operand.vmem [shape: f32[1,128], index: 1, kind: input, shape index: {}]
  %s2 = inlined_call_operand.vmem [shape: f32[1,128], index: 2, kind: input, shape index: {}]
  %s3 = inlined_call_operand.vmem [shape: bf16[128,128], index: 3, kind: input, shape index: {}]
  %s4 = inlined_call_operand.vmem [shape: bf16[512,128], index: 4, kind: output, shape index: {0}]
  %s5 = inlined_call_operand.vmem [shape: f32[1,2,128], index: 5, kind: output, shape index: {1}]
  %6 = xla_tuple %s4, %s5
  %s7 = sld [smem:[#allocation0]]
  $region34: #{resbn_forward.8} parent=0
    _
  %s9 = ssub.s32 1, %s7
  %s10 = scalar_select 0, %s9, %s7
  // Predicated region
  $region2: #{resbn_forward.8} parent=0 // pred_check
    _
  $region3: #{resbn_forward.8} parent=0 // pred_check_branch
    %12 = sbr.rel (0) target = $region5
  $region4: #{resbn_forward.8} parent=0 // pred_region
    _
  $region5: #{resbn_forward.8} parent=0 // pred_fallthru
    _
  // Predicated region
  $region6: #{resbn_forward.8} parent=0 // pred_check
    _
  $region7: #{resbn_forward.8} parent=0 // pred_check_branch
    %14 = sbr.rel (0) target = $region9
  $region8: #{resbn_forward.8} parent=0 // pred_region
    _
  $region9: #{resbn_forward.8} parent=0 // pred_fallthru
    _
  // Predicated region
  $region10: #{resbn_forward.8} parent=0 // pred_check
    _
  $region11: #{resbn_forward.8} parent=0 // pred_check_branch
    %16 = sbr.rel (0) target = $region13
  $region12: #{resbn_forward.8} parent=0 // pred_region
    _
  $region13: #{resbn_forward.8} parent=0 // pred_fallthru
    _
  // Predicated region
  $region14: #{resbn_forward.8} parent=0 // pred_check
    _
  $region15: #{resbn_forward.8} parent=0 // pred_check_branch
    %18 = sbr.rel (0) target = $region17
  $region16: #{resbn_forward.8} parent=0 // pred_region
    _
  $region17: #{resbn_forward.8} parent=0 // pred_fallthru
    _
  %v19 = vld [vmem:[%s0] sm:$0xf]
  %v20 = vld [vmem:[%s0 + $0x4] sm:$0xf]
  %v21 = vld [vmem:[%s0 + $0x8] sm:$0xf]
  %v22 = vld [vmem:[%s0 + $0xc] sm:$0xf]
  %v23 = vld [vmem:[%s0 + $0x10] sm:$0xf]
  %v24 = vld [vmem:[%s0 + $0x14] sm:$0xf]
  %v25 = vld [vmem:[%s0 + $0x18] sm:$0xf]
  %v26 = vld [vmem:[%s0 + $0x1c] sm:$0xf]
  %v27 = vld [vmem:[%s0 + $0x20] sm:$0xf]
  %v28 = vld [vmem:[%s0 + $0x24] sm:$0xf]
  %v29 = vld [vmem:[%s0 + $0x28] sm:$0xf]
  %v30 = vld [vmem:[%s0 + $0x2c] sm:$0xf]
  %v31 = vld [vmem:[%s0 + $0x30] sm:$0xf]
  %v32 = vld [vmem:[%s0 + $0x34] sm:$0xf]
  %v33 = vld [vmem:[%s0 + $0x38] sm:$0xf]
  %v34 = vld [vmem:[%s0 + $0x3c] sm:$0xf]
  %v35 = vld [vmem:[%s0 + $0x40] sm:$0xf]
  %v36 = vld [vmem:[%s0 + $0x44] sm:$0xf]
  %v37 = vld [vmem:[%s0 + $0x48] sm:$0xf]
  %v38 = vld [vmem:[%s0 + $0x4c] sm:$0xf]
  %v39 = vld [vmem:[%s0 + $0x50] sm:$0xf]
  %v40 = vld [vmem:[%s0 + $0x54] sm:$0xf]
  %v41 = vld [vmem:[%s0 + $0x58] sm:$0xf]
  %v42 = vld [vmem:[%s0 + $0x5c] sm:$0xf]
  %v43 = vld [vmem:[%s0 + $0x60] sm:$0xf]
  %v44 = vld [vmem:[%s0 + $0x64] sm:$0xf]
  %v45 = vld [vmem:[%s0 + $0x68] sm:$0xf]
  %v46 = vld [vmem:[%s0 + $0x6c] sm:$0xf]
  %v47 = vld [vmem:[%s0 + $0x70] sm:$0xf]
  %v48 = vld [vmem:[%s0 + $0x74] sm:$0xf]
  %v49 = vld [vmem:[%s0 + $0x78] sm:$0xf]
  %v50 = vld [vmem:[%s0 + $0x7c] sm:$0xf]
  %v51 = vld [vmem:[%s0 + $0x80] sm:$0xf]
  %v52 = vld [vmem:[%s0 + $0x84] sm:$0xf]
  %v53 = vld [vmem:[%s0 + $0x88] sm:$0xf]
  %v54 = vld [vmem:[%s0 + $0x8c] sm:$0xf]
  %v55 = vld [vmem:[%s0 + $0x90] sm:$0xf]
  %v56 = vld [vmem:[%s0 + $0x94] sm:$0xf]
  %v57 = vld [vmem:[%s0 + $0x98] sm:$0xf]
  %v58 = vld [vmem:[%s0 + $0x9c] sm:$0xf]
  %v59 = vld [vmem:[%s0 + $0xa0] sm:$0xf]
  %v60 = vld [vmem:[%s0 + $0xa4] sm:$0xf]
  %v61 = vld [vmem:[%s0 + $0xa8] sm:$0xf]
  %v62 = vld [vmem:[%s0 + $0xac] sm:$0xf]
  %v63 = vld [vmem:[%s0 + $0xb0] sm:$0xf]
  %v64 = vld [vmem:[%s0 + $0xb4] sm:$0xf]
  %v65 = vld [vmem:[%s0 + $0xb8] sm:$0xf]
  %v66 = vld [vmem:[%s0 + $0xbc] sm:$0xf]
  %v67 = vld [vmem:[%s0 + $0xc0] sm:$0xf]
  %v68 = vld [vmem:[%s0 + $0xc4] sm:$0xf]
  %v69 = vld [vmem:[%s0 + $0xc8] sm:$0xf]
  %v70 = vld [vmem:[%s0 + $0xcc] sm:$0xf]
  %v71 = vld [vmem:[%s0 + $0xd0] sm:$0xf]
  %v72 = vld [vmem:[%s0 + $0xd4] sm:$0xf]
  %v73 = vld [vmem:[%s0 + $0xd8] sm:$0xf]
  %v74 = vld [vmem:[%s0 + $0xdc] sm:$0xf]
  %v75 = vld [vmem:[%s0 + $0xe0] sm:$0xf]
  %v76 = vld [vmem:[%s0 + $0xe4] sm:$0xf]
  %v77 = vld [vmem:[%s0 + $0xe8] sm:$0xf]
  %v78 = vld [vmem:[%s0 + $0xec] sm:$0xf]
  %v79 = vld [vmem:[%s0 + $0xf0] sm:$0xf]
  %v80 = vld [vmem:[%s0 + $0xf4] sm:$0xf]
  %v81 = vld [vmem:[%s0 + $0xf8] sm:$0xf]
  %v82 = vld [vmem:[%s0 + $0xfc] sm:$0xf]
  %v83 = vunpack.c.l.bf16 %v19
  %v84 = vunpack.c.l.bf16 %v20
  %v85 = vunpack.c.l.bf16 %v21
  %v86 = vunpack.c.l.bf16 %v22
  %v87 = vunpack.c.l.bf16 %v23
  %v88 = vunpack.c.l.bf16 %v24
  %v89 = vunpack.c.l.bf16 %v25
  %v90 = vunpack.c.l.bf16 %v26
  %v91 = vunpack.c.l.bf16 %v27
  %v92 = vunpack.c.l.bf16 %v28
  %v93 = vunpack.c.l.bf16 %v29
  %v94 = vunpack.c.l.bf16 %v30
  %v95 = vunpack.c.l.bf16 %v31
  %v96 = vunpack.c.l.bf16 %v32
  %v97 = vunpack.c.l.bf16 %v33
  %v98 = vunpack.c.l.bf16 %v34
  %v99 = vunpack.c.l.bf16 %v35
  %v100 = vunpack.c.l.bf16 %v36
  %v101 = vunpack.c.l.bf16 %v37
  %v102 = vunpack.c.l.bf16 %v38
  %v103 = vunpack.c.l.bf16 %v39
  %v104 = vunpack.c.l.bf16 %v40
  %v105 = vunpack.c.l.bf16 %v41
  %v106 = vunpack.c.l.bf16 %v42
  %v107 = vunpack.c.l.bf16 %v43
  %v108 = vunpack.c.l.bf16 %v44
  %v109 = vunpack.c.l.bf16 %v45
  %v110 = vunpack.c.l.bf16 %v46
  %v111 = vunpack.c.l.bf16 %v47
  %v112 = vunpack.c.l.bf16 %v48
  %v113 = vunpack.c.l.bf16 %v49
  %v114 = vunpack.c.l.bf16 %v50
  %v115 = vunpack.c.l.bf16 %v51
  %v116 = vunpack.c.l.bf16 %v52
  %v117 = vunpack.c.l.bf16 %v53
  %v118 = vunpack.c.l.bf16 %v54
  %v119 = vunpack.c.l.bf16 %v55
  %v120 = vunpack.c.l.bf16 %v56
  %v121 = vunpack.c.l.bf16 %v57
  %v122 = vunpack.c.l.bf16 %v58
  %v123 = vunpack.c.l.bf16 %v59
  %v124 = vunpack.c.l.bf16 %v60
  %v125 = vunpack.c.l.bf16 %v61
  %v126 = vunpack.c.l.bf16 %v62
  %v127 = vunpack.c.l.bf16 %v63
  %v128 = vunpack.c.l.bf16 %v64
  %v129 = vunpack.c.l.bf16 %v65
  %v130 = vunpack.c.l.bf16 %v66
  %v131 = vunpack.c.l.bf16 %v67
  %v132 = vunpack.c.l.bf16 %v68
  %v133 = vunpack.c.l.bf16 %v69
  %v134 = vunpack.c.l.bf16 %v70
  %v135 = vunpack.c.l.bf16 %v71
  %v136 = vunpack.c.l.bf16 %v72
  %v137 = vunpack.c.l.bf16 %v73
  %v138 = vunpack.c.l.bf16 %v74
  %v139 = vunpack.c.l.bf16 %v75
  %v140 = vunpack.c.l.bf16 %v76
  %v141 = vunpack.c.l.bf16 %v77
  %v142 = vunpack.c.l.bf16 %v78
  %v143 = vunpack.c.l.bf16 %v79
  %v144 = vunpack.c.l.bf16 %v80
  %v145 = vunpack.c.l.bf16 %v81
  %v146 = vunpack.c.l.bf16 %v82
  %v147 = vld [vmem:[%s1] sm:$0x1]
  %v149 = vperm.slane %v147, 0
  %v151 = vmul.f32 %v83, %v149
  %v152 = vmul.f32 %v84, %v149
  %v153 = vmul.f32 %v85, %v149
  %v154 = vmul.f32 %v86, %v149
  %v155 = vmul.f32 %v87, %v149
  %v156 = vmul.f32 %v88, %v149
  %v157 = vmul.f32 %v89, %v149
  %v158 = vmul.f32 %v90, %v149
  %v159 = vmul.f32 %v91, %v149
  %v160 = vmul.f32 %v92, %v149
  %v161 = vmul.f32 %v93, %v149
  %v162 = vmul.f32 %v94, %v149
  %v163 = vmul.f32 %v95, %v149
  %v164 = vmul.f32 %v96, %v149
  %v165 = vmul.f32 %v97, %v149
  %v166 = vmul.f32 %v98, %v149
  %v167 = vmul.f32 %v99, %v149
  %v168 = vmul.f32 %v100, %v149
  %v169 = vmul.f32 %v101, %v149
  %v170 = vmul.f32 %v102, %v149
  %v171 = vmul.f32 %v103, %v149
  %v172 = vmul.f32 %v104, %v149
  %v173 = vmul.f32 %v105, %v149
  %v174 = vmul.f32 %v106, %v149
  %v175 = vmul.f32 %v107, %v149
  %v176 = vmul.f32 %v108, %v149
  %v177 = vmul.f32 %v109, %v149
  %v178 = vmul.f32 %v110, %v149
  %v179 = vmul.f32 %v111, %v149
  %v180 = vmul.f32 %v112, %v149
  %v181 = vmul.f32 %v113, %v149
  %v182 = vmul.f32 %v114, %v149
  %v183 = vmul.f32 %v115, %v149
  %v184 = vmul.f32 %v116, %v149
  %v185 = vmul.f32 %v117, %v149
  %v186 = vmul.f32 %v118, %v149
  %v187 = vmul.f32 %v119, %v149
  %v188 = vmul.f32 %v120, %v149
  %v189 = vmul.f32 %v121, %v149
  %v190 = vmul.f32 %v122, %v149
  %v191 = vmul.f32 %v123, %v149
  %v192 = vmul.f32 %v124, %v149
  %v193 = vmul.f32 %v125, %v149
  %v194 = vmul.f32 %v126, %v149
  %v195 = vmul.f32 %v127, %v149
  %v196 = vmul.f32 %v128, %v149
  %v197 = vmul.f32 %v129, %v149
  %v198 = vmul.f32 %v130, %v149
  %v199 = vmul.f32 %v131, %v149
  %v200 = vmul.f32 %v132, %v149
  %v201 = vmul.f32 %v133, %v149
  %v202 = vmul.f32 %v134, %v149
  %v203 = vmul.f32 %v135, %v149
  %v204 = vmul.f32 %v136, %v149
  %v205 = vmul.f32 %v137, %v149
  %v206 = vmul.f32 %v138, %v149
  %v207 = vmul.f32 %v139, %v149
  %v208 = vmul.f32 %v140, %v149
  %v209 = vmul.f32 %v141, %v149
  %v210 = vmul.f32 %v142, %v149
  %v211 = vmul.f32 %v143, %v149
  %v212 = vmul.f32 %v144, %v149
  %v213 = vmul.f32 %v145, %v149
  %v214 = vmul.f32 %v146, %v149
  %v215 = vld [vmem:[%s2] sm:$0x1]
  %v217 = vperm.slane %v215, 0
  %v219 = vadd.f32 %v151, %v217
  %v220 = vadd.f32 %v152, %v217
  %v221 = vadd.f32 %v153, %v217
  %v222 = vadd.f32 %v154, %v217
  %v223 = vadd.f32 %v155, %v217
  %v224 = vadd.f32 %v156, %v217
  %v225 = vadd.f32 %v157, %v217
  %v226 = vadd.f32 %v158, %v217
  %v227 = vadd.f32 %v159, %v217
  %v228 = vadd.f32 %v160, %v217
  %v229 = vadd.f32 %v161, %v217
  %v230 = vadd.f32 %v162, %v217
  %v231 = vadd.f32 %v163, %v217
  %v232 = vadd.f32 %v164, %v217
  %v233 = vadd.f32 %v165, %v217
  %v234 = vadd.f32 %v166, %v217
  %v235 = vadd.f32 %v167, %v217
  %v236 = vadd.f32 %v168, %v217
  %v237 = vadd.f32 %v169, %v217
  %v238 = vadd.f32 %v170, %v217
  %v239 = vadd.f32 %v171, %v217
  %v240 = vadd.f32 %v172, %v217
  %v241 = vadd.f32 %v173, %v217
  %v242 = vadd.f32 %v174, %v217
  %v243 = vadd.f32 %v175, %v217
  %v244 = vadd.f32 %v176, %v217
  %v245 = vadd.f32 %v177, %v217
  %v246 = vadd.f32 %v178, %v217
  %v247 = vadd.f32 %v179, %v217
  %v248 = vadd.f32 %v180, %v217
  %v249 = vadd.f32 %v181, %v217
  %v250 = vadd.f32 %v182, %v217
  %v251 = vadd.f32 %v183, %v217
  %v252 = vadd.f32 %v184, %v217
  %v253 = vadd.f32 %v185, %v217
  %v254 = vadd.f32 %v186, %v217
  %v255 = vadd.f32 %v187, %v217
  %v256 = vadd.f32 %v188, %v217
  %v257 = vadd.f32 %v189, %v217
  %v258 = vadd.f32 %v190, %v217
  %v259 = vadd.f32 %v191, %v217
  %v260 = vadd.f32 %v192, %v217
  %v261 = vadd.f32 %v193, %v217
  %v262 = vadd.f32 %v194, %v217
  %v263 = vadd.f32 %v195, %v217
  %v264 = vadd.f32 %v196, %v217
  %v265 = vadd.f32 %v197, %v217
  %v266 = vadd.f32 %v198, %v217
  %v267 = vadd.f32 %v199, %v217
  %v268 = vadd.f32 %v200, %v217
  %v269 = vadd.f32 %v201, %v217
  %v270 = vadd.f32 %v202, %v217
  %v271 = vadd.f32 %v203, %v217
  %v272 = vadd.f32 %v204, %v217
  %v273 = vadd.f32 %v205, %v217
  %v274 = vadd.f32 %v206, %v217
  %v275 = vadd.f32 %v207, %v217
  %v276 = vadd.f32 %v208, %v217
  %v277 = vadd.f32 %v209, %v217
  %v278 = vadd.f32 %v210, %v217
  %v279 = vadd.f32 %v211, %v217
  %v280 = vadd.f32 %v212, %v217
  %v281 = vadd.f32 %v213, %v217
  %v282 = vadd.f32 %v214, %v217
  %v283 = vmax.f32 %v219, 0.0
  %v284 = vmax.f32 %v220, 0.0
  %v285 = vmax.f32 %v221, 0.0
  %v286 = vmax.f32 %v222, 0.0
  %v287 = vmax.f32 %v223, 0.0
  %v288 = vmax.f32 %v224, 0.0
  %v289 = vmax.f32 %v225, 0.0
  %v290 = vmax.f32 %v226, 0.0
  %v291 = vmax.f32 %v227, 0.0
  %v292 = vmax.f32 %v228, 0.0
  %v293 = vmax.f32 %v229, 0.0
  %v294 = vmax.f32 %v230, 0.0
  %v295 = vmax.f32 %v231, 0.0
  %v296 = vmax.f32 %v232, 0.0
  %v297 = vmax.f32 %v233, 0.0
  %v298 = vmax.f32 %v234, 0.0
  %v299 = vmax.f32 %v235, 0.0
  %v300 = vmax.f32 %v236, 0.0
  %v301 = vmax.f32 %v237, 0.0
  %v302 = vmax.f32 %v238, 0.0
  %v303 = vmax.f32 %v239, 0.0
  %v304 = vmax.f32 %v240, 0.0
  %v305 = vmax.f32 %v241, 0.0
  %v306 = vmax.f32 %v242, 0.0
  %v307 = vmax.f32 %v243, 0.0
  %v308 = vmax.f32 %v244, 0.0
  %v309 = vmax.f32 %v245, 0.0
  %v310 = vmax.f32 %v246, 0.0
  %v311 = vmax.f32 %v247, 0.0
  %v312 = vmax.f32 %v248, 0.0
  %v313 = vmax.f32 %v249, 0.0
  %v314 = vmax.f32 %v250, 0.0
  %v315 = vmax.f32 %v251, 0.0
  %v316 = vmax.f32 %v252, 0.0
  %v317 = vmax.f32 %v253, 0.0
  %v318 = vmax.f32 %v254, 0.0
  %v319 = vmax.f32 %v255, 0.0
  %v320 = vmax.f32 %v256, 0.0
  %v321 = vmax.f32 %v257, 0.0
  %v322 = vmax.f32 %v258, 0.0
  %v323 = vmax.f32 %v259, 0.0
  %v324 = vmax.f32 %v260, 0.0
  %v325 = vmax.f32 %v261, 0.0
  %v326 = vmax.f32 %v262, 0.0
  %v327 = vmax.f32 %v263, 0.0
  %v328 = vmax.f32 %v264, 0.0
  %v329 = vmax.f32 %v265, 0.0
  %v330 = vmax.f32 %v266, 0.0
  %v331 = vmax.f32 %v267, 0.0
  %v332 = vmax.f32 %v268, 0.0
  %v333 = vmax.f32 %v269, 0.0
  %v334 = vmax.f32 %v270, 0.0
  %v335 = vmax.f32 %v271, 0.0
  %v336 = vmax.f32 %v272, 0.0
  %v337 = vmax.f32 %v273, 0.0
  %v338 = vmax.f32 %v274, 0.0
  %v339 = vmax.f32 %v275, 0.0
  %v340 = vmax.f32 %v276, 0.0
  %v341 = vmax.f32 %v277, 0.0
  %v342 = vmax.f32 %v278, 0.0
  %v343 = vmax.f32 %v279, 0.0
  %v344 = vmax.f32 %v280, 0.0
  %v345 = vmax.f32 %v281, 0.0
  %v346 = vmax.f32 %v282, 0.0
  %v347 = vpack.c.bf16 %v284, %v283
  %v348 = vpack.c.bf16 %v286, %v285
  %v349 = vpack.c.bf16 %v288, %v287
  %v350 = vpack.c.bf16 %v290, %v289
  %v351 = vpack.c.bf16 %v292, %v291
  %v352 = vpack.c.bf16 %v294, %v293
  %v353 = vpack.c.bf16 %v296, %v295
  %v354 = vpack.c.bf16 %v298, %v297
  %v355 = vpack.c.bf16 %v300, %v299
  %v356 = vpack.c.bf16 %v302, %v301
  %v357 = vpack.c.bf16 %v304, %v303
  %v358 = vpack.c.bf16 %v306, %v305
  %v359 = vpack.c.bf16 %v308, %v307
  %v360 = vpack.c.bf16 %v310, %v309
  %v361 = vpack.c.bf16 %v312, %v311
  %v362 = vpack.c.bf16 %v314, %v313
  %v363 = vpack.c.bf16 %v316, %v315
  %v364 = vpack.c.bf16 %v318, %v317
  %v365 = vpack.c.bf16 %v320, %v319
  %v366 = vpack.c.bf16 %v322, %v321
  %v367 = vpack.c.bf16 %v324, %v323
  %v368 = vpack.c.bf16 %v326, %v325
  %v369 = vpack.c.bf16 %v328, %v327
  %v370 = vpack.c.bf16 %v330, %v329
  %v371 = vpack.c.bf16 %v332, %v331
  %v372 = vpack.c.bf16 %v334, %v333
  %v373 = vpack.c.bf16 %v336, %v335
  %v374 = vpack.c.bf16 %v338, %v337
  %v375 = vpack.c.bf16 %v340, %v339
  %v376 = vpack.c.bf16 %v342, %v341
  %v377 = vpack.c.bf16 %v344, %v343
  %v378 = vpack.c.bf16 %v346, %v345
  %v379 = vld [vmem:[%s3] sm:$0xf]
  %v380 = vld [vmem:[%s3 + $0x4] sm:$0xf]
  %v381 = vld [vmem:[%s3 + $0x8] sm:$0xf]
  %v382 = vld [vmem:[%s3 + $0xc] sm:$0xf]
  %v383 = vld [vmem:[%s3 + $0x10] sm:$0xf]
  %v384 = vld [vmem:[%s3 + $0x14] sm:$0xf]
  %v385 = vld [vmem:[%s3 + $0x18] sm:$0xf]
  %v386 = vld [vmem:[%s3 + $0x1c] sm:$0xf]
  %v387 = vld [vmem:[%s3 + $0x20] sm:$0xf]
  %v388 = vld [vmem:[%s3 + $0x24] sm:$0xf]
  %v389 = vld [vmem:[%s3 + $0x28] sm:$0xf]
  %v390 = vld [vmem:[%s3 + $0x2c] sm:$0xf]
  %v391 = vld [vmem:[%s3 + $0x30] sm:$0xf]
  %v392 = vld [vmem:[%s3 + $0x34] sm:$0xf]
  %v393 = vld [vmem:[%s3 + $0x38] sm:$0xf]
  %v394 = vld [vmem:[%s3 + $0x3c] sm:$0xf]
  %v411 = vunpack.c.l.b16 %v379
  %v412 = vunpack.c.l.b16 %v380
  %v413 = vunpack.c.l.b16 %v381
  %v414 = vunpack.c.l.b16 %v382
  %v415 = vunpack.c.l.b16 %v383
  %v416 = vunpack.c.l.b16 %v384
  %v417 = vunpack.c.l.b16 %v385
  %v418 = vunpack.c.l.b16 %v386
  %v419 = vunpack.c.l.b16 %v387
  %v420 = vunpack.c.l.b16 %v388
  %v421 = vunpack.c.l.b16 %v389
  %v422 = vunpack.c.l.b16 %v390
  %v423 = vunpack.c.l.b16 %v391
  %v424 = vunpack.c.l.b16 %v392
  %v425 = vunpack.c.l.b16 %v393
  %v426 = vunpack.c.l.b16 %v394
  %v427 = vpack.c.b16 %v412, %v411
  %v428 = vpack.c.b16 %v414, %v413
  %v429 = vpack.c.b16 %v416, %v415
  %v430 = vpack.c.b16 %v418, %v417
  %v431 = vpack.c.b16 %v420, %v419
  %v432 = vpack.c.b16 %v422, %v421
  %v433 = vpack.c.b16 %v424, %v423
  %v434 = vpack.c.b16 %v426, %v425
  %443 = vmatpush.bf16.msra.mxu0 %v434
  %444 = vmatpush.bf16.msra.mxu0 %v433
  %445 = vmatpush.bf16.msra.mxu0 %v432
  %446 = vmatpush.bf16.msra.mxu0 %v431
  %447 = vmatpush.bf16.msra.mxu0 %v430
  %448 = vmatpush.bf16.msra.mxu0 %v429
  %449 = vmatpush.bf16.msra.mxu0 %v428
  %450 = vmatpush.bf16.msra.mxu0 %v427
  %451 = vmatmul.bf16.gmra.mxu0 %v347
  %v452 = vpop.f32.mrf.mxu0
  %v453 = vadd.f32 0.0, %v452
  %v454 = vpop.f32.mrf.mxu0
  %v455 = vadd.f32 0.0, %v454
  %456 = vmatmul.bf16.gmra.mxu0 %v348
  %v457 = vpop.f32.mrf.mxu0
  %v458 = vadd.f32 0.0, %v457
  %v459 = vpop.f32.mrf.mxu0
  %v460 = vadd.f32 0.0, %v459
  %461 = vmatmul.bf16.gmra.mxu0 %v349
  %v462 = vpop.f32.mrf.mxu0
  %v463 = vadd.f32 0.0, %v462
  %v464 = vpop.f32.mrf.mxu0
  %v465 = vadd.f32 0.0, %v464
  %466 = vmatmul.bf16.gmra.mxu0 %v350
  %v467 = vpop.f32.mrf.mxu0
  %v468 = vadd.f32 0.0, %v467
  %v469 = vpop.f32.mrf.mxu0
  %v470 = vadd.f32 0.0, %v469
  %471 = vmatmul.bf16.gmra.mxu0 %v351
  %v472 = vpop.f32.mrf.mxu0
  %v473 = vadd.f32 0.0, %v472
  %v474 = vpop.f32.mrf.mxu0
  %v475 = vadd.f32 0.0, %v474
  %476 = vmatmul.bf16.gmra.mxu0 %v352
  %v477 = vpop.f32.mrf.mxu0
  %v478 = vadd.f32 0.0, %v477
  %v479 = vpop.f32.mrf.mxu0
  %v480 = vadd.f32 0.0, %v479
  %481 = vmatmul.bf16.gmra.mxu0 %v353
  %v482 = vpop.f32.mrf.mxu0
  %v483 = vadd.f32 0.0, %v482
  %v484 = vpop.f32.mrf.mxu0
  %v485 = vadd.f32 0.0, %v484
  %486 = vmatmul.bf16.gmra.mxu0 %v354
  %v487 = vpop.f32.mrf.mxu0
  %v488 = vadd.f32 0.0, %v487
  %v489 = vpop.f32.mrf.mxu0
  %v490 = vadd.f32 0.0, %v489
  %491 = vmatmul.bf16.gmra.mxu0 %v355
  %v492 = vpop.f32.mrf.mxu0
  %v493 = vadd.f32 0.0, %v492
  %v494 = vpop.f32.mrf.mxu0
  %v495 = vadd.f32 0.0, %v494
  %496 = vmatmul.bf16.gmra.mxu0 %v356
  %v497 = vpop.f32.mrf.mxu0
  %v498 = vadd.f32 0.0, %v497
  %v499 = vpop.f32.mrf.mxu0
  %v500 = vadd.f32 0.0, %v499
  %501 = vmatmul.bf16.gmra.mxu0 %v357
  %v502 = vpop.f32.mrf.mxu0
  %v503 = vadd.f32 0.0, %v502
  %v504 = vpop.f32.mrf.mxu0
  %v505 = vadd.f32 0.0, %v504
  %506 = vmatmul.bf16.gmra.mxu0 %v358
  %v507 = vpop.f32.mrf.mxu0
  %v508 = vadd.f32 0.0, %v507
  %v509 = vpop.f32.mrf.mxu0
  %v510 = vadd.f32 0.0, %v509
  %511 = vmatmul.bf16.gmra.mxu0 %v359
  %v512 = vpop.f32.mrf.mxu0
  %v513 = vadd.f32 0.0, %v512
  %v514 = vpop.f32.mrf.mxu0
  %v515 = vadd.f32 0.0, %v514
  %516 = vmatmul.bf16.gmra.mxu0 %v360
  %v517 = vpop.f32.mrf.mxu0
  %v518 = vadd.f32 0.0, %v517
  %v519 = vpop.f32.mrf.mxu0
  %v520 = vadd.f32 0.0, %v519
  %521 = vmatmul.bf16.gmra.mxu0 %v361
  %v522 = vpop.f32.mrf.mxu0
  %v523 = vadd.f32 0.0, %v522
  %v524 = vpop.f32.mrf.mxu0
  %v525 = vadd.f32 0.0, %v524
  %526 = vmatmul.bf16.gmra.mxu0 %v362
  %v527 = vpop.f32.mrf.mxu0
  %v528 = vadd.f32 0.0, %v527
  %v529 = vpop.f32.mrf.mxu0
  %v530 = vadd.f32 0.0, %v529
  %531 = vmatmul.bf16.gmra.mxu0 %v363
  %v532 = vpop.f32.mrf.mxu0
  %v533 = vadd.f32 0.0, %v532
  %v534 = vpop.f32.mrf.mxu0
  %v535 = vadd.f32 0.0, %v534
  %536 = vmatmul.bf16.gmra.mxu0 %v364
  %v537 = vpop.f32.mrf.mxu0
  %v538 = vadd.f32 0.0, %v537
  %v539 = vpop.f32.mrf.mxu0
  %v540 = vadd.f32 0.0, %v539
  %541 = vmatmul.bf16.gmra.mxu0 %v365
  %v542 = vpop.f32.mrf.mxu0
  %v543 = vadd.f32 0.0, %v542
  %v544 = vpop.f32.mrf.mxu0
  %v545 = vadd.f32 0.0, %v544
  %546 = vmatmul.bf16.gmra.mxu0 %v366
  %v547 = vpop.f32.mrf.mxu0
  %v548 = vadd.f32 0.0, %v547
  %v549 = vpop.f32.mrf.mxu0
  %v550 = vadd.f32 0.0, %v549
  %551 = vmatmul.bf16.gmra.mxu0 %v367
  %v552 = vpop.f32.mrf.mxu0
  %v553 = vadd.f32 0.0, %v552
  %v554 = vpop.f32.mrf.mxu0
  %v555 = vadd.f32 0.0, %v554
  %556 = vmatmul.bf16.gmra.mxu0 %v368
  %v557 = vpop.f32.mrf.mxu0
  %v558 = vadd.f32 0.0, %v557
  %v559 = vpop.f32.mrf.mxu0
  %v560 = vadd.f32 0.0, %v559
  %561 = vmatmul.bf16.gmra.mxu0 %v369
  %v562 = vpop.f32.mrf.mxu0
  %v563 = vadd.f32 0.0, %v562
  %v564 = vpop.f32.mrf.mxu0
  %v565 = vadd.f32 0.0, %v564
  %566 = vmatmul.bf16.gmra.mxu0 %v370
  %v567 = vpop.f32.mrf.mxu0
  %v568 = vadd.f32 0.0, %v567
  %v569 = vpop.f32.mrf.mxu0
  %v570 = vadd.f32 0.0, %v569
  %571 = vmatmul.bf16.gmra.mxu0 %v371
  %v572 = vpop.f32.mrf.mxu0
  %v573 = vadd.f32 0.0, %v572
  %v574 = vpop.f32.mrf.mxu0
  %v575 = vadd.f32 0.0, %v574
  %576 = vmatmul.bf16.gmra.mxu0 %v372
  %v577 = vpop.f32.mrf.mxu0
  %v578 = vadd.f32 0.0, %v577
  %v579 = vpop.f32.mrf.mxu0
  %v580 = vadd.f32 0.0, %v579
  %581 = vmatmul.bf16.gmra.mxu0 %v373
  %v582 = vpop.f32.mrf.mxu0
  %v583 = vadd.f32 0.0, %v582
  %v584 = vpop.f32.mrf.mxu0
  %v585 = vadd.f32 0.0, %v584
  %586 = vmatmul.bf16.gmra.mxu0 %v374
  %v587 = vpop.f32.mrf.mxu0
  %v588 = vadd.f32 0.0, %v587
  %v589 = vpop.f32.mrf.mxu0
  %v590 = vadd.f32 0.0, %v589
  %591 = vmatmul.bf16.gmra.mxu0 %v375
  %v592 = vpop.f32.mrf.mxu0
  %v593 = vadd.f32 0.0, %v592
  %v594 = vpop.f32.mrf.mxu0
  %v595 = vadd.f32 0.0, %v594
  %596 = vmatmul.bf16.gmra.mxu0 %v376
  %v597 = vpop.f32.mrf.mxu0
  %v598 = vadd.f32 0.0, %v597
  %v599 = vpop.f32.mrf.mxu0
  %v600 = vadd.f32 0.0, %v599
  %601 = vmatmul.bf16.gmra.mxu0 %v377
  %v602 = vpop.f32.mrf.mxu0
  %v603 = vadd.f32 0.0, %v602
  %v604 = vpop.f32.mrf.mxu0
  %v605 = vadd.f32 0.0, %v604
  %606 = vmatmul.bf16.gmra.mxu0 %v378
  %v607 = vpop.f32.mrf.mxu0
  %v608 = vadd.f32 0.0, %v607
  %v609 = vpop.f32.mrf.mxu0
  %v610 = vadd.f32 0.0, %v609
  %611 = vdwg.mxu0
  %v612 = vpack.c.bf16 %v453, %v453
  %v613 = vpack.c.bf16 %v455, %v455
  %v614 = vpack.c.bf16 %v458, %v458
  %v615 = vpack.c.bf16 %v460, %v460
  %v616 = vpack.c.bf16 %v463, %v463
  %v617 = vpack.c.bf16 %v465, %v465
  %v618 = vpack.c.bf16 %v468, %v468
  %v619 = vpack.c.bf16 %v470, %v470
  %v620 = vpack.c.bf16 %v473, %v473
  %v621 = vpack.c.bf16 %v475, %v475
  %v622 = vpack.c.bf16 %v478, %v478
  %v623 = vpack.c.bf16 %v480, %v480
  %v624 = vpack.c.bf16 %v483, %v483
  %v625 = vpack.c.bf16 %v485, %v485
  %v626 = vpack.c.bf16 %v488, %v488
  %v627 = vpack.c.bf16 %v490, %v490
  %v628 = vpack.c.bf16 %v493, %v493
  %v629 = vpack.c.bf16 %v495, %v495
  %v630 = vpack.c.bf16 %v498, %v498
  %v631 = vpack.c.bf16 %v500, %v500
  %v632 = vpack.c.bf16 %v503, %v503
  %v633 = vpack.c.bf16 %v505, %v505
  %v634 = vpack.c.bf16 %v508, %v508
  %v635 = vpack.c.bf16 %v510, %v510
  %v636 = vpack.c.bf16 %v513, %v513
  %v637 = vpack.c.bf16 %v515, %v515
  %v638 = vpack.c.bf16 %v518, %v518
  %v639 = vpack.c.bf16 %v520, %v520
  %v640 = vpack.c.bf16 %v523, %v523
  %v641 = vpack.c.bf16 %v525, %v525
  %v642 = vpack.c.bf16 %v528, %v528
  %v643 = vpack.c.bf16 %v530, %v530
  %v644 = vpack.c.bf16 %v533, %v533
  %v645 = vpack.c.bf16 %v535, %v535
  %v646 = vpack.c.bf16 %v538, %v538
  %v647 = vpack.c.bf16 %v540, %v540
  %v648 = vpack.c.bf16 %v543, %v543
  %v649 = vpack.c.bf16 %v545, %v545
  %v650 = vpack.c.bf16 %v548, %v548
  %v651 = vpack.c.bf16 %v550, %v550
  %v652 = vpack.c.bf16 %v553, %v553
  %v653 = vpack.c.bf16 %v555, %v555
  %v654 = vpack.c.bf16 %v558, %v558
  %v655 = vpack.c.bf16 %v560, %v560
  %v656 = vpack.c.bf16 %v563, %v563
  %v657 = vpack.c.bf16 %v565, %v565
  %v658 = vpack.c.bf16 %v568, %v568
  %v659 = vpack.c.bf16 %v570, %v570
  %v660 = vpack.c.bf16 %v573, %v573
  %v661 = vpack.c.bf16 %v575, %v575
  %v662 = vpack.c.bf16 %v578, %v578
  %v663 = vpack.c.bf16 %v580, %v580
  %v664 = vpack.c.bf16 %v583, %v583
  %v665 = vpack.c.bf16 %v585, %v585
  %v666 = vpack.c.bf16 %v588, %v588
  %v667 = vpack.c.bf16 %v590, %v590
  %v668 = vpack.c.bf16 %v593, %v593
  %v669 = vpack.c.bf16 %v595, %v595
  %v670 = vpack.c.bf16 %v598, %v598
  %v671 = vpack.c.bf16 %v600, %v600
  %v672 = vpack.c.bf16 %v603, %v603
  %v673 = vpack.c.bf16 %v605, %v605
  %v674 = vpack.c.bf16 %v608, %v608
  %v675 = vpack.c.bf16 %v610, %v610
  %676 = vst [vmem:[%s4] sm:$0xf] %v612
  %677 = vst [vmem:[%s4 + $0x4] sm:$0xf] %v613
  %678 = vst [vmem:[%s4 + $0x8] sm:$0xf] %v614
  %679 = vst [vmem:[%s4 + $0xc] sm:$0xf] %v615
  %680 = vst [vmem:[%s4 + $0x10] sm:$0xf] %v616
  %681 = vst [vmem:[%s4 + $0x14] sm:$0xf] %v617
  %682 = vst [vmem:[%s4 + $0x18] sm:$0xf] %v618
  %683 = vst [vmem:[%s4 + $0x1c] sm:$0xf] %v619
  %684 = vst [vmem:[%s4 + $0x20] sm:$0xf] %v620
  %685 = vst [vmem:[%s4 + $0x24] sm:$0xf] %v621
  %686 = vst [vmem:[%s4 + $0x28] sm:$0xf] %v622
  %687 = vst [vmem:[%s4 + $0x2c] sm:$0xf] %v623
  %688 = vst [vmem:[%s4 + $0x30] sm:$0xf] %v624
  %689 = vst [vmem:[%s4 + $0x34] sm:$0xf] %v625
  %690 = vst [vmem:[%s4 + $0x38] sm:$0xf] %v626
  %691 = vst [vmem:[%s4 + $0x3c] sm:$0xf] %v627
  %692 = vst [vmem:[%s4 + $0x40] sm:$0xf] %v628
  %693 = vst [vmem:[%s4 + $0x44] sm:$0xf] %v629
  %694 = vst [vmem:[%s4 + $0x48] sm:$0xf] %v630
  %695 = vst [vmem:[%s4 + $0x4c] sm:$0xf] %v631
  %696 = vst [vmem:[%s4 + $0x50] sm:$0xf] %v632
  %697 = vst [vmem:[%s4 + $0x54] sm:$0xf] %v633
  %698 = vst [vmem:[%s4 + $0x58] sm:$0xf] %v634
  %699 = vst [vmem:[%s4 + $0x5c] sm:$0xf] %v635
  %700 = vst [vmem:[%s4 + $0x60] sm:$0xf] %v636
  %701 = vst [vmem:[%s4 + $0x64] sm:$0xf] %v637
  %702 = vst [vmem:[%s4 + $0x68] sm:$0xf] %v638
  %703 = vst [vmem:[%s4 + $0x6c] sm:$0xf] %v639
  %704 = vst [vmem:[%s4 + $0x70] sm:$0xf] %v640
  %705 = vst [vmem:[%s4 + $0x74] sm:$0xf] %v641
  %706 = vst [vmem:[%s4 + $0x78] sm:$0xf] %v642
  %707 = vst [vmem:[%s4 + $0x7c] sm:$0xf] %v643
  %708 = vst [vmem:[%s4 + $0x80] sm:$0xf] %v644
  %709 = vst [vmem:[%s4 + $0x84] sm:$0xf] %v645
  %710 = vst [vmem:[%s4 + $0x88] sm:$0xf] %v646
  %711 = vst [vmem:[%s4 + $0x8c] sm:$0xf] %v647
  %712 = vst [vmem:[%s4 + $0x90] sm:$0xf] %v648
  %713 = vst [vmem:[%s4 + $0x94] sm:$0xf] %v649
  %714 = vst [vmem:[%s4 + $0x98] sm:$0xf] %v650
  %715 = vst [vmem:[%s4 + $0x9c] sm:$0xf] %v651
  %716 = vst [vmem:[%s4 + $0xa0] sm:$0xf] %v652
  %717 = vst [vmem:[%s4 + $0xa4] sm:$0xf] %v653
  %718 = vst [vmem:[%s4 + $0xa8] sm:$0xf] %v654
  %719 = vst [vmem:[%s4 + $0xac] sm:$0xf] %v655
  %720 = vst [vmem:[%s4 + $0xb0] sm:$0xf] %v656
  %721 = vst [vmem:[%s4 + $0xb4] sm:$0xf] %v657
  %722 = vst [vmem:[%s4 + $0xb8] sm:$0xf] %v658
  %723 = vst [vmem:[%s4 + $0xbc] sm:$0xf] %v659
  %724 = vst [vmem:[%s4 + $0xc0] sm:$0xf] %v660
  %725 = vst [vmem:[%s4 + $0xc4] sm:$0xf] %v661
  %726 = vst [vmem:[%s4 + $0xc8] sm:$0xf] %v662
  %727 = vst [vmem:[%s4 + $0xcc] sm:$0xf] %v663
  %728 = vst [vmem:[%s4 + $0xd0] sm:$0xf] %v664
  %729 = vst [vmem:[%s4 + $0xd4] sm:$0xf] %v665
  %730 = vst [vmem:[%s4 + $0xd8] sm:$0xf] %v666
  %731 = vst [vmem:[%s4 + $0xdc] sm:$0xf] %v667
  %732 = vst [vmem:[%s4 + $0xe0] sm:$0xf] %v668
  %733 = vst [vmem:[%s4 + $0xe4] sm:$0xf] %v669
  %734 = vst [vmem:[%s4 + $0xe8] sm:$0xf] %v670
  %735 = vst [vmem:[%s4 + $0xec] sm:$0xf] %v671
  %736 = vst [vmem:[%s4 + $0xf0] sm:$0xf] %v672
  %737 = vst [vmem:[%s4 + $0xf4] sm:$0xf] %v673
  %738 = vst [vmem:[%s4 + $0xf8] sm:$0xf] %v674
  %739 = vst [vmem:[%s4 + $0xfc] sm:$0xf] %v675
  %v740 = vadd.f32 %v453, %v455
  %v741 = vadd.f32 %v740, %v458
  %v742 = vadd.f32 %v741, %v460
  %v743 = vadd.f32 %v742, %v463
  %v744 = vadd.f32 %v743, %v465
  %v745 = vadd.f32 %v744, %v468
  %v746 = vadd.f32 %v745, %v470
  %v747 = vadd.f32 %v746, %v473
  %v748 = vadd.f32 %v747, %v475
  %v749 = vadd.f32 %v748, %v478
  %v750 = vadd.f32 %v749, %v480
  %v751 = vadd.f32 %v750, %v483
  %v752 = vadd.f32 %v751, %v485
  %v753 = vadd.f32 %v752, %v488
  %v754 = vadd.f32 %v753, %v490
  %v755 = vadd.f32 %v754, %v493
  %v756 = vadd.f32 %v755, %v495
  %v757 = vadd.f32 %v756, %v498
  %v758 = vadd.f32 %v757, %v500
  %v759 = vadd.f32 %v758, %v503
  %v760 = vadd.f32 %v759, %v505
  %v761 = vadd.f32 %v760, %v508
  %v762 = vadd.f32 %v761, %v510
  %v763 = vadd.f32 %v762, %v513
  %v764 = vadd.f32 %v763, %v515
  %v765 = vadd.f32 %v764, %v518
  %v766 = vadd.f32 %v765, %v520
  %v767 = vadd.f32 %v766, %v523
  %v768 = vadd.f32 %v767, %v525
  %v769 = vadd.f32 %v768, %v528
  %v770 = vadd.f32 %v769, %v530
  %v771 = vadd.f32 %v770, %v533
  %v772 = vadd.f32 %v771, %v535
  %v773 = vadd.f32 %v772, %v538
  %v774 = vadd.f32 %v773, %v540
  %v775 = vadd.f32 %v774, %v543
  %v776 = vadd.f32 %v775, %v545
  %v777 = vadd.f32 %v776, %v548
  %v778 = vadd.f32 %v777, %v550
  %v779 = vadd.f32 %v778, %v553
  %v780 = vadd.f32 %v779, %v555
  %v781 = vadd.f32 %v780, %v558
  %v782 = vadd.f32 %v781, %v560
  %v783 = vadd.f32 %v782, %v563
  %v784 = vadd.f32 %v783, %v565
  %v785 = vadd.f32 %v784, %v568
  %v786 = vadd.f32 %v785, %v570
  %v787 = vadd.f32 %v786, %v573
  %v788 = vadd.f32 %v787, %v575
  %v789 = vadd.f32 %v788, %v578
  %v790 = vadd.f32 %v789, %v580
  %v791 = vadd.f32 %v790, %v583
  %v792 = vadd.f32 %v791, %v585
  %v793 = vadd.f32 %v792, %v588
  %v794 = vadd.f32 %v793, %v590
  %v795 = vadd.f32 %v794, %v593
  %v796 = vadd.f32 %v795, %v595
  %v797 = vadd.f32 %v796, %v598
  %v798 = vadd.f32 %v797, %v600
  %v799 = vadd.f32 %v798, %v603
  %v800 = vadd.f32 %v799, %v605
  %v801 = vadd.f32 %v800, %v608
  %v802 = vadd.f32 %v801, %v610
  %v803 = vrot.slane %v802, 4
  %v804 = vadd.f32 %v802, %v803
  %v805 = vrot.slane %v804, 2
  %v806 = vadd.f32 %v804, %v805
  %v807 = vrot.slane %v806, 1
  %v808 = vadd.f32 %v806, %v807
  %809 = vst [vmem:[%s5] sm:$0x1] %v808
  %v810 = vmul.f32 %v453, %v453
  %v811 = vmul.f32 %v455, %v455
  %v812 = vmul.f32 %v458, %v458
  %v813 = vmul.f32 %v460, %v460
  %v814 = vmul.f32 %v463, %v463
  %v815 = vmul.f32 %v465, %v465
  %v816 = vmul.f32 %v468, %v468
  %v817 = vmul.f32 %v470, %v470
  %v818 = vmul.f32 %v473, %v473
  %v819 = vmul.f32 %v475, %v475
  %v820 = vmul.f32 %v478, %v478
  %v821 = vmul.f32 %v480, %v480
  %v822 = vmul.f32 %v483, %v483
  %v823 = vmul.f32 %v485, %v485
  %v824 = vmul.f32 %v488, %v488
  %v825 = vmul.f32 %v490, %v490
  %v826 = vmul.f32 %v493, %v493
  %v827 = vmul.f32 %v495, %v495
  %v828 = vmul.f32 %v498, %v498
  %v829 = vmul.f32 %v500, %v500
  %v830 = vmul.f32 %v503, %v503
  %v831 = vmul.f32 %v505, %v505
  %v832 = vmul.f32 %v508, %v508
  %v833 = vmul.f32 %v510, %v510
  %v834 = vmul.f32 %v513, %v513
  %v835 = vmul.f32 %v515, %v515
  %v836 = vmul.f32 %v518, %v518
  %v837 = vmul.f32 %v520, %v520
  %v838 = vmul.f32 %v523, %v523
  %v839 = vmul.f32 %v525, %v525
  %v840 = vmul.f32 %v528, %v528
  %v841 = vmul.f32 %v530, %v530
  %v842 = vmul.f32 %v533, %v533
  %v843 = vmul.f32 %v535, %v535
  %v844 = vmul.f32 %v538, %v538
  %v845 = vmul.f32 %v540, %v540
  %v846 = vmul.f32 %v543, %v543
  %v847 = vmul.f32 %v545, %v545
  %v848 = vmul.f32 %v548, %v548
  %v849 = vmul.f32 %v550, %v550
  %v850 = vmul.f32 %v553, %v553
  %v851 = vmul.f32 %v555, %v555
  %v852 = vmul.f32 %v558, %v558
  %v853 = vmul.f32 %v560, %v560
  %v854 = vmul.f32 %v563, %v563
  %v855 = vmul.f32 %v565, %v565
  %v856 = vmul.f32 %v568, %v568
  %v857 = vmul.f32 %v570, %v570
  %v858 = vmul.f32 %v573, %v573
  %v859 = vmul.f32 %v575, %v575
  %v860 = vmul.f32 %v578, %v578
  %v861 = vmul.f32 %v580, %v580
  %v862 = vmul.f32 %v583, %v583
  %v863 = vmul.f32 %v585, %v585
  %v864 = vmul.f32 %v588, %v588
  %v865 = vmul.f32 %v590, %v590
  %v866 = vmul.f32 %v593, %v593
  %v867 = vmul.f32 %v595, %v595
  %v868 = vmul.f32 %v598, %v598
  %v869 = vmul.f32 %v600, %v600
  %v870 = vmul.f32 %v603, %v603
  %v871 = vmul.f32 %v605, %v605
  %v872 = vmul.f32 %v608, %v608
  %v873 = vmul.f32 %v610, %v610
  %v874 = vadd.f32 %v810, %v811
  %v875 = vadd.f32 %v874, %v812
  %v876 = vadd.f32 %v875, %v813
  %v877 = vadd.f32 %v876, %v814
  %v878 = vadd.f32 %v877, %v815
  %v879 = vadd.f32 %v878, %v816
  %v880 = vadd.f32 %v879, %v817
  %v881 = vadd.f32 %v880, %v818
  %v882 = vadd.f32 %v881, %v819
  %v883 = vadd.f32 %v882, %v820
  %v884 = vadd.f32 %v883, %v821
  %v885 = vadd.f32 %v884, %v822
  %v886 = vadd.f32 %v885, %v823
  %v887 = vadd.f32 %v886, %v824
  %v888 = vadd.f32 %v887, %v825
  %v889 = vadd.f32 %v888, %v826
  %v890 = vadd.f32 %v889, %v827
  %v891 = vadd.f32 %v890, %v828
  %v892 = vadd.f32 %v891, %v829
  %v893 = vadd.f32 %v892, %v830
  %v894 = vadd.f32 %v893, %v831
  %v895 = vadd.f32 %v894, %v832
  %v896 = vadd.f32 %v895, %v833
  %v897 = vadd.f32 %v896, %v834
  %v898 = vadd.f32 %v897, %v835
  %v899 = vadd.f32 %v898, %v836
  %v900 = vadd.f32 %v899, %v837
  %v901 = vadd.f32 %v900, %v838
  %v902 = vadd.f32 %v901, %v839
  %v903 = vadd.f32 %v902, %v840
  %v904 = vadd.f32 %v903, %v841
  %v905 = vadd.f32 %v904, %v842
  %v906 = vadd.f32 %v905, %v843
  %v907 = vadd.f32 %v906, %v844
  %v908 = vadd.f32 %v907, %v845
  %v909 = vadd.f32 %v908, %v846
  %v910 = vadd.f32 %v909, %v847
  %v911 = vadd.f32 %v910, %v848
  %v912 = vadd.f32 %v911, %v849
  %v913 = vadd.f32 %v912, %v850
  %v914 = vadd.f32 %v913, %v851
  %v915 = vadd.f32 %v914, %v852
  %v916 = vadd.f32 %v915, %v853
  %v917 = vadd.f32 %v916, %v854
  %v918 = vadd.f32 %v917, %v855
  %v919 = vadd.f32 %v918, %v856
  %v920 = vadd.f32 %v919, %v857
  %v921 = vadd.f32 %v920, %v858
  %v922 = vadd.f32 %v921, %v859
  %v923 = vadd.f32 %v922, %v860
  %v924 = vadd.f32 %v923, %v861
  %v925 = vadd.f32 %v924, %v862
  %v926 = vadd.f32 %v925, %v863
  %v927 = vadd.f32 %v926, %v864
  %v928 = vadd.f32 %v927, %v865
  %v929 = vadd.f32 %v928, %v866
  %v930 = vadd.f32 %v929, %v867
  %v931 = vadd.f32 %v930, %v868
  %v932 = vadd.f32 %v931, %v869
  %v933 = vadd.f32 %v932, %v870
  %v934 = vadd.f32 %v933, %v871
  %v935 = vadd.f32 %v934, %v872
  %v936 = vadd.f32 %v935, %v873
  %v937 = vrot.slane %v936, 4
  %v938 = vadd.f32 %v936, %v937
  %v939 = vrot.slane %v938, 2
  %v940 = vadd.f32 %v938, %v939
  %v941 = vrot.slane %v940, 1
  %v942 = vadd.f32 %v940, %v941
  %943 = vst [vmem:[%s5 + $0x1] sm:$0x1] %v942
  // Predicated region
  $region18: #{resbn_forward.8} parent=0 // pred_check
    _
  $region19: #{resbn_forward.8} parent=0 // pred_check_branch
    %945 = sbr.rel (0) target = $region21
  $region20: #{resbn_forward.8} parent=0 // pred_region
    _
  $region21: #{resbn_forward.8} parent=0 // pred_fallthru
    _
  // Predicated region
  $region22: #{resbn_forward.8} parent=0 // pred_check
    _
  $region23: #{resbn_forward.8} parent=0 // pred_check_branch
    %947 = sbr.rel (0) target = $region25
  $region24: #{resbn_forward.8} parent=0 // pred_region
    _
  $region25: #{resbn_forward.8} parent=0 // pred_fallthru
    _
  // Predicated region
  $region26: #{resbn_forward.8} parent=0 // pred_check
    _
  $region27: #{resbn_forward.8} parent=0 // pred_check_branch
    %949 = sbr.rel (0) target = $region29
  $region28: #{resbn_forward.8} parent=0 // pred_region
    _
  $region29: #{resbn_forward.8} parent=0 // pred_fallthru
    _
  // Predicated region
  $region30: #{resbn_forward.8} parent=0 // pred_check
    _
  $region31: #{resbn_forward.8} parent=0 // pred_check_branch
    %951 = sbr.rel (0) target = $region33
  $region32: #{resbn_forward.8} parent=0 // pred_region
    _
  $region33: #{resbn_forward.8} parent=0 // pred_fallthru
    _

// kernel: resbn_forward.5
$region0: #{resbn_forward.5}
  #allocation0 [shape = 'u32[]', space=smem, size = 0x4, offset = 0x4, fixed_abs, tag = 'smem constant byte address 0x4 - core index']
  #allocation1 [shape = 'u32[72,128]{1,0:T(1,128)}', space=vmem, size = 0x9000, scoped, tag = 'internal scratch']
  #allocation2 [shape = 'f32[256,128]{1,0:T(8,128)}', space=vmem, size = 0x20000, scoped, tag = 'scratch operand']
  %s0 = inlined_call_operand.vmem [shape: bf16[2,18,18,128], index: 0, kind: input, shape index: {}]
  %s1 = inlined_call_operand.vmem [shape: bf16[3,384,128], index: 1, kind: input, shape index: {}]
  %s2 = inlined_call_operand.vmem [shape: bf16[512,128], index: 2, kind: output, shape index: {0}]
  %s3 = inlined_call_operand.vmem [shape: f32[2,2,128], index: 3, kind: output, shape index: {1}]
  %4 = xla_tuple %s2, %s3
  %s5 = sld [smem:[#allocation0]]
  $region49: #{resbn_forward.5} parent=0
    _
  %s7 = ssub.s32 1, %s5
  %s8 = scalar_select 0, %s7, %s5
  loop: start=0, step=1, limit=4
  $region2: #{resbn_forward.5} parent=0 // loop_pre_header
    _
  $region3: #{resbn_forward.5} parent=0 // loop_header
    %s10 = sphi 0, %s14
    %p11 = scmp.ge.s32.totalorder %s10, 4
    %s17 = sphi 0, %s29
    %s18 = sphi 0, %s25
    %s19 = sphi 0, %s17
    %s20 = sphi 0, %s18
    %s21 = sphi 0, %s19
    %s22 = sphi 0, %s20
    %s32 = sphi 0, %s34
    %s35 = sphi 0, %s32
    %s36 = sphi 0, %s35
    %s52 = sphi 0, %s36
    %s56 = sphi 0, %s56
    %s58 = sphi 0, %s56
    %s59 = sphi 0, %s58
    %s73 = sphi 0, %s59
    %s81 = sphi 0, %s83
    %s84 = sphi 0, %s81
    %s85 = sphi 0, %s84
    %s101 = sphi 0, %s85
    %s109 = sphi 0, %s111
    %s112 = sphi 0, %s109
    %s113 = sphi 0, %s112
    %s129 = sphi 0, %s113
  $region4: #{resbn_forward.5} parent=0 // loop_header_branch
    %13 = sbr.rel (%p11) target = $region8
  $region5: #{resbn_forward.5} parent=0 // loop_body
    %s15 = ssub.s32 %s10, 1
    %s16 = ssub.s32 %s10, 2
    %s23 = sadd.s32 1, %s18
    %p24 = scmp.ge.s32.totalorder %s23, 1
    %s25 = scalar_select %p24, 0, %s23
    %s26 = sadd.s32 1, %s17
    %s27 = scalar_select %p24, %s26, %s17
    %p28 = scmp.ge.s32.totalorder %s27, 2
    %s29 = scalar_select %p28, 0, %s27
    %s30 = ssub.s32 %s17, %s29
    %p31 = scmp.eq.s32.totalorder %s30, 0
    %s33 = sadd.s32 %s32, 1
    %s34 = scalar_select %p31, %s32, %s33
    %p37 = pneg %p31
    %p38 = scmp.eq.s32.totalorder %s10, 1
    %p39 = por %p37, %p38
    %p40 = scmp.ne.s32.totalorder %s32, %s35
    %p41 = scmp.eq.s32.totalorder %s10, 0
    %p42 = por %p40, %p41
    %p43 = scmp.ne.s32.totalorder %s32, %s35
    %p44 = scmp.eq.s32.totalorder %s15, 1
    %p45 = por %p43, %p44
    %p46 = scmp.ne.s32.totalorder %s35, %s36
    %p47 = scmp.eq.s32.totalorder %s15, 0
    %p48 = por %p46, %p47
    %p49 = scmp.ne.s32.totalorder %s35, %s36
    %p50 = scmp.eq.s32.totalorder %s16, 1
    %p51 = por %p49, %p50
    %p53 = scmp.ne.s32.totalorder %s36, %s52
    %p54 = scmp.eq.s32.totalorder %s16, 0
    %p55 = por %p53, %p54
    %s57 = sadd.s32 %s56, 1
    %p60 = scmp.eq.s32.totalorder %s10, 1
    %p61 = scmp.ne.s32.totalorder %s56, %s58
    %p62 = scmp.eq.s32.totalorder %s10, 0
    %p63 = por %p61, %p62
    %p64 = scmp.ne.s32.totalorder %s56, %s58
    %p65 = scmp.eq.s32.totalorder %s15, 1
    %p66 = por %p64, %p65
    %p67 = scmp.ne.s32.totalorder %s58, %s59
    %p68 = scmp.eq.s32.totalorder %s15, 0
    %p69 = por %p67, %p68
    %p70 = scmp.ne.s32.totalorder %s58, %s59
    %p71 = scmp.eq.s32.totalorder %s16, 1
    %p72 = por %p70, %p71
    %p74 = scmp.ne.s32.totalorder %s59, %s73
    %p75 = scmp.eq.s32.totalorder %s16, 0
    %p76 = por %p74, %p75
    %s77 = sadd.s32 %s17, %s18
    %s78 = sadd.s32 %s29, %s25
    %s79 = ssub.s32 %s77, %s78
    %p80 = scmp.eq.s32.totalorder %s79, 0
    %s82 = sadd.s32 %s81, 1
    %s83 = scalar_select %p80, %s81, %s82
    %p86 = pneg %p80
    %p87 = scmp.eq.s32.totalorder %s10, 1
    %p88 = por %p86, %p87
    %p89 = scmp.ne.s32.totalorder %s81, %s84
    %p90 = scmp.eq.s32.totalorder %s10, 0
    %p91 = por %p89, %p90
    %p92 = scmp.ne.s32.totalorder %s81, %s84
    %p93 = scmp.eq.s32.totalorder %s15, 1
    %p94 = por %p92, %p93
    %p95 = scmp.ne.s32.totalorder %s84, %s85
    %p96 = scmp.eq.s32.totalorder %s15, 0
    %p97 = por %p95, %p96
    %p98 = scmp.ne.s32.totalorder %s84, %s85
    %p99 = scmp.eq.s32.totalorder %s16, 1
    %p100 = por %p98, %p99
    %p102 = scmp.ne.s32.totalorder %s85, %s101
    %p103 = scmp.eq.s32.totalorder %s16, 0
    %p104 = por %p102, %p103
    %s105 = sadd.s32 %s17, %s18
    %s106 = sadd.s32 %s29, %s25
    %s107 = ssub.s32 %s105, %s106
    %p108 = scmp.eq.s32.totalorder %s107, 0
    %s110 = sadd.s32 %s109, 1
    %s111 = scalar_select %p108, %s109, %s110
    %p114 = pneg %p108
    %p115 = scmp.eq.s32.totalorder %s10, 1
    %p116 = por %p114, %p115
    %p117 = scmp.ne.s32.totalorder %s109, %s112
    %p118 = scmp.eq.s32.totalorder %s10, 0
    %p119 = por %p117, %p118
    %p120 = scmp.ne.s32.totalorder %s109, %s112
    %p121 = scmp.eq.s32.totalorder %s15, 1
    %p122 = por %p120, %p121
    %p123 = scmp.ne.s32.totalorder %s112, %s113
    %p124 = scmp.eq.s32.totalorder %s15, 0
    %p125 = por %p123, %p124
    %p126 = scmp.ne.s32.totalorder %s112, %s113
    %p127 = scmp.eq.s32.totalorder %s16, 1
    %p128 = por %p126, %p127
    %p130 = scmp.ne.s32.totalorder %s113, %s129
    %p131 = scmp.eq.s32.totalorder %s16, 0
    %p132 = por %p130, %p131
    %p133 = scmp.le.s32.totalorder 1, %s10
    %p134 = scmp.lt.s32.totalorder %s10, 3
    %p135 = pnand %p133, %p134
    %p136 = pneg %p135
    // Predicated region
    $region9: #{resbn_forward.5} parent=5 // pred_check
      _
    $region10: #{resbn_forward.5} parent=5 // pred_check_branch
      %138 = sbr.rel (%p135) target = $region12
    $region11: #{resbn_forward.5} parent=5 // pred_region
      %s139 = ssub.s32 %s10, 1
      // Predicated region
      $region13: #{resbn_forward.5} parent=11 // pred_check
        %p140 = pneg %p69
      $region14: #{resbn_forward.5} parent=11 // pred_check_branch
        %142 = sbr.rel (%p140) target = $region16
      $region15: #{resbn_forward.5} parent=11 // pred_region
        _
      $region16: #{resbn_forward.5} parent=11 // pred_fallthru
        _
    $region12: #{resbn_forward.5} parent=5 // pred_fallthru
      _
    %p143 = scmp.lt.s32.totalorder %s10, 2
    // Predicated region
    $region17: #{resbn_forward.5} parent=5 // pred_check
      %p144 = pneg %p143
    $region18: #{resbn_forward.5} parent=5 // pred_check_branch
      %146 = sbr.rel (%p144) target = $region20
    $region19: #{resbn_forward.5} parent=5 // pred_region
      // Predicated region
      $region21: #{resbn_forward.5} parent=19 // pred_check
        %p147 = pneg %p42
      $region22: #{resbn_forward.5} parent=19 // pred_check_branch
        %149 = sbr.rel (%p147) target = $region24
      $region23: #{resbn_forward.5} parent=19 // pred_region
        %p150 = scmp.lt.s32.totalorder %s17, 1
        %s151 = scalar_select %p150, %s17, 1
        %s152 = smul.addr %s151, 54
        %s153 = smul.addr %s152, 4
        %s154 = scalar_lea.vmem %s0, %s153
      $region24: #{resbn_forward.5} parent=19 // pred_fallthru
        _
    $region20: #{resbn_forward.5} parent=5 // pred_fallthru
      _
    %p155 = scmp.le.s32.totalorder 1, %s10
    %p156 = scmp.lt.s32.totalorder %s10, 3
    %p157 = pnand %p155, %p156
    %p158 = pneg %p157
    // Predicated region
    $region25: #{resbn_forward.5} parent=5 // pred_check
      _
    $region26: #{resbn_forward.5} parent=5 // pred_check_branch
      %160 = sbr.rel (%p157) target = $region28
    $region27: #{resbn_forward.5} parent=5 // pred_region
      %s161 = ssub.s32 %s10, 1
      %p162 = scmp.lt.s32.totalorder %s19, 1
      %s163 = scalar_select %p162, %s19, 1
      %s164 = smul.addr %s163, 54
      %s165 = smul.addr %s164, 4
      %s166 = scalar_lea.vmem %s0, %s165
      %p167 = pneg %p48
      %p168 = pneg %p45
      %p169 = pneg %p69
      %p170 = pneg %p66
      %p171 = pneg %p97
      %p172 = pneg %p94
      %s173 = sadd.s32 %s19, %s20
      %s174 = smul.u32 32, %s173
      %p175 = scmp.lt.s32.totalorder %s174, 63
      %s176 = scalar_select %p175, %s174, 63
      %s177 = smul.addr %s176, 4
      %s178 = scalar_lea.vmem %s2, %s177
      %p179 = pneg %p125
      %p180 = pneg %p122
      %s181 = sadd.s32 %s19, %s20
      %p182 = scmp.lt.s32.totalorder %s181, 1
      %s183 = scalar_select %p182, %s181, 1
      %s184 = smul.addr %s183, 2
      %s185 = scalar_lea.vmem %s3, %s184
      %p186 = scmp.lt.s32.totalorder %s19, 1
      %s187 = scalar_select %p186, %s19, 1
      %s188 = smul.addr %s187, 54
      %s189 = smul.addr %s188, 4
      %s190 = scalar_lea.vmem %s0, %s189
      %s191 = sadd.s32 %s19, %s20
      %s192 = smul.u32 32, %s191
      %p193 = scmp.lt.s32.totalorder %s192, 63
      %s194 = scalar_select %p193, %s192, 63
      %s195 = smul.addr %s194, 4
      %s196 = scalar_lea.vmem %s2, %s195
      %s197 = sadd.s32 %s19, %s20
      %s198 = smul.u32 32, %s197
      %s199 = sadd.s32 %s19, %s20
      %p200 = scmp.lt.s32.totalorder %s199, 1
      %s201 = scalar_select %p200, %s199, 1
      %s202 = smul.addr %s201, 2
      %s203 = scalar_lea.vmem %s3, %s202
      %s204 = sadd.s32 %s19, %s20
      %s205 = smul.u32 %s20, 16
      %s206 = smul.u32 %s205, 3
      %s207 = smul.addr %s206, 4
      %s208 = scalar_lea.vmem %s190, %s207
      %v209 = vld [vmem:[%s208] sm:$0xf]
      %v210 = vld [vmem:[%s208 + $0x4] sm:$0xf]
      %v211 = vld [vmem:[%s208 + $0x8] sm:$0x1]
      %v212 = vld [vmem:[%s208 + $0xc] sm:$0xf]
      %v213 = vld [vmem:[%s208 + $0x10] sm:$0xf]
      %v214 = vld [vmem:[%s208 + $0x14] sm:$0x1]
      %v215 = vld [vmem:[%s208 + $0x18] sm:$0xf]
      %v216 = vld [vmem:[%s208 + $0x1c] sm:$0xf]
      %v217 = vld [vmem:[%s208 + $0x20] sm:$0x1]
      %v218 = vld [vmem:[%s208 + $0x24] sm:$0xf]
      %v219 = vld [vmem:[%s208 + $0x28] sm:$0xf]
      %v220 = vld [vmem:[%s208 + $0x2c] sm:$0x1]
      %v221 = vld [vmem:[%s208 + $0x30] sm:$0xf]
      %v222 = vld [vmem:[%s208 + $0x34] sm:$0xf]
      %v223 = vld [vmem:[%s208 + $0x38] sm:$0x1]
      %v224 = vld [vmem:[%s208 + $0x3c] sm:$0xf]
      %v225 = vld [vmem:[%s208 + $0x40] sm:$0xf]
      %v226 = vld [vmem:[%s208 + $0x44] sm:$0x1]
      %v227 = vld [vmem:[%s208 + $0x48] sm:$0xf]
      %v228 = vld [vmem:[%s208 + $0x4c] sm:$0xf]
      %v229 = vld [vmem:[%s208 + $0x50] sm:$0x1]
      %v230 = vld [vmem:[%s208 + $0x54] sm:$0xf]
      %v231 = vld [vmem:[%s208 + $0x58] sm:$0xf]
      %v232 = vld [vmem:[%s208 + $0x5c] sm:$0x1]
      %v233 = vld [vmem:[%s208 + $0x60] sm:$0xf]
      %v234 = vld [vmem:[%s208 + $0x64] sm:$0xf]
      %v235 = vld [vmem:[%s208 + $0x68] sm:$0x1]
      %v236 = vld [vmem:[%s208 + $0x6c] sm:$0xf]
      %v237 = vld [vmem:[%s208 + $0x70] sm:$0xf]
      %v238 = vld [vmem:[%s208 + $0x74] sm:$0x1]
      %v239 = vld [vmem:[%s208 + $0x78] sm:$0xf]
      %v240 = vld [vmem:[%s208 + $0x7c] sm:$0xf]
      %v241 = vld [vmem:[%s208 + $0x80] sm:$0x1]
      %v242 = vld [vmem:[%s208 + $0x84] sm:$0xf]
      %v243 = vld [vmem:[%s208 + $0x88] sm:$0xf]
      %v244 = vld [vmem:[%s208 + $0x8c] sm:$0x1]
      %v245 = vld [vmem:[%s208 + $0x90] sm:$0xf]
      %v246 = vld [vmem:[%s208 + $0x94] sm:$0xf]
      %v247 = vld [vmem:[%s208 + $0x98] sm:$0x1]
      %v248 = vld [vmem:[%s208 + $0x9c] sm:$0xf]
      %v249 = vld [vmem:[%s208 + $0xa0] sm:$0xf]
      %v250 = vld [vmem:[%s208 + $0xa4] sm:$0x1]
      %v251 = vld [vmem:[%s208 + $0xa8] sm:$0xf]
      %v252 = vld [vmem:[%s208 + $0xac] sm:$0xf]
      %v253 = vld [vmem:[%s208 + $0xb0] sm:$0x1]
      %v254 = vld [vmem:[%s208 + $0xb4] sm:$0xf]
      %v255 = vld [vmem:[%s208 + $0xb8] sm:$0xf]
      %v256 = vld [vmem:[%s208 + $0xbc] sm:$0x1]
      %vm257 = vsmask.f32 3328
      %vm258 = vsmask.f32 7440
      %vm259 = vmor %vm257, %vm258
      %v261 = vshrl.u32 %v209, 16
      %v263 = vrot.slane %v261, 4
      %v264 = vshll.u32 %v209, 16
      %v266 = vrot.slane %v264, 5
      %v267 = vor.u32 %v263, %v266
      %v268 = vrot.slane %v267, 4
      %v270 = vshll.u32 %v210, 16
      %v272 = vrot.slane %v270, 5
      %v273 = vsel %vm259, %v268, %v272
      %v274 = vshrl.u32 %v210, 16
      %v276 = vrot.slane %v274, 4
      %v277 = vor.u32 %v276, %v272
      %v278 = vrot.slane %v277, 4
      %v280 = vshll.u32 %v211, 16
      %v282 = vrot.slane %v280, 5
      %v283 = vsel %vm259, %v278, %v282
      %v285 = vshrl.u32 %v212, 16
      %v287 = vrot.slane %v285, 4
      %v288 = vshll.u32 %v212, 16
      %v290 = vrot.slane %v288, 5
      %v291 = vor.u32 %v287, %v290
      %v292 = vrot.slane %v291, 4
      %v294 = vshll.u32 %v213, 16
      %v296 = vrot.slane %v294, 5
      %v297 = vsel %vm259, %v292, %v296
      %v298 = vshrl.u32 %v213, 16
      %v300 = vrot.slane %v298, 4
      %v301 = vor.u32 %v300, %v296
      %v302 = vrot.slane %v301, 4
      %v304 = vshll.u32 %v214, 16
      %v306 = vrot.slane %v304, 5
      %v307 = vsel %vm259, %v302, %v306
      %v309 = vshrl.u32 %v215, 16
      %v311 = vrot.slane %v309, 4
      %v312 = vshll.u32 %v215, 16
      %v314 = vrot.slane %v312, 5
      %v315 = vor.u32 %v311, %v314
      %v316 = vrot.slane %v315, 4
      %v318 = vshll.u32 %v216, 16
      %v320 = vrot.slane %v318, 5
      %v321 = vsel %vm259, %v316, %v320
      %v322 = vshrl.u32 %v216, 16
      %v324 = vrot.slane %v322, 4
      %v325 = vor.u32 %v324, %v320
      %v326 = vrot.slane %v325, 4
      %v328 = vshll.u32 %v217, 16
      %v330 = vrot.slane %v328, 5
      %v331 = vsel %vm259, %v326, %v330
      %v333 = vshrl.u32 %v218, 16
      %v335 = vrot.slane %v333, 4
      %v336 = vshll.u32 %v218, 16
      %v338 = vrot.slane %v336, 5
      %v339 = vor.u32 %v335, %v338
      %v340 = vrot.slane %v339, 4
      %v342 = vshll.u32 %v219, 16
      %v344 = vrot.slane %v342, 5
      %v345 = vsel %vm259, %v340, %v344
      %v346 = vshrl.u32 %v219, 16
      %v348 = vrot.slane %v346, 4
      %v349 = vor.u32 %v348, %v344
      %v350 = vrot.slane %v349, 4
      %v352 = vshll.u32 %v220, 16
      %v354 = vrot.slane %v352, 5
      %v355 = vsel %vm259, %v350, %v354
      %v357 = vshrl.u32 %v221, 16
      %v359 = vrot.slane %v357, 4
      %v360 = vshll.u32 %v221, 16
      %v362 = vrot.slane %v360, 5
      %v363 = vor.u32 %v359, %v362
      %v364 = vrot.slane %v363, 4
      %v366 = vshll.u32 %v222, 16
      %v368 = vrot.slane %v366, 5
      %v369 = vsel %vm259, %v364, %v368
      %v370 = vshrl.u32 %v222, 16
      %v372 = vrot.slane %v370, 4
      %v373 = vor.u32 %v372, %v368
      %v374 = vrot.slane %v373, 4
      %v376 = vshll.u32 %v223, 16
      %v378 = vrot.slane %v376, 5
      %v379 = vsel %vm259, %v374, %v378
      %v381 = vshrl.u32 %v224, 16
      %v383 = vrot.slane %v381, 4
      %v384 = vshll.u32 %v224, 16
      %v386 = vrot.slane %v384, 5
      %v387 = vor.u32 %v383, %v386
      %v388 = vrot.slane %v387, 4
      %v390 = vshll.u32 %v225, 16
      %v392 = vrot.slane %v390, 5
      %v393 = vsel %vm259, %v388, %v392
      %v394 = vshrl.u32 %v225, 16
      %v396 = vrot.slane %v394, 4
      %v397 = vor.u32 %v396, %v392
      %v398 = vrot.slane %v397, 4
      %v400 = vshll.u32 %v226, 16
      %v402 = vrot.slane %v400, 5
      %v403 = vsel %vm259, %v398, %v402
      %v405 = vshrl.u32 %v227, 16
      %v407 = vrot.slane %v405, 4
      %v408 = vshll.u32 %v227, 16
      %v410 = vrot.slane %v408, 5
      %v411 = vor.u32 %v407, %v410
      %v412 = vrot.slane %v411, 4
      %v414 = vshll.u32 %v228, 16
      %v416 = vrot.slane %v414, 5
      %v417 = vsel %vm259, %v412, %v416
      %v418 = vshrl.u32 %v228, 16
      %v420 = vrot.slane %v418, 4
      %v421 = vor.u32 %v420, %v416
      %v422 = vrot.slane %v421, 4
      %v424 = vshll.u32 %v229, 16
      %v426 = vrot.slane %v424, 5
      %v427 = vsel %vm259, %v422, %v426
      %v429 = vshrl.u32 %v230, 16
      %v431 = vrot.slane %v429, 4
      %v432 = vshll.u32 %v230, 16
      %v434 = vrot.slane %v432, 5
      %v435 = vor.u32 %v431, %v434
      %v436 = vrot.slane %v435, 4
      %v438 = vshll.u32 %v231, 16
      %v440 = vrot.slane %v438, 5
      %v441 = vsel %vm259, %v436, %v440
      %v442 = vshrl.u32 %v231, 16
      %v444 = vrot.slane %v442, 4
      %v445 = vor.u32 %v444, %v440
      %v446 = vrot.slane %v445, 4
      %v448 = vshll.u32 %v232, 16
      %v450 = vrot.slane %v448, 5
      %v451 = vsel %vm259, %v446, %v450
      %v453 = vshrl.u32 %v233, 16
      %v455 = vrot.slane %v453, 4
      %v456 = vshll.u32 %v233, 16
      %v458 = vrot.slane %v456, 5
      %v459 = vor.u32 %v455, %v458
      %v460 = vrot.slane %v459, 4
      %v462 = vshll.u32 %v234, 16
      %v464 = vrot.slane %v462, 5
      %v465 = vsel %vm259, %v460, %v464
      %v466 = vshrl.u32 %v234, 16
      %v468 = vrot.slane %v466, 4
      %v469 = vor.u32 %v468, %v464
      %v470 = vrot.slane %v469, 4
      %v472 = vshll.u32 %v235, 16
      %v474 = vrot.slane %v472, 5
      %v475 = vsel %vm259, %v470, %v474
      %v477 = vshrl.u32 %v236, 16
      %v479 = vrot.slane %v477, 4
      %v480 = vshll.u32 %v236, 16
      %v482 = vrot.slane %v480, 5
      %v483 = vor.u32 %v479, %v482
      %v484 = vrot.slane %v483, 4
      %v486 = vshll.u32 %v237, 16
      %v488 = vrot.slane %v486, 5
      %v489 = vsel %vm259, %v484, %v488
      %v490 = vshrl.u32 %v237, 16
      %v492 = vrot.slane %v490, 4
      %v493 = vor.u32 %v492, %v488
      %v494 = vrot.slane %v493, 4
      %v496 = vshll.u32 %v238, 16
      %v498 = vrot.slane %v496, 5
      %v499 = vsel %vm259, %v494, %v498
      %v501 = vshrl.u32 %v239, 16
      %v503 = vrot.slane %v501, 4
      %v504 = vshll.u32 %v239, 16
      %v506 = vrot.slane %v504, 5
      %v507 = vor.u32 %v503, %v506
      %v508 = vrot.slane %v507, 4
      %v510 = vshll.u32 %v240, 16
      %v512 = vrot.slane %v510, 5
      %v513 = vsel %vm259, %v508, %v512
      %v514 = vshrl.u32 %v240, 16
      %v516 = vrot.slane %v514, 4
      %v517 = vor.u32 %v516, %v512
      %v518 = vrot.slane %v517, 4
      %v520 = vshll.u32 %v241, 16
      %v522 = vrot.slane %v520, 5
      %v523 = vsel %vm259, %v518, %v522
      %v525 = vshrl.u32 %v242, 16
      %v527 = vrot.slane %v525, 4
      %v528 = vshll.u32 %v242, 16
      %v530 = vrot.slane %v528, 5
      %v531 = vor.u32 %v527, %v530
      %v532 = vrot.slane %v531, 4
      %v534 = vshll.u32 %v243, 16
      %v536 = vrot.slane %v534, 5
      %v537 = vsel %vm259, %v532, %v536
      %v538 = vshrl.u32 %v243, 16
      %v540 = vrot.slane %v538, 4
      %v541 = vor.u32 %v540, %v536
      %v542 = vrot.slane %v541, 4
      %v544 = vshll.u32 %v244, 16
      %v546 = vrot.slane %v544, 5
      %v547 = vsel %vm259, %v542, %v546
      %v549 = vshrl.u32 %v245, 16
      %v551 = vrot.slane %v549, 4
      %v552 = vshll.u32 %v245, 16
      %v554 = vrot.slane %v552, 5
      %v555 = vor.u32 %v551, %v554
      %v556 = vrot.slane %v555, 4
      %v558 = vshll.u32 %v246, 16
      %v560 = vrot.slane %v558, 5
      %v561 = vsel %vm259, %v556, %v560
      %v562 = vshrl.u32 %v246, 16
      %v564 = vrot.slane %v562, 4
      %v565 = vor.u32 %v564, %v560
      %v566 = vrot.slane %v565, 4
      %v568 = vshll.u32 %v247, 16
      %v570 = vrot.slane %v568, 5
      %v571 = vsel %vm259, %v566, %v570
      %v573 = vshrl.u32 %v248, 16
      %v575 = vrot.slane %v573, 4
      %v576 = vshll.u32 %v248, 16
      %v578 = vrot.slane %v576, 5
      %v579 = vor.u32 %v575, %v578
      %v580 = vrot.slane %v579, 4
      %v582 = vshll.u32 %v249, 16
      %v584 = vrot.slane %v582, 5
      %v585 = vsel %vm259, %v580, %v584
      %v586 = vshrl.u32 %v249, 16
      %v588 = vrot.slane %v586, 4
      %v589 = vor.u32 %v588, %v584
      %v590 = vrot.slane %v589, 4
      %v592 = vshll.u32 %v250, 16
      %v594 = vrot.slane %v592, 5
      %v595 = vsel %vm259, %v590, %v594
      %v597 = vshrl.u32 %v251, 16
      %v599 = vrot.slane %v597, 4
      %v600 = vshll.u32 %v251, 16
      %v602 = vrot.slane %v600, 5
      %v603 = vor.u32 %v599, %v602
      %v604 = vrot.slane %v603, 4
      %v606 = vshll.u32 %v252, 16
      %v608 = vrot.slane %v606, 5
      %v609 = vsel %vm259, %v604, %v608
      %v610 = vshrl.u32 %v252, 16
      %v612 = vrot.slane %v610, 4
      %v613 = vor.u32 %v612, %v608
      %v614 = vrot.slane %v613, 4
      %v616 = vshll.u32 %v253, 16
      %v618 = vrot.slane %v616, 5
      %v619 = vsel %vm259, %v614, %v618
      %v621 = vshrl.u32 %v254, 16
      %v623 = vrot.slane %v621, 4
      %v624 = vshll.u32 %v254, 16
      %v626 = vrot.slane %v624, 5
      %v627 = vor.u32 %v623, %v626
      %v628 = vrot.slane %v627, 4
      %v630 = vshll.u32 %v255, 16
      %v632 = vrot.slane %v630, 5
      %v633 = vsel %vm259, %v628, %v632
      %v634 = vshrl.u32 %v255, 16
      %v636 = vrot.slane %v634, 4
      %v637 = vor.u32 %v636, %v632
      %v638 = vrot.slane %v637, 4
      %v640 = vshll.u32 %v256, 16
      %v642 = vrot.slane %v640, 5
      %v643 = vsel %vm259, %v638, %v642
      %vm692 = vcmask 1042432
      %vm693 = vcmask 1046532
      %vm694 = vmor %vm692, %vm693
      %v695 = vrot.slane %v209, 5
      %v696 = vrot.slane %v695, 4
      %v697 = vrot.slane %v210, 5
      %v698 = vsel %vm694, %v696, %v697
      %v699 = vrot.slane %v697, 4
      %v700 = vrot.slane %v211, 5
      %v701 = vsel %vm694, %v699, %v700
      %v702 = vrot.slane %v212, 5
      %v703 = vrot.slane %v702, 4
      %v704 = vrot.slane %v213, 5
      %v705 = vsel %vm694, %v703, %v704
      %v706 = vrot.slane %v704, 4
      %v707 = vrot.slane %v214, 5
      %v708 = vsel %vm694, %v706, %v707
      %v709 = vrot.slane %v215, 5
      %v710 = vrot.slane %v709, 4
      %v711 = vrot.slane %v216, 5
      %v712 = vsel %vm694, %v710, %v711
      %v713 = vrot.slane %v711, 4
      %v714 = vrot.slane %v217, 5
      %v715 = vsel %vm694, %v713, %v714
      %v716 = vrot.slane %v218, 5
      %v717 = vrot.slane %v716, 4
      %v718 = vrot.slane %v219, 5
      %v719 = vsel %vm694, %v717, %v718
      %v720 = vrot.slane %v718, 4
      %v721 = vrot.slane %v220, 5
      %v722 = vsel %vm694, %v720, %v721
      %v723 = vrot.slane %v221, 5
      %v724 = vrot.slane %v723, 4
      %v725 = vrot.slane %v222, 5
      %v726 = vsel %vm694, %v724, %v725
      %v727 = vrot.slane %v725, 4
      %v728 = vrot.slane %v223, 5
      %v729 = vsel %vm694, %v727, %v728
      %v730 = vrot.slane %v224, 5
      %v731 = vrot.slane %v730, 4
      %v732 = vrot.slane %v225, 5
      %v733 = vsel %vm694, %v731, %v732
      %v734 = vrot.slane %v732, 4
      %v735 = vrot.slane %v226, 5
      %v736 = vsel %vm694, %v734, %v735
      %v737 = vrot.slane %v227, 5
      %v738 = vrot.slane %v737, 4
      %v739 = vrot.slane %v228, 5
      %v740 = vsel %vm694, %v738, %v739
      %v741 = vrot.slane %v739, 4
      %v742 = vrot.slane %v229, 5
      %v743 = vsel %vm694, %v741, %v742
      %v744 = vrot.slane %v230, 5
      %v745 = vrot.slane %v744, 4
      %v746 = vrot.slane %v231, 5
      %v747 = vsel %vm694, %v745, %v746
      %v748 = vrot.slane %v746, 4
      %v749 = vrot.slane %v232, 5
      %v750 = vsel %vm694, %v748, %v749
      %v751 = vrot.slane %v233, 5
      %v752 = vrot.slane %v751, 4
      %v753 = vrot.slane %v234, 5
      %v754 = vsel %vm694, %v752, %v753
      %v755 = vrot.slane %v753, 4
      %v756 = vrot.slane %v235, 5
      %v757 = vsel %vm694, %v755, %v756
      %v758 = vrot.slane %v236, 5
      %v759 = vrot.slane %v758, 4
      %v760 = vrot.slane %v237, 5
      %v761 = vsel %vm694, %v759, %v760
      %v762 = vrot.slane %v760, 4
      %v763 = vrot.slane %v238, 5
      %v764 = vsel %vm694, %v762, %v763
      %v765 = vrot.slane %v239, 5
      %v766 = vrot.slane %v765, 4
      %v767 = vrot.slane %v240, 5
      %v768 = vsel %vm694, %v766, %v767
      %v769 = vrot.slane %v767, 4
      %v770 = vrot.slane %v241, 5
      %v771 = vsel %vm694, %v769, %v770
      %v772 = vrot.slane %v242, 5
      %v773 = vrot.slane %v772, 4
      %v774 = vrot.slane %v243, 5
      %v775 = vsel %vm694, %v773, %v774
      %v776 = vrot.slane %v774, 4
      %v777 = vrot.slane %v244, 5
      %v778 = vsel %vm694, %v776, %v777
      %v779 = vrot.slane %v245, 5
      %v780 = vrot.slane %v779, 4
      %v781 = vrot.slane %v246, 5
      %v782 = vsel %vm694, %v780, %v781
      %v783 = vrot.slane %v781, 4
      %v784 = vrot.slane %v247, 5
      %v785 = vsel %vm694, %v783, %v784
      %v786 = vrot.slane %v248, 5
      %v787 = vrot.slane %v786, 4
      %v788 = vrot.slane %v249, 5
      %v789 = vsel %vm694, %v787, %v788
      %v790 = vrot.slane %v788, 4
      %v791 = vrot.slane %v250, 5
      %v792 = vsel %vm694, %v790, %v791
      %v793 = vrot.slane %v251, 5
      %v794 = vrot.slane %v793, 4
      %v795 = vrot.slane %v252, 5
      %v796 = vsel %vm694, %v794, %v795
      %v797 = vrot.slane %v795, 4
      %v798 = vrot.slane %v253, 5
      %v799 = vsel %vm694, %v797, %v798
      %v800 = vrot.slane %v254, 5
      %v801 = vrot.slane %v800, 4
      %v802 = vrot.slane %v255, 5
      %v803 = vsel %vm694, %v801, %v802
      %v804 = vrot.slane %v802, 4
      %v805 = vrot.slane %v256, 5
      %v806 = vsel %vm694, %v804, %v805
      %v807 = vunpack.c.l.b16 %v209
      %v808 = vunpack.c.l.b16 %v210
      %v809 = vunpack.c.l.b16 %v212
      %v810 = vunpack.c.l.b16 %v213
      %v811 = vunpack.c.l.b16 %v215
      %v812 = vunpack.c.l.b16 %v216
      %v813 = vunpack.c.l.b16 %v218
      %v814 = vunpack.c.l.b16 %v219
      %v815 = vunpack.c.l.b16 %v221
      %v816 = vunpack.c.l.b16 %v222
      %v817 = vunpack.c.l.b16 %v224
      %v818 = vunpack.c.l.b16 %v225
      %v819 = vunpack.c.l.b16 %v227
      %v820 = vunpack.c.l.b16 %v228
      %v821 = vunpack.c.l.b16 %v230
      %v822 = vunpack.c.l.b16 %v231
      %v823 = vunpack.c.l.b16 %v233
      %v824 = vunpack.c.l.b16 %v234
      %v825 = vunpack.c.l.b16 %v236
      %v826 = vunpack.c.l.b16 %v237
      %v827 = vunpack.c.l.b16 %v239
      %v828 = vunpack.c.l.b16 %v240
      %v829 = vunpack.c.l.b16 %v242
      %v830 = vunpack.c.l.b16 %v243
      %v831 = vunpack.c.l.b16 %v245
      %v832 = vunpack.c.l.b16 %v246
      %v833 = vunpack.c.l.b16 %v248
      %v834 = vunpack.c.l.b16 %v249
      %v835 = vunpack.c.l.b16 %v251
      %v836 = vunpack.c.l.b16 %v252
      %v837 = vunpack.c.l.b16 %v254
      %v838 = vunpack.c.l.b16 %v255
      %v839 = vpack.c.b16 %v808, %v807
      %v840 = vpack.c.b16 %v810, %v809
      %v841 = vpack.c.b16 %v812, %v811
      %v842 = vpack.c.b16 %v814, %v813
      %v843 = vpack.c.b16 %v816, %v815
      %v844 = vpack.c.b16 %v818, %v817
      %v845 = vpack.c.b16 %v820, %v819
      %v846 = vpack.c.b16 %v822, %v821
      %v847 = vpack.c.b16 %v824, %v823
      %v848 = vpack.c.b16 %v826, %v825
      %v849 = vpack.c.b16 %v828, %v827
      %v850 = vpack.c.b16 %v830, %v829
      %v851 = vpack.c.b16 %v832, %v831
      %v852 = vpack.c.b16 %v834, %v833
      %v853 = vpack.c.b16 %v836, %v835
      %v854 = vpack.c.b16 %v838, %v837
      %v871 = vunpack.c.l.b16 %v273
      %v872 = vunpack.c.l.b16 %v283
      %v873 = vunpack.c.l.b16 %v297
      %v874 = vunpack.c.l.b16 %v307
      %v875 = vunpack.c.l.b16 %v321
      %v876 = vunpack.c.l.b16 %v331
      %v877 = vunpack.c.l.b16 %v345
      %v878 = vunpack.c.l.b16 %v355
      %v879 = vunpack.c.l.b16 %v369
      %v880 = vunpack.c.l.b16 %v379
      %v881 = vunpack.c.l.b16 %v393
      %v882 = vunpack.c.l.b16 %v403
      %v883 = vunpack.c.l.b16 %v417
      %v884 = vunpack.c.l.b16 %v427
      %v885 = vunpack.c.l.b16 %v441
      %v886 = vunpack.c.l.b16 %v451
      %v887 = vunpack.c.l.b16 %v465
      %v888 = vunpack.c.l.b16 %v475
      %v889 = vunpack.c.l.b16 %v489
      %v890 = vunpack.c.l.b16 %v499
      %v891 = vunpack.c.l.b16 %v513
      %v892 = vunpack.c.l.b16 %v523
      %v893 = vunpack.c.l.b16 %v537
      %v894 = vunpack.c.l.b16 %v547
      %v895 = vunpack.c.l.b16 %v561
      %v896 = vunpack.c.l.b16 %v571
      %v897 = vunpack.c.l.b16 %v585
      %v898 = vunpack.c.l.b16 %v595
      %v899 = vunpack.c.l.b16 %v609
      %v900 = vunpack.c.l.b16 %v619
      %v901 = vunpack.c.l.b16 %v633
      %v902 = vunpack.c.l.b16 %v643
      %v903 = vpack.c.b16 %v872, %v871
      %v904 = vpack.c.b16 %v874, %v873
      %v905 = vpack.c.b16 %v876, %v875
      %v906 = vpack.c.b16 %v878, %v877
      %v907 = vpack.c.b16 %v880, %v879
      %v908 = vpack.c.b16 %v882, %v881
      %v909 = vpack.c.b16 %v884, %v883
      %v910 = vpack.c.b16 %v886, %v885
      %v911 = vpack.c.b16 %v888, %v887
      %v912 = vpack.c.b16 %v890, %v889
      %v913 = vpack.c.b16 %v892, %v891
      %v914 = vpack.c.b16 %v894, %v893
      %v915 = vpack.c.b16 %v896, %v895
      %v916 = vpack.c.b16 %v898, %v897
      %v917 = vpack.c.b16 %v900, %v899
      %v918 = vpack.c.b16 %v902, %v901
      %v935 = vunpack.c.l.b16 %v698
      %v936 = vunpack.c.l.b16 %v701
      %v937 = vunpack.c.l.b16 %v705
      %v938 = vunpack.c.l.b16 %v708
      %v939 = vunpack.c.l.b16 %v712
      %v940 = vunpack.c.l.b16 %v715
      %v941 = vunpack.c.l.b16 %v719
      %v942 = vunpack.c.l.b16 %v722
      %v943 = vunpack.c.l.b16 %v726
      %v944 = vunpack.c.l.b16 %v729
      %v945 = vunpack.c.l.b16 %v733
      %v946 = vunpack.c.l.b16 %v736
      %v947 = vunpack.c.l.b16 %v740
      %v948 = vunpack.c.l.b16 %v743
      %v949 = vunpack.c.l.b16 %v747
      %v950 = vunpack.c.l.b16 %v750
      %v951 = vunpack.c.l.b16 %v754
      %v952 = vunpack.c.l.b16 %v757
      %v953 = vunpack.c.l.b16 %v761
      %v954 = vunpack.c.l.b16 %v764
      %v955 = vunpack.c.l.b16 %v768
      %v956 = vunpack.c.l.b16 %v771
      %v957 = vunpack.c.l.b16 %v775
      %v958 = vunpack.c.l.b16 %v778
      %v959 = vunpack.c.l.b16 %v782
      %v960 = vunpack.c.l.b16 %v785
      %v961 = vunpack.c.l.b16 %v789
      %v962 = vunpack.c.l.b16 %v792
      %v963 = vunpack.c.l.b16 %v796
      %v964 = vunpack.c.l.b16 %v799
      %v965 = vunpack.c.l.b16 %v803
      %v966 = vunpack.c.l.b16 %v806
      %v967 = vpack.c.b16 %v936, %v935
      %v968 = vpack.c.b16 %v938, %v937
      %v969 = vpack.c.b16 %v940, %v939
      %v970 = vpack.c.b16 %v942, %v941
      %v971 = vpack.c.b16 %v944, %v943
      %v972 = vpack.c.b16 %v946, %v945
      %v973 = vpack.c.b16 %v948, %v947
      %v974 = vpack.c.b16 %v950, %v949
      %v975 = vpack.c.b16 %v952, %v951
      %v976 = vpack.c.b16 %v954, %v953
      %v977 = vpack.c.b16 %v956, %v955
      %v978 = vpack.c.b16 %v958, %v957
      %v979 = vpack.c.b16 %v960, %v959
      %v980 = vpack.c.b16 %v962, %v961
      %v981 = vpack.c.b16 %v964, %v963
      %v982 = vpack.c.b16 %v966, %v965
      %v999 = vld [vmem:[%s1] sm:$0xf]
      %v1000 = vld [vmem:[%s1 + $0x4] sm:$0xf]
      %v1001 = vld [vmem:[%s1 + $0x8] sm:$0xf]
      %v1002 = vld [vmem:[%s1 + $0xc] sm:$0xf]
      %v1003 = vld [vmem:[%s1 + $0x10] sm:$0xf]
      %v1004 = vld [vmem:[%s1 + $0x14] sm:$0xf]
      %v1005 = vld [vmem:[%s1 + $0x18] sm:$0xf]
      %v1006 = vld [vmem:[%s1 + $0x1c] sm:$0xf]
      %v1007 = vld [vmem:[%s1 + $0x20] sm:$0xf]
      %v1008 = vld [vmem:[%s1 + $0x24] sm:$0xf]
      %v1009 = vld [vmem:[%s1 + $0x28] sm:$0xf]
      %v1010 = vld [vmem:[%s1 + $0x2c] sm:$0xf]
      %v1011 = vld [vmem:[%s1 + $0x30] sm:$0xf]
      %v1012 = vld [vmem:[%s1 + $0x34] sm:$0xf]
      %v1013 = vld [vmem:[%s1 + $0x38] sm:$0xf]
      %v1014 = vld [vmem:[%s1 + $0x3c] sm:$0xf]
      %v1015 = vld [vmem:[%s1 + $0x40] sm:$0xf]
      %v1016 = vld [vmem:[%s1 + $0x44] sm:$0xf]
      %v1017 = vld [vmem:[%s1 + $0x48] sm:$0xf]
      %v1018 = vld [vmem:[%s1 + $0x4c] sm:$0xf]
      %v1019 = vld [vmem:[%s1 + $0x50] sm:$0xf]
      %v1020 = vld [vmem:[%s1 + $0x54] sm:$0xf]
      %v1021 = vld [vmem:[%s1 + $0x58] sm:$0xf]
      %v1022 = vld [vmem:[%s1 + $0x5c] sm:$0xf]
      %v1023 = vld [vmem:[%s1 + $0x60] sm:$0xf]
      %v1024 = vld [vmem:[%s1 + $0x64] sm:$0xf]
      %v1025 = vld [vmem:[%s1 + $0x68] sm:$0xf]
      %v1026 = vld [vmem:[%s1 + $0x6c] sm:$0xf]
      %v1027 = vld [vmem:[%s1 + $0x70] sm:$0xf]
      %v1028 = vld [vmem:[%s1 + $0x74] sm:$0xf]
      %v1029 = vld [vmem:[%s1 + $0x78] sm:$0xf]
      %v1030 = vld [vmem:[%s1 + $0x7c] sm:$0xf]
      %v1031 = vld [vmem:[%s1 + $0x80] sm:$0xf]
      %v1032 = vld [vmem:[%s1 + $0x84] sm:$0xf]
      %v1033 = vld [vmem:[%s1 + $0x88] sm:$0xf]
      %v1034 = vld [vmem:[%s1 + $0x8c] sm:$0xf]
      %v1035 = vld [vmem:[%s1 + $0x90] sm:$0xf]
      %v1036 = vld [vmem:[%s1 + $0x94] sm:$0xf]
      %v1037 = vld [vmem:[%s1 + $0x98] sm:$0xf]
      %v1038 = vld [vmem:[%s1 + $0x9c] sm:$0xf]
      %v1039 = vld [vmem:[%s1 + $0xa0] sm:$0xf]
      %v1040 = vld [vmem:[%s1 + $0xa4] sm:$0xf]
      %v1041 = vld [vmem:[%s1 + $0xa8] sm:$0xf]
      %v1042 = vld [vmem:[%s1 + $0xac] sm:$0xf]
      %v1043 = vld [vmem:[%s1 + $0xb0] sm:$0xf]
      %v1044 = vld [vmem:[%s1 + $0xb4] sm:$0xf]
      %v1045 = vld [vmem:[%s1 + $0xb8] sm:$0xf]
      %v1046 = vld [vmem:[%s1 + $0xbc] sm:$0xf]
      %v1095 = vunpack.c.l.b16 %v999
      %v1096 = vunpack.c.l.b16 %v1000
      %v1097 = vunpack.c.l.b16 %v1001
      %v1098 = vunpack.c.l.b16 %v1002
      %v1099 = vunpack.c.l.b16 %v1003
      %v1100 = vunpack.c.l.b16 %v1004
      %v1101 = vunpack.c.l.b16 %v1005
      %v1102 = vunpack.c.l.b16 %v1006
      %v1103 = vunpack.c.l.b16 %v1007
      %v1104 = vunpack.c.l.b16 %v1008
      %v1105 = vunpack.c.l.b16 %v1009
      %v1106 = vunpack.c.l.b16 %v1010
      %v1107 = vunpack.c.l.b16 %v1011
      %v1108 = vunpack.c.l.b16 %v1012
      %v1109 = vunpack.c.l.b16 %v1013
      %v1110 = vunpack.c.l.b16 %v1014
      %v1111 = vunpack.c.l.b16 %v1015
      %v1112 = vunpack.c.l.b16 %v1016
      %v1113 = vunpack.c.l.b16 %v1017
      %v1114 = vunpack.c.l.b16 %v1018
      %v1115 = vunpack.c.l.b16 %v1019
      %v1116 = vunpack.c.l.b16 %v1020
      %v1117 = vunpack.c.l.b16 %v1021
      %v1118 = vunpack.c.l.b16 %v1022
      %v1119 = vunpack.c.l.b16 %v1023
      %v1120 = vunpack.c.l.b16 %v1024
      %v1121 = vunpack.c.l.b16 %v1025
      %v1122 = vunpack.c.l.b16 %v1026
      %v1123 = vunpack.c.l.b16 %v1027
      %v1124 = vunpack.c.l.b16 %v1028
      %v1125 = vunpack.c.l.b16 %v1029
      %v1126 = vunpack.c.l.b16 %v1030
      %v1127 = vunpack.c.l.b16 %v1031
      %v1128 = vunpack.c.l.b16 %v1032
      %v1129 = vunpack.c.l.b16 %v1033
      %v1130 = vunpack.c.l.b16 %v1034
      %v1131 = vunpack.c.l.b16 %v1035
      %v1132 = vunpack.c.l.b16 %v1036
      %v1133 = vunpack.c.l.b16 %v1037
      %v1134 = vunpack.c.l.b16 %v1038
      %v1135 = vunpack.c.l.b16 %v1039
      %v1136 = vunpack.c.l.b16 %v1040
      %v1137 = vunpack.c.l.b16 %v1041
      %v1138 = vunpack.c.l.b16 %v1042
      %v1139 = vunpack.c.l.b16 %v1043
      %v1140 = vunpack.c.l.b16 %v1044
      %v1141 = vunpack.c.l.b16 %v1045
      %v1142 = vunpack.c.l.b16 %v1046
      %v1143 = vpack.c.b16 %v1096, %v1095
      %v1144 = vpack.c.b16 %v1098, %v1097
      %v1145 = vpack.c.b16 %v1100, %v1099
      %v1146 = vpack.c.b16 %v1102, %v1101
      %v1147 = vpack.c.b16 %v1104, %v1103
      %v1148 = vpack.c.b16 %v1106, %v1105
      %v1149 = vpack.c.b16 %v1108, %v1107
      %v1150 = vpack.c.b16 %v1110, %v1109
      %v1151 = vpack.c.b16 %v1112, %v1111
      %v1152 = vpack.c.b16 %v1114, %v1113
      %v1153 = vpack.c.b16 %v1116, %v1115
      %v1154 = vpack.c.b16 %v1118, %v1117
      %v1155 = vpack.c.b16 %v1120, %v1119
      %v1156 = vpack.c.b16 %v1122, %v1121
      %v1157 = vpack.c.b16 %v1124, %v1123
      %v1158 = vpack.c.b16 %v1126, %v1125
      %v1159 = vpack.c.b16 %v1128, %v1127
      %v1160 = vpack.c.b16 %v1130, %v1129
      %v1161 = vpack.c.b16 %v1132, %v1131
      %v1162 = vpack.c.b16 %v1134, %v1133
      %v1163 = vpack.c.b16 %v1136, %v1135
      %v1164 = vpack.c.b16 %v1138, %v1137
      %v1165 = vpack.c.b16 %v1140, %v1139
      %v1166 = vpack.c.b16 %v1142, %v1141
      %1191 = vmatpush.bf16.msra.mxu0 %v1150
      %1192 = vmatpush.bf16.msra.mxu0 %v1149
      %1193 = vmatpush.bf16.msra.mxu0 %v1148
      %1194 = vmatpush.bf16.msra.mxu0 %v1147
      %1195 = vmatpush.bf16.msra.mxu0 %v1146
      %1196 = vmatpush.bf16.msra.mxu0 %v1145
      %1197 = vmatpush.bf16.msra.mxu0 %v1144
      %1198 = vmatpush.bf16.msra.mxu0 %v1143
      %1199 = vmatmul.bf16.gmra.mxu0 %v839
      %v1200 = vpop.f32.mrf.mxu0
      %v1201 = vadd.f32 0.0, %v1200
      %v1202 = vpop.f32.mrf.mxu0
      %v1203 = vadd.f32 0.0, %v1202
      %1204 = vmatmul.bf16.gmra.mxu0 %v840
      %v1205 = vpop.f32.mrf.mxu0
      %v1206 = vadd.f32 0.0, %v1205
      %v1207 = vpop.f32.mrf.mxu0
      %v1208 = vadd.f32 0.0, %v1207
      %1209 = vmatmul.bf16.gmra.mxu0 %v841
      %v1210 = vpop.f32.mrf.mxu0
      %v1211 = vadd.f32 0.0, %v1210
      %v1212 = vpop.f32.mrf.mxu0
      %v1213 = vadd.f32 0.0, %v1212
      %1214 = vmatmul.bf16.gmra.mxu0 %v842
      %v1215 = vpop.f32.mrf.mxu0
      %v1216 = vadd.f32 0.0, %v1215
      %v1217 = vpop.f32.mrf.mxu0
      %v1218 = vadd.f32 0.0, %v1217
      %1219 = vmatmul.bf16.gmra.mxu0 %v843
      %v1220 = vpop.f32.mrf.mxu0
      %v1221 = vadd.f32 0.0, %v1220
      %v1222 = vpop.f32.mrf.mxu0
      %v1223 = vadd.f32 0.0, %v1222
      %1224 = vmatmul.bf16.gmra.mxu0 %v844
      %v1225 = vpop.f32.mrf.mxu0
      %v1226 = vadd.f32 0.0, %v1225
      %v1227 = vpop.f32.mrf.mxu0
      %v1228 = vadd.f32 0.0, %v1227
      %1229 = vmatmul.bf16.gmra.mxu0 %v845
      %v1230 = vpop.f32.mrf.mxu0
      %v1231 = vadd.f32 0.0, %v1230
      %v1232 = vpop.f32.mrf.mxu0
      %v1233 = vadd.f32 0.0, %v1232
      %1234 = vmatmul.bf16.gmra.mxu0 %v846
      %v1235 = vpop.f32.mrf.mxu0
      %v1236 = vadd.f32 0.0, %v1235
      %v1237 = vpop.f32.mrf.mxu0
      %v1238 = vadd.f32 0.0, %v1237
      %1239 = vmatmul.bf16.gmra.mxu0 %v847
      %v1240 = vpop.f32.mrf.mxu0
      %v1241 = vadd.f32 0.0, %v1240
      %v1242 = vpop.f32.mrf.mxu0
      %v1243 = vadd.f32 0.0, %v1242
      %1244 = vmatmul.bf16.gmra.mxu0 %v848
      %v1245 = vpop.f32.mrf.mxu0
      %v1246 = vadd.f32 0.0, %v1245
      %v1247 = vpop.f32.mrf.mxu0
      %v1248 = vadd.f32 0.0, %v1247
      %1249 = vmatmul.bf16.gmra.mxu0 %v849
      %v1250 = vpop.f32.mrf.mxu0
      %v1251 = vadd.f32 0.0, %v1250
      %v1252 = vpop.f32.mrf.mxu0
      %v1253 = vadd.f32 0.0, %v1252
      %1254 = vmatmul.bf16.gmra.mxu0 %v850
      %v1255 = vpop.f32.mrf.mxu0
      %v1256 = vadd.f32 0.0, %v1255
      %v1257 = vpop.f32.mrf.mxu0
      %v1258 = vadd.f32 0.0, %v1257
      %1259 = vmatmul.bf16.gmra.mxu0 %v851
      %v1260 = vpop.f32.mrf.mxu0
      %v1261 = vadd.f32 0.0, %v1260
      %v1262 = vpop.f32.mrf.mxu0
      %v1263 = vadd.f32 0.0, %v1262
      %1264 = vmatmul.bf16.gmra.mxu0 %v852
      %v1265 = vpop.f32.mrf.mxu0
      %v1266 = vadd.f32 0.0, %v1265
      %v1267 = vpop.f32.mrf.mxu0
      %v1268 = vadd.f32 0.0, %v1267
      %1269 = vmatmul.bf16.gmra.mxu0 %v853
      %v1270 = vpop.f32.mrf.mxu0
      %v1271 = vadd.f32 0.0, %v1270
      %v1272 = vpop.f32.mrf.mxu0
      %v1273 = vadd.f32 0.0, %v1272
      %1274 = vmatmul.bf16.gmra.mxu0 %v854
      %v1275 = vpop.f32.mrf.mxu0
      %v1276 = vadd.f32 0.0, %v1275
      %v1277 = vpop.f32.mrf.mxu0
      %v1278 = vadd.f32 0.0, %v1277
      %1279 = vdwg.mxu0
      %1280 = vmatpush.bf16.msra.mxu0 %v1158
      %1281 = vmatpush.bf16.msra.mxu0 %v1157
      %1282 = vmatpush.bf16.msra.mxu0 %v1156
      %1283 = vmatpush.bf16.msra.mxu0 %v1155
      %1284 = vmatpush.bf16.msra.mxu0 %v1154
      %1285 = vmatpush.bf16.msra.mxu0 %v1153
      %1286 = vmatpush.bf16.msra.mxu0 %v1152
      %1287 = vmatpush.bf16.msra.mxu0 %v1151
      %1288 = vmatmul.bf16.gmra.mxu0 %v903
      %v1289 = vpop.f32.mrf.mxu0
      %v1290 = vadd.f32 %v1201, %v1289
      %v1291 = vpop.f32.mrf.mxu0
      %v1292 = vadd.f32 %v1203, %v1291
      %1293 = vmatmul.bf16.gmra.mxu0 %v904
      %v1294 = vpop.f32.mrf.mxu0
      %v1295 = vadd.f32 %v1206, %v1294
      %v1296 = vpop.f32.mrf.mxu0
      %v1297 = vadd.f32 %v1208, %v1296
      %1298 = vmatmul.bf16.gmra.mxu0 %v905
      %v1299 = vpop.f32.mrf.mxu0
      %v1300 = vadd.f32 %v1211, %v1299
      %v1301 = vpop.f32.mrf.mxu0
      %v1302 = vadd.f32 %v1213, %v1301
      %1303 = vmatmul.bf16.gmra.mxu0 %v906
      %v1304 = vpop.f32.mrf.mxu0
      %v1305 = vadd.f32 %v1216, %v1304
      %v1306 = vpop.f32.mrf.mxu0
      %v1307 = vadd.f32 %v1218, %v1306
      %1308 = vmatmul.bf16.gmra.mxu0 %v907
      %v1309 = vpop.f32.mrf.mxu0
      %v1310 = vadd.f32 %v1221, %v1309
      %v1311 = vpop.f32.mrf.mxu0
      %v1312 = vadd.f32 %v1223, %v1311
      %1313 = vmatmul.bf16.gmra.mxu0 %v908
      %v1314 = vpop.f32.mrf.mxu0
      %v1315 = vadd.f32 %v1226, %v1314
      %v1316 = vpop.f32.mrf.mxu0
      %v1317 = vadd.f32 %v1228, %v1316
      %1318 = vmatmul.bf16.gmra.mxu0 %v909
      %v1319 = vpop.f32.mrf.mxu0
      %v1320 = vadd.f32 %v1231, %v1319
      %v1321 = vpop.f32.mrf.mxu0
      %v1322 = vadd.f32 %v1233, %v1321
      %1323 = vmatmul.bf16.gmra.mxu0 %v910
      %v1324 = vpop.f32.mrf.mxu0
      %v1325 = vadd.f32 %v1236, %v1324
      %v1326 = vpop.f32.mrf.mxu0
      %v1327 = vadd.f32 %v1238, %v1326
      %1328 = vmatmul.bf16.gmra.mxu0 %v911
      %v1329 = vpop.f32.mrf.mxu0
      %v1330 = vadd.f32 %v1241, %v1329
      %v1331 = vpop.f32.mrf.mxu0
      %v1332 = vadd.f32 %v1243, %v1331
      %1333 = vmatmul.bf16.gmra.mxu0 %v912
      %v1334 = vpop.f32.mrf.mxu0
      %v1335 = vadd.f32 %v1246, %v1334
      %v1336 = vpop.f32.mrf.mxu0
      %v1337 = vadd.f32 %v1248, %v1336
      %1338 = vmatmul.bf16.gmra.mxu0 %v913
      %v1339 = vpop.f32.mrf.mxu0
      %v1340 = vadd.f32 %v1251, %v1339
      %v1341 = vpop.f32.mrf.mxu0
      %v1342 = vadd.f32 %v1253, %v1341
      %1343 = vmatmul.bf16.gmra.mxu0 %v914
      %v1344 = vpop.f32.mrf.mxu0
      %v1345 = vadd.f32 %v1256, %v1344
      %v1346 = vpop.f32.mrf.mxu0
      %v1347 = vadd.f32 %v1258, %v1346
      %1348 = vmatmul.bf16.gmra.mxu0 %v915
      %v1349 = vpop.f32.mrf.mxu0
      %v1350 = vadd.f32 %v1261, %v1349
      %v1351 = vpop.f32.mrf.mxu0
      %v1352 = vadd.f32 %v1263, %v1351
      %1353 = vmatmul.bf16.gmra.mxu0 %v916
      %v1354 = vpop.f32.mrf.mxu0
      %v1355 = vadd.f32 %v1266, %v1354
      %v1356 = vpop.f32.mrf.mxu0
      %v1357 = vadd.f32 %v1268, %v1356
      %1358 = vmatmul.bf16.gmra.mxu0 %v917
      %v1359 = vpop.f32.mrf.mxu0
      %v1360 = vadd.f32 %v1271, %v1359
      %v1361 = vpop.f32.mrf.mxu0
      %v1362 = vadd.f32 %v1273, %v1361
      %1363 = vmatmul.bf16.gmra.mxu0 %v918
      %v1364 = vpop.f32.mrf.mxu0
      %v1365 = vadd.f32 %v1276, %v1364
      %v1366 = vpop.f32.mrf.mxu0
      %v1367 = vadd.f32 %v1278, %v1366
      %1368 = vdwg.mxu0
      %1369 = vmatpush.bf16.msra.mxu0 %v1166
      %1370 = vmatpush.bf16.msra.mxu0 %v1165
      %1371 = vmatpush.bf16.msra.mxu0 %v1164
      %1372 = vmatpush.bf16.msra.mxu0 %v1163
      %1373 = vmatpush.bf16.msra.mxu0 %v1162
      %1374 = vmatpush.bf16.msra.mxu0 %v1161
      %1375 = vmatpush.bf16.msra.mxu0 %v1160
      %1376 = vmatpush.bf16.msra.mxu0 %v1159
      %1377 = vmatmul.bf16.gmra.mxu0 %v967
      %v1378 = vpop.f32.mrf.mxu0
      %v1379 = vadd.f32 %v1290, %v1378
      %v1380 = vpop.f32.mrf.mxu0
      %v1381 = vadd.f32 %v1292, %v1380
      %1382 = vmatmul.bf16.gmra.mxu0 %v968
      %v1383 = vpop.f32.mrf.mxu0
      %v1384 = vadd.f32 %v1295, %v1383
      %v1385 = vpop.f32.mrf.mxu0
      %v1386 = vadd.f32 %v1297, %v1385
      %1387 = vmatmul.bf16.gmra.mxu0 %v969
      %v1388 = vpop.f32.mrf.mxu0
      %v1389 = vadd.f32 %v1300, %v1388
      %v1390 = vpop.f32.mrf.mxu0
      %v1391 = vadd.f32 %v1302, %v1390
      %1392 = vmatmul.bf16.gmra.mxu0 %v970
      %v1393 = vpop.f32.mrf.mxu0
      %v1394 = vadd.f32 %v1305, %v1393
      %v1395 = vpop.f32.mrf.mxu0
      %v1396 = vadd.f32 %v1307, %v1395
      %1397 = vmatmul.bf16.gmra.mxu0 %v971
      %v1398 = vpop.f32.mrf.mxu0
      %v1399 = vadd.f32 %v1310, %v1398
      %v1400 = vpop.f32.mrf.mxu0
      %v1401 = vadd.f32 %v1312, %v1400
      %1402 = vmatmul.bf16.gmra.mxu0 %v972
      %v1403 = vpop.f32.mrf.mxu0
      %v1404 = vadd.f32 %v1315, %v1403
      %v1405 = vpop.f32.mrf.mxu0
      %v1406 = vadd.f32 %v1317, %v1405
      %1407 = vmatmul.bf16.gmra.mxu0 %v973
      %v1408 = vpop.f32.mrf.mxu0
      %v1409 = vadd.f32 %v1320, %v1408
      %v1410 = vpop.f32.mrf.mxu0
      %v1411 = vadd.f32 %v1322, %v1410
      %1412 = vmatmul.bf16.gmra.mxu0 %v974
      %v1413 = vpop.f32.mrf.mxu0
      %v1414 = vadd.f32 %v1325, %v1413
      %v1415 = vpop.f32.mrf.mxu0
      %v1416 = vadd.f32 %v1327, %v1415
      %1417 = vmatmul.bf16.gmra.mxu0 %v975
      %v1418 = vpop.f32.mrf.mxu0
      %v1419 = vadd.f32 %v1330, %v1418
      %v1420 = vpop.f32.mrf.mxu0
      %v1421 = vadd.f32 %v1332, %v1420
      %1422 = vmatmul.bf16.gmra.mxu0 %v976
      %v1423 = vpop.f32.mrf.mxu0
      %v1424 = vadd.f32 %v1335, %v1423
      %v1425 = vpop.f32.mrf.mxu0
      %v1426 = vadd.f32 %v1337, %v1425
      %1427 = vmatmul.bf16.gmra.mxu0 %v977
      %v1428 = vpop.f32.mrf.mxu0
      %v1429 = vadd.f32 %v1340, %v1428
      %v1430 = vpop.f32.mrf.mxu0
      %v1431 = vadd.f32 %v1342, %v1430
      %1432 = vmatmul.bf16.gmra.mxu0 %v978
      %v1433 = vpop.f32.mrf.mxu0
      %v1434 = vadd.f32 %v1345, %v1433
      %v1435 = vpop.f32.mrf.mxu0
      %v1436 = vadd.f32 %v1347, %v1435
      %1437 = vmatmul.bf16.gmra.mxu0 %v979
      %v1438 = vpop.f32.mrf.mxu0
      %v1439 = vadd.f32 %v1350, %v1438
      %v1440 = vpop.f32.mrf.mxu0
      %v1441 = vadd.f32 %v1352, %v1440
      %1442 = vmatmul.bf16.gmra.mxu0 %v980
      %v1443 = vpop.f32.mrf.mxu0
      %v1444 = vadd.f32 %v1355, %v1443
      %v1445 = vpop.f32.mrf.mxu0
      %v1446 = vadd.f32 %v1357, %v1445
      %1447 = vmatmul.bf16.gmra.mxu0 %v981
      %v1448 = vpop.f32.mrf.mxu0
      %v1449 = vadd.f32 %v1360, %v1448
      %v1450 = vpop.f32.mrf.mxu0
      %v1451 = vadd.f32 %v1362, %v1450
      %1452 = vmatmul.bf16.gmra.mxu0 %v982
      %v1453 = vpop.f32.mrf.mxu0
      %v1454 = vadd.f32 %v1365, %v1453
      %v1455 = vpop.f32.mrf.mxu0
      %v1456 = vadd.f32 %v1367, %v1455
      %1457 = vdwg.mxu0
      %1458 = vst [vmem:[#allocation2] sm:$0xff] %v1379
      %1459 = vst [vmem:[#allocation2 + $0x8] sm:$0xff] %v1381
      %1460 = vst [vmem:[#allocation2 + $0x10] sm:$0xff] %v1384
      %1461 = vst [vmem:[#allocation2 + $0x18] sm:$0xff] %v1386
      %1462 = vst [vmem:[#allocation2 + $0x20] sm:$0xff] %v1389
      %1463 = vst [vmem:[#allocation2 + $0x28] sm:$0xff] %v1391
      %1464 = vst [vmem:[#allocation2 + $0x30] sm:$0xff] %v1394
      %1465 = vst [vmem:[#allocation2 + $0x38] sm:$0xff] %v1396
      %1466 = vst [vmem:[#allocation2 + $0x40] sm:$0xff] %v1399
      %1467 = vst [vmem:[#allocation2 + $0x48] sm:$0xff] %v1401
      %1468 = vst [vmem:[#allocation2 + $0x50] sm:$0xff] %v1404
      %1469 = vst [vmem:[#allocation2 + $0x58] sm:$0xff] %v1406
      %1470 = vst [vmem:[#allocation2 + $0x60] sm:$0xff] %v1409
      %1471 = vst [vmem:[#allocation2 + $0x68] sm:$0xff] %v1411
      %1472 = vst [vmem:[#allocation2 + $0x70] sm:$0xff] %v1414
      %1473 = vst [vmem:[#allocation2 + $0x78] sm:$0xff] %v1416
      %1474 = vst [vmem:[#allocation2 + $0x80] sm:$0xff] %v1419
      %1475 = vst [vmem:[#allocation2 + $0x88] sm:$0xff] %v1421
      %1476 = vst [vmem:[#allocation2 + $0x90] sm:$0xff] %v1424
      %1477 = vst [vmem:[#allocation2 + $0x98] sm:$0xff] %v1426
      %1478 = vst [vmem:[#allocation2 + $0xa0] sm:$0xff] %v1429
      %1479 = vst [vmem:[#allocation2 + $0xa8] sm:$0xff] %v1431
      %1480 = vst [vmem:[#allocation2 + $0xb0] sm:$0xff] %v1434
      %1481 = vst [vmem:[#allocation2 + $0xb8] sm:$0xff] %v1436
      %1482 = vst [vmem:[#allocation2 + $0xc0] sm:$0xff] %v1439
      %1483 = vst [vmem:[#allocation2 + $0xc8] sm:$0xff] %v1441
      %1484 = vst [vmem:[#allocation2 + $0xd0] sm:$0xff] %v1444
      %1485 = vst [vmem:[#allocation2 + $0xd8] sm:$0xff] %v1446
      %1486 = vst [vmem:[#allocation2 + $0xe0] sm:$0xff] %v1449
      %1487 = vst [vmem:[#allocation2 + $0xe8] sm:$0xff] %v1451
      %1488 = vst [vmem:[#allocation2 + $0xf0] sm:$0xff] %v1454
      %1489 = vst [vmem:[#allocation2 + $0xf8] sm:$0xff] %v1456
      %s1490 = sadd.s32 %s205, 1
      %s1491 = smul.u32 %s1490, 3
      %s1492 = smul.addr %s1491, 4
      %s1493 = scalar_lea.vmem %s190, %s1492
      %v1494 = vld [vmem:[%s1493] sm:$0xf]
      %v1495 = vld [vmem:[%s1493 + $0x4] sm:$0xf]
      %v1496 = vld [vmem:[%s1493 + $0x8] sm:$0x1]
      %v1497 = vld [vmem:[%s1493 + $0xc] sm:$0xf]
      %v1498 = vld [vmem:[%s1493 + $0x10] sm:$0xf]
      %v1499 = vld [vmem:[%s1493 + $0x14] sm:$0x1]
      %v1500 = vld [vmem:[%s1493 + $0x18] sm:$0xf]
      %v1501 = vld [vmem:[%s1493 + $0x1c] sm:$0xf]
      %v1502 = vld [vmem:[%s1493 + $0x20] sm:$0x1]
      %v1503 = vld [vmem:[%s1493 + $0x24] sm:$0xf]
      %v1504 = vld [vmem:[%s1493 + $0x28] sm:$0xf]
      %v1505 = vld [vmem:[%s1493 + $0x2c] sm:$0x1]
      %v1506 = vld [vmem:[%s1493 + $0x30] sm:$0xf]
      %v1507 = vld [vmem:[%s1493 + $0x34] sm:$0xf]
      %v1508 = vld [vmem:[%s1493 + $0x38] sm:$0x1]
      %v1509 = vld [vmem:[%s1493 + $0x3c] sm:$0xf]
      %v1510 = vld [vmem:[%s1493 + $0x40] sm:$0xf]
      %v1511 = vld [vmem:[%s1493 + $0x44] sm:$0x1]
      %v1512 = vld [vmem:[%s1493 + $0x48] sm:$0xf]
      %v1513 = vld [vmem:[%s1493 + $0x4c] sm:$0xf]
      %v1514 = vld [vmem:[%s1493 + $0x50] sm:$0x1]
      %v1515 = vld [vmem:[%s1493 + $0x54] sm:$0xf]
      %v1516 = vld [vmem:[%s1493 + $0x58] sm:$0xf]
      %v1517 = vld [vmem:[%s1493 + $0x5c] sm:$0x1]
      %v1518 = vld [vmem:[%s1493 + $0x60] sm:$0xf]
      %v1519 = vld [vmem:[%s1493 + $0x64] sm:$0xf]
      %v1520 = vld [vmem:[%s1493 + $0x68] sm:$0x1]
      %v1521 = vld [vmem:[%s1493 + $0x6c] sm:$0xf]
      %v1522 = vld [vmem:[%s1493 + $0x70] sm:$0xf]
      %v1523 = vld [vmem:[%s1493 + $0x74] sm:$0x1]
      %v1524 = vld [vmem:[%s1493 + $0x78] sm:$0xf]
      %v1525 = vld [vmem:[%s1493 + $0x7c] sm:$0xf]
      %v1526 = vld [vmem:[%s1493 + $0x80] sm:$0x1]
      %v1527 = vld [vmem:[%s1493 + $0x84] sm:$0xf]
      %v1528 = vld [vmem:[%s1493 + $0x88] sm:$0xf]
      %v1529 = vld [vmem:[%s1493 + $0x8c] sm:$0x1]
      %v1530 = vld [vmem:[%s1493 + $0x90] sm:$0xf]
      %v1531 = vld [vmem:[%s1493 + $0x94] sm:$0xf]
      %v1532 = vld [vmem:[%s1493 + $0x98] sm:$0x1]
      %v1533 = vld [vmem:[%s1493 + $0x9c] sm:$0xf]
      %v1534 = vld [vmem:[%s1493 + $0xa0] sm:$0xf]
      %v1535 = vld [vmem:[%s1493 + $0xa4] sm:$0x1]
      %v1536 = vld [vmem:[%s1493 + $0xa8] sm:$0xf]
      %v1537 = vld [vmem:[%s1493 + $0xac] sm:$0xf]
      %v1538 = vld [vmem:[%s1493 + $0xb0] sm:$0x1]
      %v1539 = vld [vmem:[%s1493 + $0xb4] sm:$0xf]
      %v1540 = vld [vmem:[%s1493 + $0xb8] sm:$0xf]
      %v1541 = vld [vmem:[%s1493 + $0xbc] sm:$0x1]
      %v1543 = vshrl.u32 %v1494, 16
      %v1545 = vrot.slane %v1543, 4
      %v1546 = vshll.u32 %v1494, 16
      %v1548 = vrot.slane %v1546, 5
      %v1549 = vor.u32 %v1545, %v1548
      %v1550 = vrot.slane %v1549, 4
      %v1552 = vshll.u32 %v1495, 16
      %v1554 = vrot.slane %v1552, 5
      %v1555 = vsel %vm259, %v1550, %v1554
      %v1556 = vshrl.u32 %v1495, 16
      %v1558 = vrot.slane %v1556, 4
      %v1559 = vor.u32 %v1558, %v1554
      %v1560 = vrot.slane %v1559, 4
      %v1562 = vshll.u32 %v1496, 16
      %v1564 = vrot.slane %v1562, 5
      %v1565 = vsel %vm259, %v1560, %v1564
      %v1567 = vshrl.u32 %v1497, 16
      %v1569 = vrot.slane %v1567, 4
      %v1570 = vshll.u32 %v1497, 16
      %v1572 = vrot.slane %v1570, 5
      %v1573 = vor.u32 %v1569, %v1572
      %v1574 = vrot.slane %v1573, 4
      %v1576 = vshll.u32 %v1498, 16
      %v1578 = vrot.slane %v1576, 5
      %v1579 = vsel %vm259, %v1574, %v1578
      %v1580 = vshrl.u32 %v1498, 16
      %v1582 = vrot.slane %v1580, 4
      %v1583 = vor.u32 %v1582, %v1578
      %v1584 = vrot.slane %v1583, 4
      %v1586 = vshll.u32 %v1499, 16
      %v1588 = vrot.slane %v1586, 5
      %v1589 = vsel %vm259, %v1584, %v1588
      %v1591 = vshrl.u32 %v1500, 16
      %v1593 = vrot.slane %v1591, 4
      %v1594 = vshll.u32 %v1500, 16
      %v1596 = vrot.slane %v1594, 5
      %v1597 = vor.u32 %v1593, %v1596
      %v1598 = vrot.slane %v1597, 4
      %v1600 = vshll.u32 %v1501, 16
      %v1602 = vrot.slane %v1600, 5
      %v1603 = vsel %vm259, %v1598, %v1602
      %v1604 = vshrl.u32 %v1501, 16
      %v1606 = vrot.slane %v1604, 4
      %v1607 = vor.u32 %v1606, %v1602
      %v1608 = vrot.slane %v1607, 4
      %v1610 = vshll.u32 %v1502, 16
      %v1612 = vrot.slane %v1610, 5
      %v1613 = vsel %vm259, %v1608, %v1612
      %v1615 = vshrl.u32 %v1503, 16
      %v1617 = vrot.slane %v1615, 4
      %v1618 = vshll.u32 %v1503, 16
      %v1620 = vrot.slane %v1618, 5
      %v1621 = vor.u32 %v1617, %v1620
      %v1622 = vrot.slane %v1621, 4
      %v1624 = vshll.u32 %v1504, 16
      %v1626 = vrot.slane %v1624, 5
      %v1627 = vsel %vm259, %v1622, %v1626
      %v1628 = vshrl.u32 %v1504, 16
      %v1630 = vrot.slane %v1628, 4
      %v1631 = vor.u32 %v1630, %v1626
      %v1632 = vrot.slane %v1631, 4
      %v1634 = vshll.u32 %v1505, 16
      %v1636 = vrot.slane %v1634, 5
      %v1637 = vsel %vm259, %v1632, %v1636
      %v1639 = vshrl.u32 %v1506, 16
      %v1641 = vrot.slane %v1639, 4
      %v1642 = vshll.u32 %v1506, 16
      %v1644 = vrot.slane %v1642, 5
      %v1645 = vor.u32 %v1641, %v1644
      %v1646 = vrot.slane %v1645, 4
      %v1648 = vshll.u32 %v1507, 16
      %v1650 = vrot.slane %v1648, 5
      %v1651 = vsel %vm259, %v1646, %v1650
      %v1652 = vshrl.u32 %v1507, 16
      %v1654 = vrot.slane %v1652, 4
      %v1655 = vor.u32 %v1654, %v1650
      %v1656 = vrot.slane %v1655, 4
      %v1658 = vshll.u32 %v1508, 16
      %v1660 = vrot.slane %v1658, 5
      %v1661 = vsel %vm259, %v1656, %v1660
      %v1663 = vshrl.u32 %v1509, 16
      %v1665 = vrot.slane %v1663, 4
      %v1666 = vshll.u32 %v1509, 16
      %v1668 = vrot.slane %v1666, 5
      %v1669 = vor.u32 %v1665, %v1668
      %v1670 = vrot.slane %v1669, 4
      %v1672 = vshll.u32 %v1510, 16
      %v1674 = vrot.slane %v1672, 5
      %v1675 = vsel %vm259, %v1670, %v1674
      %v1676 = vshrl.u32 %v1510, 16
      %v1678 = vrot.slane %v1676, 4
      %v1679 = vor.u32 %v1678, %v1674
      %v1680 = vrot.slane %v1679, 4
      %v1682 = vshll.u32 %v1511, 16
      %v1684 = vrot.slane %v1682, 5
      %v1685 = vsel %vm259, %v1680, %v1684
      %v1687 = vshrl.u32 %v1512, 16
      %v1689 = vrot.slane %v1687, 4
      %v1690 = vshll.u32 %v1512, 16
      %v1692 = vrot.slane %v1690, 5
      %v1693 = vor.u32 %v1689, %v1692
      %v1694 = vrot.slane %v1693, 4
      %v1696 = vshll.u32 %v1513, 16
      %v1698 = vrot.slane %v1696, 5
      %v1699 = vsel %vm259, %v1694, %v1698
      %v1700 = vshrl.u32 %v1513, 16
      %v1702 = vrot.slane %v1700, 4
      %v1703 = vor.u32 %v1702, %v1698
      %v1704 = vrot.slane %v1703, 4
      %v1706 = vshll.u32 %v1514, 16
      %v1708 = vrot.slane %v1706, 5
      %v1709 = vsel %vm259, %v1704, %v1708
      %v1711 = vshrl.u32 %v1515, 16
      %v1713 = vrot.slane %v1711, 4
      %v1714 = vshll.u32 %v1515, 16
      %v1716 = vrot.slane %v1714, 5
      %v1717 = vor.u32 %v1713, %v1716
      %v1718 = vrot.slane %v1717, 4
      %v1720 = vshll.u32 %v1516, 16
      %v1722 = vrot.slane %v1720, 5
      %v1723 = vsel %vm259, %v1718, %v1722
      %v1724 = vshrl.u32 %v1516, 16
      %v1726 = vrot.slane %v1724, 4
      %v1727 = vor.u32 %v1726, %v1722
      %v1728 = vrot.slane %v1727, 4
      %v1730 = vshll.u32 %v1517, 16
      %v1732 = vrot.slane %v1730, 5
      %v1733 = vsel %vm259, %v1728, %v1732
      %v1735 = vshrl.u32 %v1518, 16
      %v1737 = vrot.slane %v1735, 4
      %v1738 = vshll.u32 %v1518, 16
      %v1740 = vrot.slane %v1738, 5
      %v1741 = vor.u32 %v1737, %v1740
      %v1742 = vrot.slane %v1741, 4
      %v1744 = vshll.u32 %v1519, 16
      %v1746 = vrot.slane %v1744, 5
      %v1747 = vsel %vm259, %v1742, %v1746
      %v1748 = vshrl.u32 %v1519, 16
      %v1750 = vrot.slane %v1748, 4
      %v1751 = vor.u32 %v1750, %v1746
      %v1752 = vrot.slane %v1751, 4
      %v1754 = vshll.u32 %v1520, 16
      %v1756 = vrot.slane %v1754, 5
      %v1757 = vsel %vm259, %v1752, %v1756
      %v1759 = vshrl.u32 %v1521, 16
      %v1761 = vrot.slane %v1759, 4
      %v1762 = vshll.u32 %v1521, 16
      %v1764 = vrot.slane %v1762, 5
      %v1765 = vor.u32 %v1761, %v1764
      %v1766 = vrot.slane %v1765, 4
      %v1768 = vshll.u32 %v1522, 16
      %v1770 = vrot.slane %v1768, 5
      %v1771 = vsel %vm259, %v1766, %v1770
      %v1772 = vshrl.u32 %v1522, 16
      %v1774 = vrot.slane %v1772, 4
      %v1775 = vor.u32 %v1774, %v1770
      %v1776 = vrot.slane %v1775, 4
      %v1778 = vshll.u32 %v1523, 16
      %v1780 = vrot.slane %v1778, 5
      %v1781 = vsel %vm259, %v1776, %v1780
      %v1783 = vshrl.u32 %v1524, 16
      %v1785 = vrot.slane %v1783, 4
      %v1786 = vshll.u32 %v1524, 16
      %v1788 = vrot.slane %v1786, 5
      %v1789 = vor.u32 %v1785, %v1788
      %v1790 = vrot.slane %v1789, 4
      %v1792 = vshll.u32 %v1525, 16
      %v1794 = vrot.slane %v1792, 5
      %v1795 = vsel %vm259, %v1790, %v1794
      %v1796 = vshrl.u32 %v1525, 16
      %v1798 = vrot.slane %v1796, 4
      %v1799 = vor.u32 %v1798, %v1794
      %v1800 = vrot.slane %v1799, 4
      %v1802 = vshll.u32 %v1526, 16
      %v1804 = vrot.slane %v1802, 5
      %v1805 = vsel %vm259, %v1800, %v1804
      %v1807 = vshrl.u32 %v1527, 16
      %v1809 = vrot.slane %v1807, 4
      %v1810 = vshll.u32 %v1527, 16
      %v1812 = vrot.slane %v1810, 5
      %v1813 = vor.u32 %v1809, %v1812
      %v1814 = vrot.slane %v1813, 4
      %v1816 = vshll.u32 %v1528, 16
      %v1818 = vrot.slane %v1816, 5
      %v1819 = vsel %vm259, %v1814, %v1818
      %v1820 = vshrl.u32 %v1528, 16
      %v1822 = vrot.slane %v1820, 4
      %v1823 = vor.u32 %v1822, %v1818
      %v1824 = vrot.slane %v1823, 4
      %v1826 = vshll.u32 %v1529, 16
      %v1828 = vrot.slane %v1826, 5
      %v1829 = vsel %vm259, %v1824, %v1828
      %v1831 = vshrl.u32 %v1530, 16
      %v1833 = vrot.slane %v1831, 4
      %v1834 = vshll.u32 %v1530, 16
      %v1836 = vrot.slane %v1834, 5
      %v1837 = vor.u32 %v1833, %v1836
      %v1838 = vrot.slane %v1837, 4
      %v1840 = vshll.u32 %v1531, 16
      %v1842 = vrot.slane %v1840, 5
      %v1843 = vsel %vm259, %v1838, %v1842
      %v1844 = vshrl.u32 %v1531, 16
      %v1846 = vrot.slane %v1844, 4
      %v1847 = vor.u32 %v1846, %v1842
      %v1848 = vrot.slane %v1847, 4
      %v1850 = vshll.u32 %v1532, 16
      %v1852 = vrot.slane %v1850, 5
      %v1853 = vsel %vm259, %v1848, %v1852
      %v1855 = vshrl.u32 %v1533, 16
      %v1857 = vrot.slane %v1855, 4
      %v1858 = vshll.u32 %v1533, 16
      %v1860 = vrot.slane %v1858, 5
      %v1861 = vor.u32 %v1857, %v1860
      %v1862 = vrot.slane %v1861, 4
      %v1864 = vshll.u32 %v1534, 16
      %v1866 = vrot.slane %v1864, 5
      %v1867 = vsel %vm259, %v1862, %v1866
      %v1868 = vshrl.u32 %v1534, 16
      %v1870 = vrot.slane %v1868, 4
      %v1871 = vor.u32 %v1870, %v1866
      %v1872 = vrot.slane %v1871, 4
      %v1874 = vshll.u32 %v1535, 16
      %v1876 = vrot.slane %v1874, 5
      %v1877 = vsel %vm259, %v1872, %v1876
      %v1879 = vshrl.u32 %v1536, 16
      %v1881 = vrot.slane %v1879, 4
      %v1882 = vshll.u32 %v1536, 16
      %v1884 = vrot.slane %v1882, 5
      %v1885 = vor.u32 %v1881, %v1884
      %v1886 = vrot.slane %v1885, 4
      %v1888 = vshll.u32 %v1537, 16
      %v1890 = vrot.slane %v1888, 5
      %v1891 = vsel %vm259, %v1886, %v1890
      %v1892 = vshrl.u32 %v1537, 16
      %v1894 = vrot.slane %v1892, 4
      %v1895 = vor.u32 %v1894, %v1890
      %v1896 = vrot.slane %v1895, 4
      %v1898 = vshll.u32 %v1538, 16
      %v1900 = vrot.slane %v1898, 5
      %v1901 = vsel %vm259, %v1896, %v1900
      %v1903 = vshrl.u32 %v1539, 16
      %v1905 = vrot.slane %v1903, 4
      %v1906 = vshll.u32 %v1539, 16
      %v1908 = vrot.slane %v1906, 5
      %v1909 = vor.u32 %v1905, %v1908
      %v1910 = vrot.slane %v1909, 4
      %v1912 = vshll.u32 %v1540, 16
      %v1914 = vrot.slane %v1912, 5
      %v1915 = vsel %vm259, %v1910, %v1914
      %v1916 = vshrl.u32 %v1540, 16
      %v1918 = vrot.slane %v1916, 4
      %v1919 = vor.u32 %v1918, %v1914
      %v1920 = vrot.slane %v1919, 4
      %v1922 = vshll.u32 %v1541, 16
      %v1924 = vrot.slane %v1922, 5
      %v1925 = vsel %vm259, %v1920, %v1924
      %v1974 = vrot.slane %v1494, 5
      %v1975 = vrot.slane %v1974, 4
      %v1976 = vrot.slane %v1495, 5
      %v1977 = vsel %vm694, %v1975, %v1976
      %v1978 = vrot.slane %v1976, 4
      %v1979 = vrot.slane %v1496, 5
      %v1980 = vsel %vm694, %v1978, %v1979
      %v1981 = vrot.slane %v1497, 5
      %v1982 = vrot.slane %v1981, 4
      %v1983 = vrot.slane %v1498, 5
      %v1984 = vsel %vm694, %v1982, %v1983
      %v1985 = vrot.slane %v1983, 4
      %v1986 = vrot.slane %v1499, 5
      %v1987 = vsel %vm694, %v1985, %v1986
      %v1988 = vrot.slane %v1500, 5
      %v1989 = vrot.slane %v1988, 4
      %v1990 = vrot.slane %v1501, 5
      %v1991 = vsel %vm694, %v1989, %v1990
      %v1992 = vrot.slane %v1990, 4
      %v1993 = vrot.slane %v1502, 5
      %v1994 = vsel %vm694, %v1992, %v1993
      %v1995 = vrot.slane %v1503, 5
      %v1996 = vrot.slane %v1995, 4
      %v1997 = vrot.slane %v1504, 5
      %v1998 = vsel %vm694, %v1996, %v1997
      %v1999 = vrot.slane %v1997, 4
      %v2000 = vrot.slane %v1505, 5
      %v2001 = vsel %vm694, %v1999, %v2000
      %v2002 = vrot.slane %v1506, 5
      %v2003 = vrot.slane %v2002, 4
      %v2004 = vrot.slane %v1507, 5
      %v2005 = vsel %vm694, %v2003, %v2004
      %v2006 = vrot.slane %v2004, 4
      %v2007 = vrot.slane %v1508, 5
      %v2008 = vsel %vm694, %v2006, %v2007
      %v2009 = vrot.slane %v1509, 5
      %v2010 = vrot.slane %v2009, 4
      %v2011 = vrot.slane %v1510, 5
      %v2012 = vsel %vm694, %v2010, %v2011
      %v2013 = vrot.slane %v2011, 4
      %v2014 = vrot.slane %v1511, 5
      %v2015 = vsel %vm694, %v2013, %v2014
      %v2016 = vrot.slane %v1512, 5
      %v2017 = vrot.slane %v2016, 4
      %v2018 = vrot.slane %v1513, 5
      %v2019 = vsel %vm694, %v2017, %v2018
      %v2020 = vrot.slane %v2018, 4
      %v2021 = vrot.slane %v1514, 5
      %v2022 = vsel %vm694, %v2020, %v2021
      %v2023 = vrot.slane %v1515, 5
      %v2024 = vrot.slane %v2023, 4
      %v2025 = vrot.slane %v1516, 5
      %v2026 = vsel %vm694, %v2024, %v2025
      %v2027 = vrot.slane %v2025, 4
      %v2028 = vrot.slane %v1517, 5
      %v2029 = vsel %vm694, %v2027, %v2028
      %v2030 = vrot.slane %v1518, 5
      %v2031 = vrot.slane %v2030, 4
      %v2032 = vrot.slane %v1519, 5
      %v2033 = vsel %vm694, %v2031, %v2032
      %v2034 = vrot.slane %v2032, 4
      %v2035 = vrot.slane %v1520, 5
      %v2036 = vsel %vm694, %v2034, %v2035
      %v2037 = vrot.slane %v1521, 5
      %v2038 = vrot.slane %v2037, 4
      %v2039 = vrot.slane %v1522, 5
      %v2040 = vsel %vm694, %v2038, %v2039
      %v2041 = vrot.slane %v2039, 4
      %v2042 = vrot.slane %v1523, 5
      %v2043 = vsel %vm694, %v2041, %v2042
      %v2044 = vrot.slane %v1524, 5
      %v2045 = vrot.slane %v2044, 4
      %v2046 = vrot.slane %v1525, 5
      %v2047 = vsel %vm694, %v2045, %v2046
      %v2048 = vrot.slane %v2046, 4
      %v2049 = vrot.slane %v1526, 5
      %v2050 = vsel %vm694, %v2048, %v2049
      %v2051 = vrot.slane %v1527, 5
      %v2052 = vrot.slane %v2051, 4
      %v2053 = vrot.slane %v1528, 5
      %v2054 = vsel %vm694, %v2052, %v2053
      %v2055 = vrot.slane %v2053, 4
      %v2056 = vrot.slane %v1529, 5
      %v2057 = vsel %vm694, %v2055, %v2056
      %v2058 = vrot.slane %v1530, 5
      %v2059 = vrot.slane %v2058, 4
      %v2060 = vrot.slane %v1531, 5
      %v2061 = vsel %vm694, %v2059, %v2060
      %v2062 = vrot.slane %v2060, 4
      %v2063 = vrot.slane %v1532, 5
      %v2064 = vsel %vm694, %v2062, %v2063
      %v2065 = vrot.slane %v1533, 5
      %v2066 = vrot.slane %v2065, 4
      %v2067 = vrot.slane %v1534, 5
      %v2068 = vsel %vm694, %v2066, %v2067
      %v2069 = vrot.slane %v2067, 4
      %v2070 = vrot.slane %v1535, 5
      %v2071 = vsel %vm694, %v2069, %v2070
      %v2072 = vrot.slane %v1536, 5
      %v2073 = vrot.slane %v2072, 4
      %v2074 = vrot.slane %v1537, 5
      %v2075 = vsel %vm694, %v2073, %v2074
      %v2076 = vrot.slane %v2074, 4
      %v2077 = vrot.slane %v1538, 5
      %v2078 = vsel %vm694, %v2076, %v2077
      %v2079 = vrot.slane %v1539, 5
      %v2080 = vrot.slane %v2079, 4
      %v2081 = vrot.slane %v1540, 5
      %v2082 = vsel %vm694, %v2080, %v2081
      %v2083 = vrot.slane %v2081, 4
      %v2084 = vrot.slane %v1541, 5
      %v2085 = vsel %vm694, %v2083, %v2084
      %v2086 = vunpack.c.l.b16 %v1494
      %v2087 = vunpack.c.l.b16 %v1495
      %v2088 = vunpack.c.l.b16 %v1497
      %v2089 = vunpack.c.l.b16 %v1498
      %v2090 = vunpack.c.l.b16 %v1500
      %v2091 = vunpack.c.l.b16 %v1501
      %v2092 = vunpack.c.l.b16 %v1503
      %v2093 = vunpack.c.l.b16 %v1504
      %v2094 = vunpack.c.l.b16 %v1506
      %v2095 = vunpack.c.l.b16 %v1507
      %v2096 = vunpack.c.l.b16 %v1509
      %v2097 = vunpack.c.l.b16 %v1510
      %v2098 = vunpack.c.l.b16 %v1512
      %v2099 = vunpack.c.l.b16 %v1513
      %v2100 = vunpack.c.l.b16 %v1515
      %v2101 = vunpack.c.l.b16 %v1516
      %v2102 = vunpack.c.l.b16 %v1518
      %v2103 = vunpack.c.l.b16 %v1519
      %v2104 = vunpack.c.l.b16 %v1521
      %v2105 = vunpack.c.l.b16 %v1522
      %v2106 = vunpack.c.l.b16 %v1524
      %v2107 = vunpack.c.l.b16 %v1525
      %v2108 = vunpack.c.l.b16 %v1527
      %v2109 = vunpack.c.l.b16 %v1528
      %v2110 = vunpack.c.l.b16 %v1530
      %v2111 = vunpack.c.l.b16 %v1531
      %v2112 = vunpack.c.l.b16 %v1533
      %v2113 = vunpack.c.l.b16 %v1534
      %v2114 = vunpack.c.l.b16 %v1536
      %v2115 = vunpack.c.l.b16 %v1537
      %v2116 = vunpack.c.l.b16 %v1539
      %v2117 = vunpack.c.l.b16 %v1540
      %v2118 = vpack.c.b16 %v2087, %v2086
      %v2119 = vpack.c.b16 %v2089, %v2088
      %v2120 = vpack.c.b16 %v2091, %v2090
      %v2121 = vpack.c.b16 %v2093, %v2092
      %v2122 = vpack.c.b16 %v2095, %v2094
      %v2123 = vpack.c.b16 %v2097, %v2096
      %v2124 = vpack.c.b16 %v2099, %v2098
      %v2125 = vpack.c.b16 %v2101, %v2100
      %v2126 = vpack.c.b16 %v2103, %v2102
      %v2127 = vpack.c.b16 %v2105, %v2104
      %v2128 = vpack.c.b16 %v2107, %v2106
      %v2129 = vpack.c.b16 %v2109, %v2108
      %v2130 = vpack.c.b16 %v2111, %v2110
      %v2131 = vpack.c.b16 %v2113, %v2112
      %v2132 = vpack.c.b16 %v2115, %v2114
      %v2133 = vpack.c.b16 %v2117, %v2116
      %v2150 = vunpack.c.l.b16 %v1555
      %v2151 = vunpack.c.l.b16 %v1565
      %v2152 = vunpack.c.l.b16 %v1579
      %v2153 = vunpack.c.l.b16 %v1589
      %v2154 = vunpack.c.l.b16 %v1603
      %v2155 = vunpack.c.l.b16 %v1613
      %v2156 = vunpack.c.l.b16 %v1627
      %v2157 = vunpack.c.l.b16 %v1637
      %v2158 = vunpack.c.l.b16 %v1651
      %v2159 = vunpack.c.l.b16 %v1661
      %v2160 = vunpack.c.l.b16 %v1675
      %v2161 = vunpack.c.l.b16 %v1685
      %v2162 = vunpack.c.l.b16 %v1699
      %v2163 = vunpack.c.l.b16 %v1709
      %v2164 = vunpack.c.l.b16 %v1723
      %v2165 = vunpack.c.l.b16 %v1733
      %v2166 = vunpack.c.l.b16 %v1747
      %v2167 = vunpack.c.l.b16 %v1757
      %v2168 = vunpack.c.l.b16 %v1771
      %v2169 = vunpack.c.l.b16 %v1781
      %v2170 = vunpack.c.l.b16 %v1795
      %v2171 = vunpack.c.l.b16 %v1805
      %v2172 = vunpack.c.l.b16 %v1819
      %v2173 = vunpack.c.l.b16 %v1829
      %v2174 = vunpack.c.l.b16 %v1843
      %v2175 = vunpack.c.l.b16 %v1853
      %v2176 = vunpack.c.l.b16 %v1867
      %v2177 = vunpack.c.l.b16 %v1877
      %v2178 = vunpack.c.l.b16 %v1891
      %v2179 = vunpack.c.l.b16 %v1901
      %v2180 = vunpack.c.l.b16 %v1915
      %v2181 = vunpack.c.l.b16 %v1925
      %v2182 = vpack.c.b16 %v2151, %v2150
      %v2183 = vpack.c.b16 %v2153, %v2152
      %v2184 = vpack.c.b16 %v2155, %v2154
      %v2185 = vpack.c.b16 %v2157, %v2156
      %v2186 = vpack.c.b16 %v2159, %v2158
      %v2187 = vpack.c.b16 %v2161, %v2160
      %v2188 = vpack.c.b16 %v2163, %v2162
      %v2189 = vpack.c.b16 %v2165, %v2164
      %v2190 = vpack.c.b16 %v2167, %v2166
      %v2191 = vpack.c.b16 %v2169, %v2168
      %v2192 = vpack.c.b16 %v2171, %v2170
      %v2193 = vpack.c.b16 %v2173, %v2172
      %v2194 = vpack.c.b16 %v2175, %v2174
      %v2195 = vpack.c.b16 %v2177, %v2176
      %v2196 = vpack.c.b16 %v2179, %v2178
      %v2197 = vpack.c.b16 %v2181, %v2180
      %v2214 = vunpack.c.l.b16 %v1977
      %v2215 = vunpack.c.l.b16 %v1980
      %v2216 = vunpack.c.l.b16 %v1984
      %v2217 = vunpack.c.l.b16 %v1987
      %v2218 = vunpack.c.l.b16 %v1991
      %v2219 = vunpack.c.l.b16 %v1994
      %v2220 = vunpack.c.l.b16 %v1998
      %v2221 = vunpack.c.l.b16 %v2001
      %v2222 = vunpack.c.l.b16 %v2005
      %v2223 = vunpack.c.l.b16 %v2008
      %v2224 = vunpack.c.l.b16 %v2012
      %v2225 = vunpack.c.l.b16 %v2015
      %v2226 = vunpack.c.l.b16 %v2019
      %v2227 = vunpack.c.l.b16 %v2022
      %v2228 = vunpack.c.l.b16 %v2026
      %v2229 = vunpack.c.l.b16 %v2029
      %v2230 = vunpack.c.l.b16 %v2033
      %v2231 = vunpack.c.l.b16 %v2036
      %v2232 = vunpack.c.l.b16 %v2040
      %v2233 = vunpack.c.l.b16 %v2043
      %v2234 = vunpack.c.l.b16 %v2047
      %v2235 = vunpack.c.l.b16 %v2050
      %v2236 = vunpack.c.l.b16 %v2054
      %v2237 = vunpack.c.l.b16 %v2057
      %v2238 = vunpack.c.l.b16 %v2061
      %v2239 = vunpack.c.l.b16 %v2064
      %v2240 = vunpack.c.l.b16 %v2068
      %v2241 = vunpack.c.l.b16 %v2071
      %v2242 = vunpack.c.l.b16 %v2075
      %v2243 = vunpack.c.l.b16 %v2078
      %v2244 = vunpack.c.l.b16 %v2082
      %v2245 = vunpack.c.l.b16 %v2085
      %v2246 = vpack.c.b16 %v2215, %v2214
      %v2247 = vpack.c.b16 %v2217, %v2216
      %v2248 = vpack.c.b16 %v2219, %v2218
      %v2249 = vpack.c.b16 %v2221, %v2220
      %v2250 = vpack.c.b16 %v2223, %v2222
      %v2251 = vpack.c.b16 %v2225, %v2224
      %v2252 = vpack.c.b16 %v2227, %v2226
      %v2253 = vpack.c.b16 %v2229, %v2228
      %v2254 = vpack.c.b16 %v2231, %v2230
      %v2255 = vpack.c.b16 %v2233, %v2232
      %v2256 = vpack.c.b16 %v2235, %v2234
      %v2257 = vpack.c.b16 %v2237, %v2236
      %v2258 = vpack.c.b16 %v2239, %v2238
      %v2259 = vpack.c.b16 %v2241, %v2240
      %v2260 = vpack.c.b16 %v2243, %v2242
      %v2261 = vpack.c.b16 %v2245, %v2244
      %s2278 = scalar_lea.vmem %s1, 192
      %v2279 = vld [vmem:[%s2278] sm:$0xf]
      %v2280 = vld [vmem:[%s2278 + $0x4] sm:$0xf]
      %v2281 = vld [vmem:[%s2278 + $0x8] sm:$0xf]
      %v2282 = vld [vmem:[%s2278 + $0xc] sm:$0xf]
      %v2283 = vld [vmem:[%s2278 + $0x10] sm:$0xf]
      %v2284 = vld [vmem:[%s2278 + $0x14] sm:$0xf]
      %v2285 = vld [vmem:[%s2278 + $0x18] sm:$0xf]
      %v2286 = vld [vmem:[%s2278 + $0x1c] sm:$0xf]
      %v2287 = vld [vmem:[%s2278 + $0x20] sm:$0xf]
      %v2288 = vld [vmem:[%s2278 + $0x24] sm:$0xf]
      %v2289 = vld [vmem:[%s2278 + $0x28] sm:$0xf]
      %v2290 = vld [vmem:[%s2278 + $0x2c] sm:$0xf]
      %v2291 = vld [vmem:[%s2278 + $0x30] sm:$0xf]
      %v2292 = vld [vmem:[%s2278 + $0x34] sm:$0xf]
      %v2293 = vld [vmem:[%s2278 + $0x38] sm:$0xf]
      %v2294 = vld [vmem:[%s2278 + $0x3c] sm:$0xf]
      %v2295 = vld [vmem:[%s2278 + $0x40] sm:$0xf]
      %v2296 = vld [vmem:[%s2278 + $0x44] sm:$0xf]
      %v2297 = vld [vmem:[%s2278 + $0x48] sm:$0xf]
      %v2298 = vld [vmem:[%s2278 + $0x4c] sm:$0xf]
      %v2299 = vld [vmem:[%s2278 + $0x50] sm:$0xf]
      %v2300 = vld [vmem:[%s2278 + $0x54] sm:$0xf]
      %v2301 = vld [vmem:[%s2278 + $0x58] sm:$0xf]
      %v2302 = vld [vmem:[%s2278 + $0x5c] sm:$0xf]
      %v2303 = vld [vmem:[%s2278 + $0x60] sm:$0xf]
      %v2304 = vld [vmem:[%s2278 + $0x64] sm:$0xf]
      %v2305 = vld [vmem:[%s2278 + $0x68] sm:$0xf]
      %v2306 = vld [vmem:[%s2278 + $0x6c] sm:$0xf]
      %v2307 = vld [vmem:[%s2278 + $0x70] sm:$0xf]
      %v2308 = vld [vmem:[%s2278 + $0x74] sm:$0xf]
      %v2309 = vld [vmem:[%s2278 + $0x78] sm:$0xf]
      %v2310 = vld [vmem:[%s2278 + $0x7c] sm:$0xf]
      %v2311 = vld [vmem:[%s2278 + $0x80] sm:$0xf]
      %v2312 = vld [vmem:[%s2278 + $0x84] sm:$0xf]
      %v2313 = vld [vmem:[%s2278 + $0x88] sm:$0xf]
      %v2314 = vld [vmem:[%s2278 + $0x8c] sm:$0xf]
      %v2315 = vld [vmem:[%s2278 + $0x90] sm:$0xf]
      %v2316 = vld [vmem:[%s2278 + $0x94] sm:$0xf]
      %v2317 = vld [vmem:[%s2278 + $0x98] sm:$0xf]
      %v2318 = vld [vmem:[%s2278 + $0x9c] sm:$0xf]
      %v2319 = vld [vmem:[%s2278 + $0xa0] sm:$0xf]
      %v2320 = vld [vmem:[%s2278 + $0xa4] sm:$0xf]
      %v2321 = vld [vmem:[%s2278 + $0xa8] sm:$0xf]
      %v2322 = vld [vmem:[%s2278 + $0xac] sm:$0xf]
      %v2323 = vld [vmem:[%s2278 + $0xb0] sm:$0xf]
      %v2324 = vld [vmem:[%s2278 + $0xb4] sm:$0xf]
      %v2325 = vld [vmem:[%s2278 + $0xb8] sm:$0xf]
      %v2326 = vld [vmem:[%s2278 + $0xbc] sm:$0xf]
      %v2375 = vunpack.c.l.b16 %v2279
      %v2376 = vunpack.c.l.b16 %v2280
      %v2377 = vunpack.c.l.b16 %v2281
      %v2378 = vunpack.c.l.b16 %v2282
      %v2379 = vunpack.c.l.b16 %v2283
      %v2380 = vunpack.c.l.b16 %v2284
      %v2381 = vunpack.c.l.b16 %v2285
      %v2382 = vunpack.c.l.b16 %v2286
      %v2383 = vunpack.c.l.b16 %v2287
      %v2384 = vunpack.c.l.b16 %v2288
      %v2385 = vunpack.c.l.b16 %v2289
      %v2386 = vunpack.c.l.b16 %v2290
      %v2387 = vunpack.c.l.b16 %v2291
      %v2388 = vunpack.c.l.b16 %v2292
      %v2389 = vunpack.c.l.b16 %v2293
      %v2390 = vunpack.c.l.b16 %v2294
      %v2391 = vunpack.c.l.b16 %v2295
      %v2392 = vunpack.c.l.b16 %v2296
      %v2393 = vunpack.c.l.b16 %v2297
      %v2394 = vunpack.c.l.b16 %v2298
      %v2395 = vunpack.c.l.b16 %v2299
      %v2396 = vunpack.c.l.b16 %v2300
      %v2397 = vunpack.c.l.b16 %v2301
      %v2398 = vunpack.c.l.b16 %v2302
      %v2399 = vunpack.c.l.b16 %v2303
      %v2400 = vunpack.c.l.b16 %v2304
      %v2401 = vunpack.c.l.b16 %v2305
      %v2402 = vunpack.c.l.b16 %v2306
      %v2403 = vunpack.c.l.b16 %v2307
      %v2404 = vunpack.c.l.b16 %v2308
      %v2405 = vunpack.c.l.b16 %v2309
      %v2406 = vunpack.c.l.b16 %v2310
      %v2407 = vunpack.c.l.b16 %v2311
      %v2408 = vunpack.c.l.b16 %v2312
      %v2409 = vunpack.c.l.b16 %v2313
      %v2410 = vunpack.c.l.b16 %v2314
      %v2411 = vunpack.c.l.b16 %v2315
      %v2412 = vunpack.c.l.b16 %v2316
      %v2413 = vunpack.c.l.b16 %v2317
      %v2414 = vunpack.c.l.b16 %v2318
      %v2415 = vunpack.c.l.b16 %v2319
      %v2416 = vunpack.c.l.b16 %v2320
      %v2417 = vunpack.c.l.b16 %v2321
      %v2418 = vunpack.c.l.b16 %v2322
      %v2419 = vunpack.c.l.b16 %v2323
      %v2420 = vunpack.c.l.b16 %v2324
      %v2421 = vunpack.c.l.b16 %v2325
      %v2422 = vunpack.c.l.b16 %v2326
      %v2423 = vpack.c.b16 %v2376, %v2375
      %v2424 = vpack.c.b16 %v2378, %v2377
      %v2425 = vpack.c.b16 %v2380, %v2379
      %v2426 = vpack.c.b16 %v2382, %v2381
      %v2427 = vpack.c.b16 %v2384, %v2383
      %v2428 = vpack.c.b16 %v2386, %v2385
      %v2429 = vpack.c.b16 %v2388, %v2387
      %v2430 = vpack.c.b16 %v2390, %v2389
      %v2431 = vpack.c.b16 %v2392, %v2391
      %v2432 = vpack.c.b16 %v2394, %v2393
      %v2433 = vpack.c.b16 %v2396, %v2395
      %v2434 = vpack.c.b16 %v2398, %v2397
      %v2435 = vpack.c.b16 %v2400, %v2399
      %v2436 = vpack.c.b16 %v2402, %v2401
      %v2437 = vpack.c.b16 %v2404, %v2403
      %v2438 = vpack.c.b16 %v2406, %v2405
      %v2439 = vpack.c.b16 %v2408, %v2407
      %v2440 = vpack.c.b16 %v2410, %v2409
      %v2441 = vpack.c.b16 %v2412, %v2411
      %v2442 = vpack.c.b16 %v2414, %v2413
      %v2443 = vpack.c.b16 %v2416, %v2415
      %v2444 = vpack.c.b16 %v2418, %v2417
      %v2445 = vpack.c.b16 %v2420, %v2419
      %v2446 = vpack.c.b16 %v2422, %v2421
      %2471 = vmatpush.bf16.msra.mxu0 %v2430
      %2472 = vmatpush.bf16.msra.mxu0 %v2429
      %2473 = vmatpush.bf16.msra.mxu0 %v2428
      %2474 = vmatpush.bf16.msra.mxu0 %v2427
      %2475 = vmatpush.bf16.msra.mxu0 %v2426
      %2476 = vmatpush.bf16.msra.mxu0 %v2425
      %2477 = vmatpush.bf16.msra.mxu0 %v2424
      %2478 = vmatpush.bf16.msra.mxu0 %v2423
      %2479 = vmatmul.bf16.gmra.mxu0 %v2118
      %v2480 = vpop.f32.mrf.mxu0
      %v2481 = vadd.f32 0.0, %v2480
      %v2482 = vpop.f32.mrf.mxu0
      %v2483 = vadd.f32 0.0, %v2482
      %2484 = vmatmul.bf16.gmra.mxu0 %v2119
      %v2485 = vpop.f32.mrf.mxu0
      %v2486 = vadd.f32 0.0, %v2485
      %v2487 = vpop.f32.mrf.mxu0
      %v2488 = vadd.f32 0.0, %v2487
      %2489 = vmatmul.bf16.gmra.mxu0 %v2120
      %v2490 = vpop.f32.mrf.mxu0
      %v2491 = vadd.f32 0.0, %v2490
      %v2492 = vpop.f32.mrf.mxu0
      %v2493 = vadd.f32 0.0, %v2492
      %2494 = vmatmul.bf16.gmra.mxu0 %v2121
      %v2495 = vpop.f32.mrf.mxu0
      %v2496 = vadd.f32 0.0, %v2495
      %v2497 = vpop.f32.mrf.mxu0
      %v2498 = vadd.f32 0.0, %v2497
      %2499 = vmatmul.bf16.gmra.mxu0 %v2122
      %v2500 = vpop.f32.mrf.mxu0
      %v2501 = vadd.f32 0.0, %v2500
      %v2502 = vpop.f32.mrf.mxu0
      %v2503 = vadd.f32 0.0, %v2502
      %2504 = vmatmul.bf16.gmra.mxu0 %v2123
      %v2505 = vpop.f32.mrf.mxu0
      %v2506 = vadd.f32 0.0, %v2505
      %v2507 = vpop.f32.mrf.mxu0
      %v2508 = vadd.f32 0.0, %v2507
      %2509 = vmatmul.bf16.gmra.mxu0 %v2124
      %v2510 = vpop.f32.mrf.mxu0
      %v2511 = vadd.f32 0.0, %v2510
      %v2512 = vpop.f32.mrf.mxu0
      %v2513 = vadd.f32 0.0, %v2512
      %2514 = vmatmul.bf16.gmra.mxu0 %v2125
      %v2515 = vpop.f32.mrf.mxu0
      %v2516 = vadd.f32 0.0, %v2515
      %v2517 = vpop.f32.mrf.mxu0
      %v2518 = vadd.f32 0.0, %v2517
      %2519 = vmatmul.bf16.gmra.mxu0 %v2126
      %v2520 = vpop.f32.mrf.mxu0
      %v2521 = vadd.f32 0.0, %v2520
      %v2522 = vpop.f32.mrf.mxu0
      %v2523 = vadd.f32 0.0, %v2522
      %2524 = vmatmul.bf16.gmra.mxu0 %v2127
      %v2525 = vpop.f32.mrf.mxu0
      %v2526 = vadd.f32 0.0, %v2525
      %v2527 = vpop.f32.mrf.mxu0
      %v2528 = vadd.f32 0.0, %v2527
      %2529 = vmatmul.bf16.gmra.mxu0 %v2128
      %v2530 = vpop.f32.mrf.mxu0
      %v2531 = vadd.f32 0.0, %v2530
      %v2532 = vpop.f32.mrf.mxu0
      %v2533 = vadd.f32 0.0, %v2532
      %2534 = vmatmul.bf16.gmra.mxu0 %v2129
      %v2535 = vpop.f32.mrf.mxu0
      %v2536 = vadd.f32 0.0, %v2535
      %v2537 = vpop.f32.mrf.mxu0
      %v2538 = vadd.f32 0.0, %v2537
      %2539 = vmatmul.bf16.gmra.mxu0 %v2130
      %v2540 = vpop.f32.mrf.mxu0
      %v2541 = vadd.f32 0.0, %v2540
      %v2542 = vpop.f32.mrf.mxu0
      %v2543 = vadd.f32 0.0, %v2542
      %2544 = vmatmul.bf16.gmra.mxu0 %v2131
      %v2545 = vpop.f32.mrf.mxu0
      %v2546 = vadd.f32 0.0, %v2545
      %v2547 = vpop.f32.mrf.mxu0
      %v2548 = vadd.f32 0.0, %v2547
      %2549 = vmatmul.bf16.gmra.mxu0 %v2132
      %v2550 = vpop.f32.mrf.mxu0
      %v2551 = vadd.f32 0.0, %v2550
      %v2552 = vpop.f32.mrf.mxu0
      %v2553 = vadd.f32 0.0, %v2552
      %2554 = vmatmul.bf16.gmra.mxu0 %v2133
      %v2555 = vpop.f32.mrf.mxu0
      %v2556 = vadd.f32 0.0, %v2555
      %v2557 = vpop.f32.mrf.mxu0
      %v2558 = vadd.f32 0.0, %v2557
      %2559 = vdwg.mxu0
      %2560 = vmatpush.bf16.msra.mxu0 %v2438
      %2561 = vmatpush.bf16.msra.mxu0 %v2437
      %2562 = vmatpush.bf16.msra.mxu0 %v2436
      %2563 = vmatpush.bf16.msra.mxu0 %v2435
      %2564 = vmatpush.bf16.msra.mxu0 %v2434
      %2565 = vmatpush.bf16.msra.mxu0 %v2433
      %2566 = vmatpush.bf16.msra.mxu0 %v2432
      %2567 = vmatpush.bf16.msra.mxu0 %v2431
      %2568 = vmatmul.bf16.gmra.mxu0 %v2182
      %v2569 = vpop.f32.mrf.mxu0
      %v2570 = vadd.f32 %v2481, %v2569
      %v2571 = vpop.f32.mrf.mxu0
      %v2572 = vadd.f32 %v2483, %v2571
      %2573 = vmatmul.bf16.gmra.mxu0 %v2183
      %v2574 = vpop.f32.mrf.mxu0
      %v2575 = vadd.f32 %v2486, %v2574
      %v2576 = vpop.f32.mrf.mxu0
      %v2577 = vadd.f32 %v2488, %v2576
      %2578 = vmatmul.bf16.gmra.mxu0 %v2184
      %v2579 = vpop.f32.mrf.mxu0
      %v2580 = vadd.f32 %v2491, %v2579
      %v2581 = vpop.f32.mrf.mxu0
      %v2582 = vadd.f32 %v2493, %v2581
      %2583 = vmatmul.bf16.gmra.mxu0 %v2185
      %v2584 = vpop.f32.mrf.mxu0
      %v2585 = vadd.f32 %v2496, %v2584
      %v2586 = vpop.f32.mrf.mxu0
      %v2587 = vadd.f32 %v2498, %v2586
      %2588 = vmatmul.bf16.gmra.mxu0 %v2186
      %v2589 = vpop.f32.mrf.mxu0
      %v2590 = vadd.f32 %v2501, %v2589
      %v2591 = vpop.f32.mrf.mxu0
      %v2592 = vadd.f32 %v2503, %v2591
      %2593 = vmatmul.bf16.gmra.mxu0 %v2187
      %v2594 = vpop.f32.mrf.mxu0
      %v2595 = vadd.f32 %v2506, %v2594
      %v2596 = vpop.f32.mrf.mxu0
      %v2597 = vadd.f32 %v2508, %v2596
      %2598 = vmatmul.bf16.gmra.mxu0 %v2188
      %v2599 = vpop.f32.mrf.mxu0
      %v2600 = vadd.f32 %v2511, %v2599
      %v2601 = vpop.f32.mrf.mxu0
      %v2602 = vadd.f32 %v2513, %v2601
      %2603 = vmatmul.bf16.gmra.mxu0 %v2189
      %v2604 = vpop.f32.mrf.mxu0
      %v2605 = vadd.f32 %v2516, %v2604
      %v2606 = vpop.f32.mrf.mxu0
      %v2607 = vadd.f32 %v2518, %v2606
      %2608 = vmatmul.bf16.gmra.mxu0 %v2190
      %v2609 = vpop.f32.mrf.mxu0
      %v2610 = vadd.f32 %v2521, %v2609
      %v2611 = vpop.f32.mrf.mxu0
      %v2612 = vadd.f32 %v2523, %v2611
      %2613 = vmatmul.bf16.gmra.mxu0 %v2191
      %v2614 = vpop.f32.mrf.mxu0
      %v2615 = vadd.f32 %v2526, %v2614
      %v2616 = vpop.f32.mrf.mxu0
      %v2617 = vadd.f32 %v2528, %v2616
      %2618 = vmatmul.bf16.gmra.mxu0 %v2192
      %v2619 = vpop.f32.mrf.mxu0
      %v2620 = vadd.f32 %v2531, %v2619
      %v2621 = vpop.f32.mrf.mxu0
      %v2622 = vadd.f32 %v2533, %v2621
      %2623 = vmatmul.bf16.gmra.mxu0 %v2193
      %v2624 = vpop.f32.mrf.mxu0
      %v2625 = vadd.f32 %v2536, %v2624
      %v2626 = vpop.f32.mrf.mxu0
      %v2627 = vadd.f32 %v2538, %v2626
      %2628 = vmatmul.bf16.gmra.mxu0 %v2194
      %v2629 = vpop.f32.mrf.mxu0
      %v2630 = vadd.f32 %v2541, %v2629
      %v2631 = vpop.f32.mrf.mxu0
      %v2632 = vadd.f32 %v2543, %v2631
      %2633 = vmatmul.bf16.gmra.mxu0 %v2195
      %v2634 = vpop.f32.mrf.mxu0
      %v2635 = vadd.f32 %v2546, %v2634
      %v2636 = vpop.f32.mrf.mxu0
      %v2637 = vadd.f32 %v2548, %v2636
      %2638 = vmatmul.bf16.gmra.mxu0 %v2196
      %v2639 = vpop.f32.mrf.mxu0
      %v2640 = vadd.f32 %v2551, %v2639
      %v2641 = vpop.f32.mrf.mxu0
      %v2642 = vadd.f32 %v2553, %v2641
      %2643 = vmatmul.bf16.gmra.mxu0 %v2197
      %v2644 = vpop.f32.mrf.mxu0
      %v2645 = vadd.f32 %v2556, %v2644
      %v2646 = vpop.f32.mrf.mxu0
      %v2647 = vadd.f32 %v2558, %v2646
      %2648 = vdwg.mxu0
      %2649 = vmatpush.bf16.msra.mxu0 %v2446
      %2650 = vmatpush.bf16.msra.mxu0 %v2445
      %2651 = vmatpush.bf16.msra.mxu0 %v2444
      %2652 = vmatpush.bf16.msra.mxu0 %v2443
      %2653 = vmatpush.bf16.msra.mxu0 %v2442
      %2654 = vmatpush.bf16.msra.mxu0 %v2441
      %2655 = vmatpush.bf16.msra.mxu0 %v2440
      %2656 = vmatpush.bf16.msra.mxu0 %v2439
      %2657 = vmatmul.bf16.gmra.mxu0 %v2246
      %v2658 = vpop.f32.mrf.mxu0
      %v2659 = vadd.f32 %v2570, %v2658
      %v2660 = vpop.f32.mrf.mxu0
      %v2661 = vadd.f32 %v2572, %v2660
      %2662 = vmatmul.bf16.gmra.mxu0 %v2247
      %v2663 = vpop.f32.mrf.mxu0
      %v2664 = vadd.f32 %v2575, %v2663
      %v2665 = vpop.f32.mrf.mxu0
      %v2666 = vadd.f32 %v2577, %v2665
      %2667 = vmatmul.bf16.gmra.mxu0 %v2248
      %v2668 = vpop.f32.mrf.mxu0
      %v2669 = vadd.f32 %v2580, %v2668
      %v2670 = vpop.f32.mrf.mxu0
      %v2671 = vadd.f32 %v2582, %v2670
      %2672 = vmatmul.bf16.gmra.mxu0 %v2249
      %v2673 = vpop.f32.mrf.mxu0
      %v2674 = vadd.f32 %v2585, %v2673
      %v2675 = vpop.f32.mrf.mxu0
      %v2676 = vadd.f32 %v2587, %v2675
      %2677 = vmatmul.bf16.gmra.mxu0 %v2250
      %v2678 = vpop.f32.mrf.mxu0
      %v2679 = vadd.f32 %v2590, %v2678
      %v2680 = vpop.f32.mrf.mxu0
      %v2681 = vadd.f32 %v2592, %v2680
      %2682 = vmatmul.bf16.gmra.mxu0 %v2251
      %v2683 = vpop.f32.mrf.mxu0
      %v2684 = vadd.f32 %v2595, %v2683
      %v2685 = vpop.f32.mrf.mxu0
      %v2686 = vadd.f32 %v2597, %v2685
      %2687 = vmatmul.bf16.gmra.mxu0 %v2252
      %v2688 = vpop.f32.mrf.mxu0
      %v2689 = vadd.f32 %v2600, %v2688
      %v2690 = vpop.f32.mrf.mxu0
      %v2691 = vadd.f32 %v2602, %v2690
      %2692 = vmatmul.bf16.gmra.mxu0 %v2253
      %v2693 = vpop.f32.mrf.mxu0
      %v2694 = vadd.f32 %v2605, %v2693
      %v2695 = vpop.f32.mrf.mxu0
      %v2696 = vadd.f32 %v2607, %v2695
      %2697 = vmatmul.bf16.gmra.mxu0 %v2254
      %v2698 = vpop.f32.mrf.mxu0
      %v2699 = vadd.f32 %v2610, %v2698
      %v2700 = vpop.f32.mrf.mxu0
      %v2701 = vadd.f32 %v2612, %v2700
      %2702 = vmatmul.bf16.gmra.mxu0 %v2255
      %v2703 = vpop.f32.mrf.mxu0
      %v2704 = vadd.f32 %v2615, %v2703
      %v2705 = vpop.f32.mrf.mxu0
      %v2706 = vadd.f32 %v2617, %v2705
      %2707 = vmatmul.bf16.gmra.mxu0 %v2256
      %v2708 = vpop.f32.mrf.mxu0
      %v2709 = vadd.f32 %v2620, %v2708
      %v2710 = vpop.f32.mrf.mxu0
      %v2711 = vadd.f32 %v2622, %v2710
      %2712 = vmatmul.bf16.gmra.mxu0 %v2257
      %v2713 = vpop.f32.mrf.mxu0
      %v2714 = vadd.f32 %v2625, %v2713
      %v2715 = vpop.f32.mrf.mxu0
      %v2716 = vadd.f32 %v2627, %v2715
      %2717 = vmatmul.bf16.gmra.mxu0 %v2258
      %v2718 = vpop.f32.mrf.mxu0
      %v2719 = vadd.f32 %v2630, %v2718
      %v2720 = vpop.f32.mrf.mxu0
      %v2721 = vadd.f32 %v2632, %v2720
      %2722 = vmatmul.bf16.gmra.mxu0 %v2259
      %v2723 = vpop.f32.mrf.mxu0
      %v2724 = vadd.f32 %v2635, %v2723
      %v2725 = vpop.f32.mrf.mxu0
      %v2726 = vadd.f32 %v2637, %v2725
      %2727 = vmatmul.bf16.gmra.mxu0 %v2260
      %v2728 = vpop.f32.mrf.mxu0
      %v2729 = vadd.f32 %v2640, %v2728
      %v2730 = vpop.f32.mrf.mxu0
      %v2731 = vadd.f32 %v2642, %v2730
      %2732 = vmatmul.bf16.gmra.mxu0 %v2261
      %v2733 = vpop.f32.mrf.mxu0
      %v2734 = vadd.f32 %v2645, %v2733
      %v2735 = vpop.f32.mrf.mxu0
      %v2736 = vadd.f32 %v2647, %v2735
      %2737 = vdwg.mxu0
      %v2738 = vld [vmem:[#allocation2] sm:$0xff]
      %v2739 = vld [vmem:[#allocation2 + $0x8] sm:$0xff]
      %v2740 = vld [vmem:[#allocation2 + $0x10] sm:$0xff]
      %v2741 = vld [vmem:[#allocation2 + $0x18] sm:$0xff]
      %v2742 = vld [vmem:[#allocation2 + $0x20] sm:$0xff]
      %v2743 = vld [vmem:[#allocation2 + $0x28] sm:$0xff]
      %v2744 = vld [vmem:[#allocation2 + $0x30] sm:$0xff]
      %v2745 = vld [vmem:[#allocation2 + $0x38] sm:$0xff]
      %v2746 = vld [vmem:[#allocation2 + $0x40] sm:$0xff]
      %v2747 = vld [vmem:[#allocation2 + $0x48] sm:$0xff]
      %v2748 = vld [vmem:[#allocation2 + $0x50] sm:$0xff]
      %v2749 = vld [vmem:[#allocation2 + $0x58] sm:$0xff]
      %v2750 = vld [vmem:[#allocation2 + $0x60] sm:$0xff]
      %v2751 = vld [vmem:[#allocation2 + $0x68] sm:$0xff]
      %v2752 = vld [vmem:[#allocation2 + $0x70] sm:$0xff]
      %v2753 = vld [vmem:[#allocation2 + $0x78] sm:$0xff]
      %v2754 = vld [vmem:[#allocation2 + $0x80] sm:$0xff]
      %v2755 = vld [vmem:[#allocation2 + $0x88] sm:$0xff]
      %v2756 = vld [vmem:[#allocation2 + $0x90] sm:$0xff]
      %v2757 = vld [vmem:[#allocation2 + $0x98] sm:$0xff]
      %v2758 = vld [vmem:[#allocation2 + $0xa0] sm:$0xff]
      %v2759 = vld [vmem:[#allocation2 + $0xa8] sm:$0xff]
      %v2760 = vld [vmem:[#allocation2 + $0xb0] sm:$0xff]
      %v2761 = vld [vmem:[#allocation2 + $0xb8] sm:$0xff]
      %v2762 = vld [vmem:[#allocation2 + $0xc0] sm:$0xff]
      %v2763 = vld [vmem:[#allocation2 + $0xc8] sm:$0xff]
      %v2764 = vld [vmem:[#allocation2 + $0xd0] sm:$0xff]
      %v2765 = vld [vmem:[#allocation2 + $0xd8] sm:$0xff]
      %v2766 = vld [vmem:[#allocation2 + $0xe0] sm:$0xff]
      %v2767 = vld [vmem:[#allocation2 + $0xe8] sm:$0xff]
      %v2768 = vld [vmem:[#allocation2 + $0xf0] sm:$0xff]
      %v2769 = vld [vmem:[#allocation2 + $0xf8] sm:$0xff]
      %v2770 = vadd.f32 %v2738, %v2659
      %v2771 = vadd.f32 %v2739, %v2661
      %v2772 = vadd.f32 %v2740, %v2664
      %v2773 = vadd.f32 %v2741, %v2666
      %v2774 = vadd.f32 %v2742, %v2669
      %v2775 = vadd.f32 %v2743, %v2671
      %v2776 = vadd.f32 %v2744, %v2674
      %v2777 = vadd.f32 %v2745, %v2676
      %v2778 = vadd.f32 %v2746, %v2679
      %v2779 = vadd.f32 %v2747, %v2681
      %v2780 = vadd.f32 %v2748, %v2684
      %v2781 = vadd.f32 %v2749, %v2686
      %v2782 = vadd.f32 %v2750, %v2689
      %v2783 = vadd.f32 %v2751, %v2691
      %v2784 = vadd.f32 %v2752, %v2694
      %v2785 = vadd.f32 %v2753, %v2696
      %v2786 = vadd.f32 %v2754, %v2699
      %v2787 = vadd.f32 %v2755, %v2701
      %v2788 = vadd.f32 %v2756, %v2704
      %v2789 = vadd.f32 %v2757, %v2706
      %v2790 = vadd.f32 %v2758, %v2709
      %v2791 = vadd.f32 %v2759, %v2711
      %v2792 = vadd.f32 %v2760, %v2714
      %v2793 = vadd.f32 %v2761, %v2716
      %v2794 = vadd.f32 %v2762, %v2719
      %v2795 = vadd.f32 %v2763, %v2721
      %v2796 = vadd.f32 %v2764, %v2724
      %v2797 = vadd.f32 %v2765, %v2726
      %v2798 = vadd.f32 %v2766, %v2729
      %v2799 = vadd.f32 %v2767, %v2731
      %v2800 = vadd.f32 %v2768, %v2734
      %v2801 = vadd.f32 %v2769, %v2736
      %2802 = vst [vmem:[#allocation2] sm:$0xff] %v2770
      %2803 = vst [vmem:[#allocation2 + $0x8] sm:$0xff] %v2771
      %2804 = vst [vmem:[#allocation2 + $0x10] sm:$0xff] %v2772
      %2805 = vst [vmem:[#allocation2 + $0x18] sm:$0xff] %v2773
      %2806 = vst [vmem:[#allocation2 + $0x20] sm:$0xff] %v2774
      %2807 = vst [vmem:[#allocation2 + $0x28] sm:$0xff] %v2775
      %2808 = vst [vmem:[#allocation2 + $0x30] sm:$0xff] %v2776
      %2809 = vst [vmem:[#allocation2 + $0x38] sm:$0xff] %v2777
      %2810 = vst [vmem:[#allocation2 + $0x40] sm:$0xff] %v2778
      %2811 = vst [vmem:[#allocation2 + $0x48] sm:$0xff] %v2779
      %2812 = vst [vmem:[#allocation2 + $0x50] sm:$0xff] %v2780
      %2813 = vst [vmem:[#allocation2 + $0x58] sm:$0xff] %v2781
      %2814 = vst [vmem:[#allocation2 + $0x60] sm:$0xff] %v2782
      %2815 = vst [vmem:[#allocation2 + $0x68] sm:$0xff] %v2783
      %2816 = vst [vmem:[#allocation2 + $0x70] sm:$0xff] %v2784
      %2817 = vst [vmem:[#allocation2 + $0x78] sm:$0xff] %v2785
      %2818 = vst [vmem:[#allocation2 + $0x80] sm:$0xff] %v2786
      %2819 = vst [vmem:[#allocation2 + $0x88] sm:$0xff] %v2787
      %2820 = vst [vmem:[#allocation2 + $0x90] sm:$0xff] %v2788
      %2821 = vst [vmem:[#allocation2 + $0x98] sm:$0xff] %v2789
      %2822 = vst [vmem:[#allocation2 + $0xa0] sm:$0xff] %v2790
      %2823 = vst [vmem:[#allocation2 + $0xa8] sm:$0xff] %v2791
      %2824 = vst [vmem:[#allocation2 + $0xb0] sm:$0xff] %v2792
      %2825 = vst [vmem:[#allocation2 + $0xb8] sm:$0xff] %v2793
      %2826 = vst [vmem:[#allocation2 + $0xc0] sm:$0xff] %v2794
      %2827 = vst [vmem:[#allocation2 + $0xc8] sm:$0xff] %v2795
      %2828 = vst [vmem:[#allocation2 + $0xd0] sm:$0xff] %v2796
      %2829 = vst [vmem:[#allocation2 + $0xd8] sm:$0xff] %v2797
      %2830 = vst [vmem:[#allocation2 + $0xe0] sm:$0xff] %v2798
      %2831 = vst [vmem:[#allocation2 + $0xe8] sm:$0xff] %v2799
      %2832 = vst [vmem:[#allocation2 + $0xf0] sm:$0xff] %v2800
      %2833 = vst [vmem:[#allocation2 + $0xf8] sm:$0xff] %v2801
      %s2834 = sadd.s32 %s205, 2
      %s2835 = smul.u32 %s2834, 3
      %s2836 = smul.addr %s2835, 4
      %s2837 = scalar_lea.vmem %s190, %s2836
      %v2838 = vld [vmem:[%s2837] sm:$0xf]
      %v2839 = vld [vmem:[%s2837 + $0x4] sm:$0xf]
      %v2840 = vld [vmem:[%s2837 + $0x8] sm:$0x1]
      %v2841 = vld [vmem:[%s2837 + $0xc] sm:$0xf]
      %v2842 = vld [vmem:[%s2837 + $0x10] sm:$0xf]
      %v2843 = vld [vmem:[%s2837 + $0x14] sm:$0x1]
      %v2844 = vld [vmem:[%s2837 + $0x18] sm:$0xf]
      %v2845 = vld [vmem:[%s2837 + $0x1c] sm:$0xf]
      %v2846 = vld [vmem:[%s2837 + $0x20] sm:$0x1]
      %v2847 = vld [vmem:[%s2837 + $0x24] sm:$0xf]
      %v2848 = vld [vmem:[%s2837 + $0x28] sm:$0xf]
      %v2849 = vld [vmem:[%s2837 + $0x2c] sm:$0x1]
      %v2850 = vld [vmem:[%s2837 + $0x30] sm:$0xf]
      %v2851 = vld [vmem:[%s2837 + $0x34] sm:$0xf]
      %v2852 = vld [vmem:[%s2837 + $0x38] sm:$0x1]
      %v2853 = vld [vmem:[%s2837 + $0x3c] sm:$0xf]
      %v2854 = vld [vmem:[%s2837 + $0x40] sm:$0xf]
      %v2855 = vld [vmem:[%s2837 + $0x44] sm:$0x1]
      %v2856 = vld [vmem:[%s2837 + $0x48] sm:$0xf]
      %v2857 = vld [vmem:[%s2837 + $0x4c] sm:$0xf]
      %v2858 = vld [vmem:[%s2837 + $0x50] sm:$0x1]
      %v2859 = vld [vmem:[%s2837 + $0x54] sm:$0xf]
      %v2860 = vld [vmem:[%s2837 + $0x58] sm:$0xf]
      %v2861 = vld [vmem:[%s2837 + $0x5c] sm:$0x1]
      %v2862 = vld [vmem:[%s2837 + $0x60] sm:$0xf]
      %v2863 = vld [vmem:[%s2837 + $0x64] sm:$0xf]
      %v2864 = vld [vmem:[%s2837 + $0x68] sm:$0x1]
      %v2865 = vld [vmem:[%s2837 + $0x6c] sm:$0xf]
      %v2866 = vld [vmem:[%s2837 + $0x70] sm:$0xf]
      %v2867 = vld [vmem:[%s2837 + $0x74] sm:$0x1]
      %v2868 = vld [vmem:[%s2837 + $0x78] sm:$0xf]
      %v2869 = vld [vmem:[%s2837 + $0x7c] sm:$0xf]
      %v2870 = vld [vmem:[%s2837 + $0x80] sm:$0x1]
      %v2871 = vld [vmem:[%s2837 + $0x84] sm:$0xf]
      %v2872 = vld [vmem:[%s2837 + $0x88] sm:$0xf]
      %v2873 = vld [vmem:[%s2837 + $0x8c] sm:$0x1]
      %v2874 = vld [vmem:[%s2837 + $0x90] sm:$0xf]
      %v2875 = vld [vmem:[%s2837 + $0x94] sm:$0xf]
      %v2876 = vld [vmem:[%s2837 + $0x98] sm:$0x1]
      %v2877 = vld [vmem:[%s2837 + $0x9c] sm:$0xf]
      %v2878 = vld [vmem:[%s2837 + $0xa0] sm:$0xf]
      %v2879 = vld [vmem:[%s2837 + $0xa4] sm:$0x1]
      %v2880 = vld [vmem:[%s2837 + $0xa8] sm:$0xf]
      %v2881 = vld [vmem:[%s2837 + $0xac] sm:$0xf]
      %v2882 = vld [vmem:[%s2837 + $0xb0] sm:$0x1]
      %v2883 = vld [vmem:[%s2837 + $0xb4] sm:$0xf]
      %v2884 = vld [vmem:[%s2837 + $0xb8] sm:$0xf]
      %v2885 = vld [vmem:[%s2837 + $0xbc] sm:$0x1]
      %v2887 = vshrl.u32 %v2838, 16
      %v2889 = vrot.slane %v2887, 4
      %v2890 = vshll.u32 %v2838, 16
      %v2892 = vrot.slane %v2890, 5
      %v2893 = vor.u32 %v2889, %v2892
      %v2894 = vrot.slane %v2893, 4
      %v2896 = vshll.u32 %v2839, 16
      %v2898 = vrot.slane %v2896, 5
      %v2899 = vsel %vm259, %v2894, %v2898
      %v2900 = vshrl.u32 %v2839, 16
      %v2902 = vrot.slane %v2900, 4
      %v2903 = vor.u32 %v2902, %v2898
      %v2904 = vrot.slane %v2903, 4
      %v2906 = vshll.u32 %v2840, 16
      %v2908 = vrot.slane %v2906, 5
      %v2909 = vsel %vm259, %v2904, %v2908
      %v2911 = vshrl.u32 %v2841, 16
      %v2913 = vrot.slane %v2911, 4
      %v2914 = vshll.u32 %v2841, 16
      %v2916 = vrot.slane %v2914, 5
      %v2917 = vor.u32 %v2913, %v2916
      %v2918 = vrot.slane %v2917, 4
      %v2920 = vshll.u32 %v2842, 16
      %v2922 = vrot.slane %v2920, 5
      %v2923 = vsel %vm259, %v2918, %v2922
      %v2924 = vshrl.u32 %v2842, 16
      %v2926 = vrot.slane %v2924, 4
      %v2927 = vor.u32 %v2926, %v2922
      %v2928 = vrot.slane %v2927, 4
      %v2930 = vshll.u32 %v2843, 16
      %v2932 = vrot.slane %v2930, 5
      %v2933 = vsel %vm259, %v2928, %v2932
      %v2935 = vshrl.u32 %v2844, 16
      %v2937 = vrot.slane %v2935, 4
      %v2938 = vshll.u32 %v2844, 16
      %v2940 = vrot.slane %v2938, 5
      %v2941 = vor.u32 %v2937, %v2940
      %v2942 = vrot.slane %v2941, 4
      %v2944 = vshll.u32 %v2845, 16
      %v2946 = vrot.slane %v2944, 5
      %v2947 = vsel %vm259, %v2942, %v2946
      %v2948 = vshrl.u32 %v2845, 16
      %v2950 = vrot.slane %v2948, 4
      %v2951 = vor.u32 %v2950, %v2946
      %v2952 = vrot.slane %v2951, 4
      %v2954 = vshll.u32 %v2846, 16
      %v2956 = vrot.slane %v2954, 5
      %v2957 = vsel %vm259, %v2952, %v2956
      %v2959 = vshrl.u32 %v2847, 16
      %v2961 = vrot.slane %v2959, 4
      %v2962 = vshll.u32 %v2847, 16
      %v2964 = vrot.slane %v2962, 5
      %v2965 = vor.u32 %v2961, %v2964
      %v2966 = vrot.slane %v2965, 4
      %v2968 = vshll.u32 %v2848, 16
      %v2970 = vrot.slane %v2968, 5
      %v2971 = vsel %vm259, %v2966, %v2970
      %v2972 = vshrl.u32 %v2848, 16
      %v2974 = vrot.slane %v2972, 4
      %v2975 = vor.u32 %v2974, %v2970
      %v2976 = vrot.slane %v2975, 4
      %v2978 = vshll.u32 %v2849, 16
      %v2980 = vrot.slane %v2978, 5
      %v2981 = vsel %vm259, %v2976, %v2980
      %v2983 = vshrl.u32 %v2850, 16
      %v2985 = vrot.slane %v2983, 4
      %v2986 = vshll.u32 %v2850, 16
      %v2988 = vrot.slane %v2986, 5
      %v2989 = vor.u32 %v2985, %v2988
      %v2990 = vrot.slane %v2989, 4
      %v2992 = vshll.u32 %v2851, 16
      %v2994 = vrot.slane %v2992, 5
      %v2995 = vsel %vm259, %v2990, %v2994
      %v2996 = vshrl.u32 %v2851, 16
      %v2998 = vrot.slane %v2996, 4
      %v2999 = vor.u32 %v2998, %v2994
      %v3000 = vrot.slane %v2999, 4
      %v3002 = vshll.u32 %v2852, 16
      %v3004 = vrot.slane %v3002, 5
      %v3005 = vsel %vm259, %v3000, %v3004
      %v3007 = vshrl.u32 %v2853, 16
      %v3009 = vrot.slane %v3007, 4
      %v3010 = vshll.u32 %v2853, 16
      %v3012 = vrot.slane %v3010, 5
      %v3013 = vor.u32 %v3009, %v3012
      %v3014 = vrot.slane %v3013, 4
      %v3016 = vshll.u32 %v2854, 16
      %v3018 = vrot.slane %v3016, 5
      %v3019 = vsel %vm259, %v3014, %v3018
      %v3020 = vshrl.u32 %v2854, 16
      %v3022 = vrot.slane %v3020, 4
      %v3023 = vor.u32 %v3022, %v3018
      %v3024 = vrot.slane %v3023, 4
      %v3026 = vshll.u32 %v2855, 16
      %v3028 = vrot.slane %v3026, 5
      %v3029 = vsel %vm259, %v3024, %v3028
      %v3031 = vshrl.u32 %v2856, 16
      %v3033 = vrot.slane %v3031, 4
      %v3034 = vshll.u32 %v2856, 16
      %v3036 = vrot.slane %v3034, 5
      %v3037 = vor.u32 %v3033, %v3036
      %v3038 = vrot.slane %v3037, 4
      %v3040 = vshll.u32 %v2857, 16
      %v3042 = vrot.slane %v3040, 5
      %v3043 = vsel %vm259, %v3038, %v3042
      %v3044 = vshrl.u32 %v2857, 16
      %v3046 = vrot.slane %v3044, 4
      %v3047 = vor.u32 %v3046, %v3042
      %v3048 = vrot.slane %v3047, 4
      %v3050 = vshll.u32 %v2858, 16
      %v3052 = vrot.slane %v3050, 5
      %v3053 = vsel %vm259, %v3048, %v3052
      %v3055 = vshrl.u32 %v2859, 16
      %v3057 = vrot.slane %v3055, 4
      %v3058 = vshll.u32 %v2859, 16
      %v3060 = vrot.slane %v3058, 5
      %v3061 = vor.u32 %v3057, %v3060
      %v3062 = vrot.slane %v3061, 4
      %v3064 = vshll.u32 %v2860, 16
      %v3066 = vrot.slane %v3064, 5
      %v3067 = vsel %vm259, %v3062, %v3066
      %v3068 = vshrl.u32 %v2860, 16
      %v3070 = vrot.slane %v3068, 4
      %v3071 = vor.u32 %v3070, %v3066
      %v3072 = vrot.slane %v3071, 4
      %v3074 = vshll.u32 %v2861, 16
      %v3076 = vrot.slane %v3074, 5
      %v3077 = vsel %vm259, %v3072, %v3076
      %v3079 = vshrl.u32 %v2862, 16
      %v3081 = vrot.slane %v3079, 4
      %v3082 = vshll.u32 %v2862, 16
      %v3084 = vrot.slane %v3082, 5
      %v3085 = vor.u32 %v3081, %v3084
      %v3086 = vrot.slane %v3085, 4
      %v3088 = vshll.u32 %v2863, 16
      %v3090 = vrot.slane %v3088, 5
      %v3091 = vsel %vm259, %v3086, %v3090
      %v3092 = vshrl.u32 %v2863, 16
      %v3094 = vrot.slane %v3092, 4
      %v3095 = vor.u32 %v3094, %v3090
      %v3096 = vrot.slane %v3095, 4
      %v3098 = vshll.u32 %v2864, 16
      %v3100 = vrot.slane %v3098, 5
      %v3101 = vsel %vm259, %v3096, %v3100
      %v3103 = vshrl.u32 %v2865, 16
      %v3105 = vrot.slane %v3103, 4
      %v3106 = vshll.u32 %v2865, 16
      %v3108 = vrot.slane %v3106, 5
      %v3109 = vor.u32 %v3105, %v3108
      %v3110 = vrot.slane %v3109, 4
      %v3112 = vshll.u32 %v2866, 16
      %v3114 = vrot.slane %v3112, 5
      %v3115 = vsel %vm259, %v3110, %v3114
      %v3116 = vshrl.u32 %v2866, 16
      %v3118 = vrot.slane %v3116, 4
      %v3119 = vor.u32 %v3118, %v3114
      %v3120 = vrot.slane %v3119, 4
      %v3122 = vshll.u32 %v2867, 16
      %v3124 = vrot.slane %v3122, 5
      %v3125 = vsel %vm259, %v3120, %v3124
      %v3127 = vshrl.u32 %v2868, 16
      %v3129 = vrot.slane %v3127, 4
      %v3130 = vshll.u32 %v2868, 16
      %v3132 = vrot.slane %v3130, 5
      %v3133 = vor.u32 %v3129, %v3132
      %v3134 = vrot.slane %v3133, 4
      %v3136 = vshll.u32 %v2869, 16
      %v3138 = vrot.slane %v3136, 5
      %v3139 = vsel %vm259, %v3134, %v3138
      %v3140 = vshrl.u32 %v2869, 16
      %v3142 = vrot.slane %v3140, 4
      %v3143 = vor.u32 %v3142, %v3138
      %v3144 = vrot.slane %v3143, 4
      %v3146 = vshll.u32 %v2870, 16
      %v3148 = vrot.slane %v3146, 5
      %v3149 = vsel %vm259, %v3144, %v3148
      %v3151 = vshrl.u32 %v2871, 16
      %v3153 = vrot.slane %v3151, 4
      %v3154 = vshll.u32 %v2871, 16
      %v3156 = vrot.slane %v3154, 5
      %v3157 = vor.u32 %v3153, %v3156
      %v3158 = vrot.slane %v3157, 4
      %v3160 = vshll.u32 %v2872, 16
      %v3162 = vrot.slane %v3160, 5
      %v3163 = vsel %vm259, %v3158, %v3162
      %v3164 = vshrl.u32 %v2872, 16
      %v3166 = vrot.slane %v3164, 4
      %v3167 = vor.u32 %v3166, %v3162
      %v3168 = vrot.slane %v3167, 4
      %v3170 = vshll.u32 %v2873, 16
      %v3172 = vrot.slane %v3170, 5
      %v3173 = vsel %vm259, %v3168, %v3172
      %v3175 = vshrl.u32 %v2874, 16
      %v3177 = vrot.slane %v3175, 4
      %v3178 = vshll.u32 %v2874, 16
      %v3180 = vrot.slane %v3178, 5
      %v3181 = vor.u32 %v3177, %v3180
      %v3182 = vrot.slane %v3181, 4
      %v3184 = vshll.u32 %v2875, 16
      %v3186 = vrot.slane %v3184, 5
      %v3187 = vsel %vm259, %v3182, %v3186
      %v3188 = vshrl.u32 %v2875, 16
      %v3190 = vrot.slane %v3188, 4
      %v3191 = vor.u32 %v3190, %v3186
      %v3192 = vrot.slane %v3191, 4
      %v3194 = vshll.u32 %v2876, 16
      %v3196 = vrot.slane %v3194, 5
      %v3197 = vsel %vm259, %v3192, %v3196
      %v3199 = vshrl.u32 %v2877, 16
      %v3201 = vrot.slane %v3199, 4
      %v3202 = vshll.u32 %v2877, 16
      %v3204 = vrot.slane %v3202, 5
      %v3205 = vor.u32 %v3201, %v3204
      %v3206 = vrot.slane %v3205, 4
      %v3208 = vshll.u32 %v2878, 16
      %v3210 = vrot.slane %v3208, 5
      %v3211 = vsel %vm259, %v3206, %v3210
      %v3212 = vshrl.u32 %v2878, 16
      %v3214 = vrot.slane %v3212, 4
      %v3215 = vor.u32 %v3214, %v3210
      %v3216 = vrot.slane %v3215, 4
      %v3218 = vshll.u32 %v2879, 16
      %v3220 = vrot.slane %v3218, 5
      %v3221 = vsel %vm259, %v3216, %v3220
      %v3223 = vshrl.u32 %v2880, 16
      %v3225 = vrot.slane %v3223, 4
      %v3226 = vshll.u32 %v2880, 16
      %v3228 = vrot.slane %v3226, 5
      %v3229 = vor.u32 %v3225, %v3228
      %v3230 = vrot.slane %v3229, 4
      %v3232 = vshll.u32 %v2881, 16
      %v3234 = vrot.slane %v3232, 5
      %v3235 = vsel %vm259, %v3230, %v3234
      %v3236 = vshrl.u32 %v2881, 16
      %v3238 = vrot.slane %v3236, 4
      %v3239 = vor.u32 %v3238, %v3234
      %v3240 = vrot.slane %v3239, 4
      %v3242 = vshll.u32 %v2882, 16
      %v3244 = vrot.slane %v3242, 5
      %v3245 = vsel %vm259, %v3240, %v3244
      %v3247 = vshrl.u32 %v2883, 16
      %v3249 = vrot.slane %v3247, 4
      %v3250 = vshll.u32 %v2883, 16
      %v3252 = vrot.slane %v3250, 5
      %v3253 = vor.u32 %v3249, %v3252
      %v3254 = vrot.slane %v3253, 4
      %v3256 = vshll.u32 %v2884, 16
      %v3258 = vrot.slane %v3256, 5
      %v3259 = vsel %vm259, %v3254, %v3258
      %v3260 = vshrl.u32 %v2884, 16
      %v3262 = vrot.slane %v3260, 4
      %v3263 = vor.u32 %v3262, %v3258
      %v3264 = vrot.slane %v3263, 4
      %v3266 = vshll.u32 %v2885, 16
      %v3268 = vrot.slane %v3266, 5
      %v3269 = vsel %vm259, %v3264, %v3268
      %v3318 = vrot.slane %v2838, 5
      %v3319 = vrot.slane %v3318, 4
      %v3320 = vrot.slane %v2839, 5
      %v3321 = vsel %vm694, %v3319, %v3320
      %v3322 = vrot.slane %v3320, 4
      %v3323 = vrot.slane %v2840, 5
      %v3324 = vsel %vm694, %v3322, %v3323
      %v3325 = vrot.slane %v2841, 5
      %v3326 = vrot.slane %v3325, 4
      %v3327 = vrot.slane %v2842, 5
      %v3328 = vsel %vm694, %v3326, %v3327
      %v3329 = vrot.slane %v3327, 4
      %v3330 = vrot.slane %v2843, 5
      %v3331 = vsel %vm694, %v3329, %v3330
      %v3332 = vrot.slane %v2844, 5
      %v3333 = vrot.slane %v3332, 4
      %v3334 = vrot.slane %v2845, 5
      %v3335 = vsel %vm694, %v3333, %v3334
      %v3336 = vrot.slane %v3334, 4
      %v3337 = vrot.slane %v2846, 5
      %v3338 = vsel %vm694, %v3336, %v3337
      %v3339 = vrot.slane %v2847, 5
      %v3340 = vrot.slane %v3339, 4
      %v3341 = vrot.slane %v2848, 5
      %v3342 = vsel %vm694, %v3340, %v3341
      %v3343 = vrot.slane %v3341, 4
      %v3344 = vrot.slane %v2849, 5
      %v3345 = vsel %vm694, %v3343, %v3344
      %v3346 = vrot.slane %v2850, 5
      %v3347 = vrot.slane %v3346, 4
      %v3348 = vrot.slane %v2851, 5
      %v3349 = vsel %vm694, %v3347, %v3348
      %v3350 = vrot.slane %v3348, 4
      %v3351 = vrot.slane %v2852, 5
      %v3352 = vsel %vm694, %v3350, %v3351
      %v3353 = vrot.slane %v2853, 5
      %v3354 = vrot.slane %v3353, 4
      %v3355 = vrot.slane %v2854, 5
      %v3356 = vsel %vm694, %v3354, %v3355
      %v3357 = vrot.slane %v3355, 4
      %v3358 = vrot.slane %v2855, 5
      %v3359 = vsel %vm694, %v3357, %v3358
      %v3360 = vrot.slane %v2856, 5
      %v3361 = vrot.slane %v3360, 4
      %v3362 = vrot.slane %v2857, 5
      %v3363 = vsel %vm694, %v3361, %v3362
      %v3364 = vrot.slane %v3362, 4
      %v3365 = vrot.slane %v2858, 5
      %v3366 = vsel %vm694, %v3364, %v3365
      %v3367 = vrot.slane %v2859, 5
      %v3368 = vrot.slane %v3367, 4
      %v3369 = vrot.slane %v2860, 5
      %v3370 = vsel %vm694, %v3368, %v3369
      %v3371 = vrot.slane %v3369, 4
      %v3372 = vrot.slane %v2861, 5
      %v3373 = vsel %vm694, %v3371, %v3372
      %v3374 = vrot.slane %v2862, 5
      %v3375 = vrot.slane %v3374, 4
      %v3376 = vrot.slane %v2863, 5
      %v3377 = vsel %vm694, %v3375, %v3376
      %v3378 = vrot.slane %v3376, 4
      %v3379 = vrot.slane %v2864, 5
      %v3380 = vsel %vm694, %v3378, %v3379
      %v3381 = vrot.slane %v2865, 5
      %v3382 = vrot.slane %v3381, 4
      %v3383 = vrot.slane %v2866, 5
      %v3384 = vsel %vm694, %v3382, %v3383
      %v3385 = vrot.slane %v3383, 4
      %v3386 = vrot.slane %v2867, 5
      %v3387 = vsel %vm694, %v3385, %v3386
      %v3388 = vrot.slane %v2868, 5
      %v3389 = vrot.slane %v3388, 4
      %v3390 = vrot.slane %v2869, 5
      %v3391 = vsel %vm694, %v3389, %v3390
      %v3392 = vrot.slane %v3390, 4
      %v3393 = vrot.slane %v2870, 5
      %v3394 = vsel %vm694, %v3392, %v3393
      %v3395 = vrot.slane %v2871, 5
      %v3396 = vrot.slane %v3395, 4
      %v3397 = vrot.slane %v2872, 5
      %v3398 = vsel %vm694, %v3396, %v3397
      %v3399 = vrot.slane %v3397, 4
      %v3400 = vrot.slane %v2873, 5
      %v3401 = vsel %vm694, %v3399, %v3400
      %v3402 = vrot.slane %v2874, 5
      %v3403 = vrot.slane %v3402, 4
      %v3404 = vrot.slane %v2875, 5
      %v3405 = vsel %vm694, %v3403, %v3404
      %v3406 = vrot.slane %v3404, 4
      %v3407 = vrot.slane %v2876, 5
      %v3408 = vsel %vm694, %v3406, %v3407
      %v3409 = vrot.slane %v2877, 5
      %v3410 = vrot.slane %v3409, 4
      %v3411 = vrot.slane %v2878, 5
      %v3412 = vsel %vm694, %v3410, %v3411
      %v3413 = vrot.slane %v3411, 4
      %v3414 = vrot.slane %v2879, 5
      %v3415 = vsel %vm694, %v3413, %v3414
      %v3416 = vrot.slane %v2880, 5
      %v3417 = vrot.slane %v3416, 4
      %v3418 = vrot.slane %v2881, 5
      %v3419 = vsel %vm694, %v3417, %v3418
      %v3420 = vrot.slane %v3418, 4
      %v3421 = vrot.slane %v2882, 5
      %v3422 = vsel %vm694, %v3420, %v3421
      %v3423 = vrot.slane %v2883, 5
      %v3424 = vrot.slane %v3423, 4
      %v3425 = vrot.slane %v2884, 5
      %v3426 = vsel %vm694, %v3424, %v3425
      %v3427 = vrot.slane %v3425, 4
      %v3428 = vrot.slane %v2885, 5
      %v3429 = vsel %vm694, %v3427, %v3428
      %v3430 = vunpack.c.l.b16 %v2838
      %v3431 = vunpack.c.l.b16 %v2839
      %v3432 = vunpack.c.l.b16 %v2841
      %v3433 = vunpack.c.l.b16 %v2842
      %v3434 = vunpack.c.l.b16 %v2844
      %v3435 = vunpack.c.l.b16 %v2845
      %v3436 = vunpack.c.l.b16 %v2847
      %v3437 = vunpack.c.l.b16 %v2848
      %v3438 = vunpack.c.l.b16 %v2850
      %v3439 = vunpack.c.l.b16 %v2851
      %v3440 = vunpack.c.l.b16 %v2853
      %v3441 = vunpack.c.l.b16 %v2854
      %v3442 = vunpack.c.l.b16 %v2856
      %v3443 = vunpack.c.l.b16 %v2857
      %v3444 = vunpack.c.l.b16 %v2859
      %v3445 = vunpack.c.l.b16 %v2860
      %v3446 = vunpack.c.l.b16 %v2862
      %v3447 = vunpack.c.l.b16 %v2863
      %v3448 = vunpack.c.l.b16 %v2865
      %v3449 = vunpack.c.l.b16 %v2866
      %v3450 = vunpack.c.l.b16 %v2868
      %v3451 = vunpack.c.l.b16 %v2869
      %v3452 = vunpack.c.l.b16 %v2871
      %v3453 = vunpack.c.l.b16 %v2872
      %v3454 = vunpack.c.l.b16 %v2874
      %v3455 = vunpack.c.l.b16 %v2875
      %v3456 = vunpack.c.l.b16 %v2877
      %v3457 = vunpack.c.l.b16 %v2878
      %v3458 = vunpack.c.l.b16 %v2880
      %v3459 = vunpack.c.l.b16 %v2881
      %v3460 = vunpack.c.l.b16 %v2883
      %v3461 = vunpack.c.l.b16 %v2884
      %v3462 = vpack.c.b16 %v3431, %v3430
      %v3463 = vpack.c.b16 %v3433, %v3432
      %v3464 = vpack.c.b16 %v3435, %v3434
      %v3465 = vpack.c.b16 %v3437, %v3436
      %v3466 = vpack.c.b16 %v3439, %v3438
      %v3467 = vpack.c.b16 %v3441, %v3440
      %v3468 = vpack.c.b16 %v3443, %v3442
      %v3469 = vpack.c.b16 %v3445, %v3444
      %v3470 = vpack.c.b16 %v3447, %v3446
      %v3471 = vpack.c.b16 %v3449, %v3448
      %v3472 = vpack.c.b16 %v3451, %v3450
      %v3473 = vpack.c.b16 %v3453, %v3452
      %v3474 = vpack.c.b16 %v3455, %v3454
      %v3475 = vpack.c.b16 %v3457, %v3456
      %v3476 = vpack.c.b16 %v3459, %v3458
      %v3477 = vpack.c.b16 %v3461, %v3460
      %v3494 = vunpack.c.l.b16 %v2899
      %v3495 = vunpack.c.l.b16 %v2909
      %v3496 = vunpack.c.l.b16 %v2923
      %v3497 = vunpack.c.l.b16 %v2933
      %v3498 = vunpack.c.l.b16 %v2947
      %v3499 = vunpack.c.l.b16 %v2957
      %v3500 = vunpack.c.l.b16 %v2971
      %v3501 = vunpack.c.l.b16 %v2981
      %v3502 = vunpack.c.l.b16 %v2995
      %v3503 = vunpack.c.l.b16 %v3005
      %v3504 = vunpack.c.l.b16 %v3019
      %v3505 = vunpack.c.l.b16 %v3029
      %v3506 = vunpack.c.l.b16 %v3043
      %v3507 = vunpack.c.l.b16 %v3053
      %v3508 = vunpack.c.l.b16 %v3067
      %v3509 = vunpack.c.l.b16 %v3077
      %v3510 = vunpack.c.l.b16 %v3091
      %v3511 = vunpack.c.l.b16 %v3101
      %v3512 = vunpack.c.l.b16 %v3115
      %v3513 = vunpack.c.l.b16 %v3125
      %v3514 = vunpack.c.l.b16 %v3139
      %v3515 = vunpack.c.l.b16 %v3149
      %v3516 = vunpack.c.l.b16 %v3163
      %v3517 = vunpack.c.l.b16 %v3173
      %v3518 = vunpack.c.l.b16 %v3187
      %v3519 = vunpack.c.l.b16 %v3197
      %v3520 = vunpack.c.l.b16 %v3211
      %v3521 = vunpack.c.l.b16 %v3221
      %v3522 = vunpack.c.l.b16 %v3235
      %v3523 = vunpack.c.l.b16 %v3245
      %v3524 = vunpack.c.l.b16 %v3259
      %v3525 = vunpack.c.l.b16 %v3269
      %v3526 = vpack.c.b16 %v3495, %v3494
      %v3527 = vpack.c.b16 %v3497, %v3496
      %v3528 = vpack.c.b16 %v3499, %v3498
      %v3529 = vpack.c.b16 %v3501, %v3500
      %v3530 = vpack.c.b16 %v3503, %v3502
      %v3531 = vpack.c.b16 %v3505, %v3504
      %v3532 = vpack.c.b16 %v3507, %v3506
      %v3533 = vpack.c.b16 %v3509, %v3508
      %v3534 = vpack.c.b16 %v3511, %v3510
      %v3535 = vpack.c.b16 %v3513, %v3512
      %v3536 = vpack.c.b16 %v3515, %v3514
      %v3537 = vpack.c.b16 %v3517, %v3516
      %v3538 = vpack.c.b16 %v3519, %v3518
      %v3539 = vpack.c.b16 %v3521, %v3520
      %v3540 = vpack.c.b16 %v3523, %v3522
      %v3541 = vpack.c.b16 %v3525, %v3524
      %v3558 = vunpack.c.l.b16 %v3321
      %v3559 = vunpack.c.l.b16 %v3324
      %v3560 = vunpack.c.l.b16 %v3328
      %v3561 = vunpack.c.l.b16 %v3331
      %v3562 = vunpack.c.l.b16 %v3335
      %v3563 = vunpack.c.l.b16 %v3338
      %v3564 = vunpack.c.l.b16 %v3342
      %v3565 = vunpack.c.l.b16 %v3345
      %v3566 = vunpack.c.l.b16 %v3349
      %v3567 = vunpack.c.l.b16 %v3352
      %v3568 = vunpack.c.l.b16 %v3356
      %v3569 = vunpack.c.l.b16 %v3359
      %v3570 = vunpack.c.l.b16 %v3363
      %v3571 = vunpack.c.l.b16 %v3366
      %v3572 = vunpack.c.l.b16 %v3370
      %v3573 = vunpack.c.l.b16 %v3373
      %v3574 = vunpack.c.l.b16 %v3377
      %v3575 = vunpack.c.l.b16 %v3380
      %v3576 = vunpack.c.l.b16 %v3384
      %v3577 = vunpack.c.l.b16 %v3387
      %v3578 = vunpack.c.l.b16 %v3391
      %v3579 = vunpack.c.l.b16 %v3394
      %v3580 = vunpack.c.l.b16 %v3398
      %v3581 = vunpack.c.l.b16 %v3401
      %v3582 = vunpack.c.l.b16 %v3405
      %v3583 = vunpack.c.l.b16 %v3408
      %v3584 = vunpack.c.l.b16 %v3412
      %v3585 = vunpack.c.l.b16 %v3415
      %v3586 = vunpack.c.l.b16 %v3419
      %v3587 = vunpack.c.l.b16 %v3422
      %v3588 = vunpack.c.l.b16 %v3426
      %v3589 = vunpack.c.l.b16 %v3429
      %v3590 = vpack.c.b16 %v3559, %v3558
      %v3591 = vpack.c.b16 %v3561, %v3560
      %v3592 = vpack.c.b16 %v3563, %v3562
      %v3593 = vpack.c.b16 %v3565, %v3564
      %v3594 = vpack.c.b16 %v3567, %v3566
      %v3595 = vpack.c.b16 %v3569, %v3568
      %v3596 = vpack.c.b16 %v3571, %v3570
      %v3597 = vpack.c.b16 %v3573, %v3572
      %v3598 = vpack.c.b16 %v3575, %v3574
      %v3599 = vpack.c.b16 %v3577, %v3576
      %v3600 = vpack.c.b16 %v3579, %v3578
      %v3601 = vpack.c.b16 %v3581, %v3580
      %v3602 = vpack.c.b16 %v3583, %v3582
      %v3603 = vpack.c.b16 %v3585, %v3584
      %v3604 = vpack.c.b16 %v3587, %v3586
      %v3605 = vpack.c.b16 %v3589, %v3588
      %s3622 = scalar_lea.vmem %s1, 384
      %v3623 = vld [vmem:[%s3622] sm:$0xf]
      %v3624 = vld [vmem:[%s3622 + $0x4] sm:$0xf]
      %v3625 = vld [vmem:[%s3622 + $0x8] sm:$0xf]
      %v3626 = vld [vmem:[%s3622 + $0xc] sm:$0xf]
      %v3627 = vld [vmem:[%s3622 + $0x10] sm:$0xf]
      %v3628 = vld [vmem:[%s3622 + $0x14] sm:$0xf]
      %v3629 = vld [vmem:[%s3622 + $0x18] sm:$0xf]
      %v3630 = vld [vmem:[%s3622 + $0x1c] sm:$0xf]
      %v3631 = vld [vmem:[%s3622 + $0x20] sm:$0xf]
      %v3632 = vld [vmem:[%s3622 + $0x24] sm:$0xf]
      %v3633 = vld [vmem:[%s3622 + $0x28] sm:$0xf]
      %v3634 = vld [vmem:[%s3622 + $0x2c] sm:$0xf]
      %v3635 = vld [vmem:[%s3622 + $0x30] sm:$0xf]
      %v3636 = vld [vmem:[%s3622 + $0x34] sm:$0xf]
      %v3637 = vld [vmem:[%s3622 + $0x38] sm:$0xf]
      %v3638 = vld [vmem:[%s3622 + $0x3c] sm:$0xf]
      %v3639 = vld [vmem:[%s3622 + $0x40] sm:$0xf]
      %v3640 = vld [vmem:[%s3622 + $0x44] sm:$0xf]
      %v3641 = vld [vmem:[%s3622 + $0x48] sm:$0xf]
      %v3642 = vld [vmem:[%s3622 + $0x4c] sm:$0xf]
      %v3643 = vld [vmem:[%s3622 + $0x50] sm:$0xf]
      %v3644 = vld [vmem:[%s3622 + $0x54] sm:$0xf]
      %v3645 = vld [vmem:[%s3622 + $0x58] sm:$0xf]
      %v3646 = vld [vmem:[%s3622 + $0x5c] sm:$0xf]
      %v3647 = vld [vmem:[%s3622 + $0x60] sm:$0xf]
      %v3648 = vld [vmem:[%s3622 + $0x64] sm:$0xf]
      %v3649 = vld [vmem:[%s3622 + $0x68] sm:$0xf]
      %v3650 = vld [vmem:[%s3622 + $0x6c] sm:$0xf]
      %v3651 = vld [vmem:[%s3622 + $0x70] sm:$0xf]
      %v3652 = vld [vmem:[%s3622 + $0x74] sm:$0xf]
      %v3653 = vld [vmem:[%s3622 + $0x78] sm:$0xf]
      %v3654 = vld [vmem:[%s3622 + $0x7c] sm:$0xf]
      %v3655 = vld [vmem:[%s3622 + $0x80] sm:$0xf]
      %v3656 = vld [vmem:[%s3622 + $0x84] sm:$0xf]
      %v3657 = vld [vmem:[%s3622 + $0x88] sm:$0xf]
      %v3658 = vld [vmem:[%s3622 + $0x8c] sm:$0xf]
      %v3659 = vld [vmem:[%s3622 + $0x90] sm:$0xf]
      %v3660 = vld [vmem:[%s3622 + $0x94] sm:$0xf]
      %v3661 = vld [vmem:[%s3622 + $0x98] sm:$0xf]
      %v3662 = vld [vmem:[%s3622 + $0x9c] sm:$0xf]
      %v3663 = vld [vmem:[%s3622 + $0xa0] sm:$0xf]
      %v3664 = vld [vmem:[%s3622 + $0xa4] sm:$0xf]
      %v3665 = vld [vmem:[%s3622 + $0xa8] sm:$0xf]
      %v3666 = vld [vmem:[%s3622 + $0xac] sm:$0xf]
      %v3667 = vld [vmem:[%s3622 + $0xb0] sm:$0xf]
      %v3668 = vld [vmem:[%s3622 + $0xb4] sm:$0xf]
      %v3669 = vld [vmem:[%s3622 + $0xb8] sm:$0xf]
      %v3670 = vld [vmem:[%s3622 + $0xbc] sm:$0xf]
      %v3719 = vunpack.c.l.b16 %v3623
      %v3720 = vunpack.c.l.b16 %v3624
      %v3721 = vunpack.c.l.b16 %v3625
      %v3722 = vunpack.c.l.b16 %v3626
      %v3723 = vunpack.c.l.b16 %v3627
      %v3724 = vunpack.c.l.b16 %v3628
      %v3725 = vunpack.c.l.b16 %v3629
      %v3726 = vunpack.c.l.b16 %v3630
      %v3727 = vunpack.c.l.b16 %v3631
      %v3728 = vunpack.c.l.b16 %v3632
      %v3729 = vunpack.c.l.b16 %v3633
      %v3730 = vunpack.c.l.b16 %v3634
      %v3731 = vunpack.c.l.b16 %v3635
      %v3732 = vunpack.c.l.b16 %v3636
      %v3733 = vunpack.c.l.b16 %v3637
      %v3734 = vunpack.c.l.b16 %v3638
      %v3735 = vunpack.c.l.b16 %v3639
      %v3736 = vunpack.c.l.b16 %v3640
      %v3737 = vunpack.c.l.b16 %v3641
      %v3738 = vunpack.c.l.b16 %v3642
      %v3739 = vunpack.c.l.b16 %v3643
      %v3740 = vunpack.c.l.b16 %v3644
      %v3741 = vunpack.c.l.b16 %v3645
      %v3742 = vunpack.c.l.b16 %v3646
      %v3743 = vunpack.c.l.b16 %v3647
      %v3744 = vunpack.c.l.b16 %v3648
      %v3745 = vunpack.c.l.b16 %v3649
      %v3746 = vunpack.c.l.b16 %v3650
      %v3747 = vunpack.c.l.b16 %v3651
      %v3748 = vunpack.c.l.b16 %v3652
      %v3749 = vunpack.c.l.b16 %v3653
      %v3750 = vunpack.c.l.b16 %v3654
      %v3751 = vunpack.c.l.b16 %v3655
      %v3752 = vunpack.c.l.b16 %v3656
      %v3753 = vunpack.c.l.b16 %v3657
      %v3754 = vunpack.c.l.b16 %v3658
      %v3755 = vunpack.c.l.b16 %v3659
      %v3756 = vunpack.c.l.b16 %v3660
      %v3757 = vunpack.c.l.b16 %v3661
      %v3758 = vunpack.c.l.b16 %v3662
      %v3759 = vunpack.c.l.b16 %v3663
      %v3760 = vunpack.c.l.b16 %v3664
      %v3761 = vunpack.c.l.b16 %v3665
      %v3762 = vunpack.c.l.b16 %v3666
      %v3763 = vunpack.c.l.b16 %v3667
      %v3764 = vunpack.c.l.b16 %v3668
      %v3765 = vunpack.c.l.b16 %v3669
      %v3766 = vunpack.c.l.b16 %v3670
      %v3767 = vpack.c.b16 %v3720, %v3719
      %v3768 = vpack.c.b16 %v3722, %v3721
      %v3769 = vpack.c.b16 %v3724, %v3723
      %v3770 = vpack.c.b16 %v3726, %v3725
      %v3771 = vpack.c.b16 %v3728, %v3727
      %v3772 = vpack.c.b16 %v3730, %v3729
      %v3773 = vpack.c.b16 %v3732, %v3731
      %v3774 = vpack.c.b16 %v3734, %v3733
      %v3775 = vpack.c.b16 %v3736, %v3735
      %v3776 = vpack.c.b16 %v3738, %v3737
      %v3777 = vpack.c.b16 %v3740, %v3739
      %v3778 = vpack.c.b16 %v3742, %v3741
      %v3779 = vpack.c.b16 %v3744, %v3743
      %v3780 = vpack.c.b16 %v3746, %v3745
      %v3781 = vpack.c.b16 %v3748, %v3747
      %v3782 = vpack.c.b16 %v3750, %v3749
      %v3783 = vpack.c.b16 %v3752, %v3751
      %v3784 = vpack.c.b16 %v3754, %v3753
      %v3785 = vpack.c.b16 %v3756, %v3755
      %v3786 = vpack.c.b16 %v3758, %v3757
      %v3787 = vpack.c.b16 %v3760, %v3759
      %v3788 = vpack.c.b16 %v3762, %v3761
      %v3789 = vpack.c.b16 %v3764, %v3763
      %v3790 = vpack.c.b16 %v3766, %v3765
      %3815 = vmatpush.bf16.msra.mxu0 %v3774
      %3816 = vmatpush.bf16.msra.mxu0 %v3773
      %3817 = vmatpush.bf16.msra.mxu0 %v3772
      %3818 = vmatpush.bf16.msra.mxu0 %v3771
      %3819 = vmatpush.bf16.msra.mxu0 %v3770
      %3820 = vmatpush.bf16.msra.mxu0 %v3769
      %3821 = vmatpush.bf16.msra.mxu0 %v3768
      %3822 = vmatpush.bf16.msra.mxu0 %v3767
      %3823 = vmatmul.bf16.gmra.mxu0 %v3462
      %v3824 = vpop.f32.mrf.mxu0
      %v3825 = vadd.f32 0.0, %v3824
      %v3826 = vpop.f32.mrf.mxu0
      %v3827 = vadd.f32 0.0, %v3826
      %3828 = vmatmul.bf16.gmra.mxu0 %v3463
      %v3829 = vpop.f32.mrf.mxu0
      %v3830 = vadd.f32 0.0, %v3829
      %v3831 = vpop.f32.mrf.mxu0
      %v3832 = vadd.f32 0.0, %v3831
      %3833 = vmatmul.bf16.gmra.mxu0 %v3464
      %v3834 = vpop.f32.mrf.mxu0
      %v3835 = vadd.f32 0.0, %v3834
      %v3836 = vpop.f32.mrf.mxu0
      %v3837 = vadd.f32 0.0, %v3836
      %3838 = vmatmul.bf16.gmra.mxu0 %v3465
      %v3839 = vpop.f32.mrf.mxu0
      %v3840 = vadd.f32 0.0, %v3839
      %v3841 = vpop.f32.mrf.mxu0
      %v3842 = vadd.f32 0.0, %v3841
      %3843 = vmatmul.bf16.gmra.mxu0 %v3466
      %v3844 = vpop.f32.mrf.mxu0
      %v3845 = vadd.f32 0.0, %v3844
      %v3846 = vpop.f32.mrf.mxu0
      %v3847 = vadd.f32 0.0, %v3846
      %3848 = vmatmul.bf16.gmra.mxu0 %v3467
      %v3849 = vpop.f32.mrf.mxu0
      %v3850 = vadd.f32 0.0, %v3849
      %v3851 = vpop.f32.mrf.mxu0
      %v3852 = vadd.f32 0.0, %v3851
      %3853 = vmatmul.bf16.gmra.mxu0 %v3468
      %v3854 = vpop.f32.mrf.mxu0
      %v3855 = vadd.f32 0.0, %v3854
      %v3856 = vpop.f32.mrf.mxu0
      %v3857 = vadd.f32 0.0, %v3856
      %3858 = vmatmul.bf16.gmra.mxu0 %v3469
      %v3859 = vpop.f32.mrf.mxu0
      %v3860 = vadd.f32 0.0, %v3859
      %v3861 = vpop.f32.mrf.mxu0
      %v3862 = vadd.f32 0.0, %v3861
      %3863 = vmatmul.bf16.gmra.mxu0 %v3470
      %v3864 = vpop.f32.mrf.mxu0
      %v3865 = vadd.f32 0.0, %v3864
      %v3866 = vpop.f32.mrf.mxu0
      %v3867 = vadd.f32 0.0, %v3866
      %3868 = vmatmul.bf16.gmra.mxu0 %v3471
      %v3869 = vpop.f32.mrf.mxu0
      %v3870 = vadd.f32 0.0, %v3869
      %v3871 = vpop.f32.mrf.mxu0
      %v3872 = vadd.f32 0.0, %v3871
      %3873 = vmatmul.bf16.gmra.mxu0 %v3472
      %v3874 = vpop.f32.mrf.mxu0
      %v3875 = vadd.f32 0.0, %v3874
      %v3876 = vpop.f32.mrf.mxu0
      %v3877 = vadd.f32 0.0, %v3876
      %3878 = vmatmul.bf16.gmra.mxu0 %v3473
      %v3879 = vpop.f32.mrf.mxu0
      %v3880 = vadd.f32 0.0, %v3879
      %v3881 = vpop.f32.mrf.mxu0
      %v3882 = vadd.f32 0.0, %v3881
      %3883 = vmatmul.bf16.gmra.mxu0 %v3474
      %v3884 = vpop.f32.mrf.mxu0
      %v3885 = vadd.f32 0.0, %v3884
      %v3886 = vpop.f32.mrf.mxu0
      %v3887 = vadd.f32 0.0, %v3886
      %3888 = vmatmul.bf16.gmra.mxu0 %v3475
      %v3889 = vpop.f32.mrf.mxu0
      %v3890 = vadd.f32 0.0, %v3889
      %v3891 = vpop.f32.mrf.mxu0
      %v3892 = vadd.f32 0.0, %v3891
      %3893 = vmatmul.bf16.gmra.mxu0 %v3476
      %v3894 = vpop.f32.mrf.mxu0
      %v3895 = vadd.f32 0.0, %v3894
      %v3896 = vpop.f32.mrf.mxu0
      %v3897 = vadd.f32 0.0, %v3896
      %3898 = vmatmul.bf16.gmra.mxu0 %v3477
      %v3899 = vpop.f32.mrf.mxu0
      %v3900 = vadd.f32 0.0, %v3899
      %v3901 = vpop.f32.mrf.mxu0
      %v3902 = vadd.f32 0.0, %v3901
      %3903 = vdwg.mxu0
      %3904 = vmatpush.bf16.msra.mxu0 %v3782
      %3905 = vmatpush.bf16.msra.mxu0 %v3781
      %3906 = vmatpush.bf16.msra.mxu0 %v3780
      %3907 = vmatpush.bf16.msra.mxu0 %v3779
      %3908 = vmatpush.bf16.msra.mxu0 %v3778
      %3909 = vmatpush.bf16.msra.mxu0 %v3777
      %3910 = vmatpush.bf16.msra.mxu0 %v3776
      %3911 = vmatpush.bf16.msra.mxu0 %v3775
      %3912 = vmatmul.bf16.gmra.mxu0 %v3526
      %v3913 = vpop.f32.mrf.mxu0
      %v3914 = vadd.f32 %v3825, %v3913
      %v3915 = vpop.f32.mrf.mxu0
      %v3916 = vadd.f32 %v3827, %v3915
      %3917 = vmatmul.bf16.gmra.mxu0 %v3527
      %v3918 = vpop.f32.mrf.mxu0
      %v3919 = vadd.f32 %v3830, %v3918
      %v3920 = vpop.f32.mrf.mxu0
      %v3921 = vadd.f32 %v3832, %v3920
      %3922 = vmatmul.bf16.gmra.mxu0 %v3528
      %v3923 = vpop.f32.mrf.mxu0
      %v3924 = vadd.f32 %v3835, %v3923
      %v3925 = vpop.f32.mrf.mxu0
      %v3926 = vadd.f32 %v3837, %v3925
      %3927 = vmatmul.bf16.gmra.mxu0 %v3529
      %v3928 = vpop.f32.mrf.mxu0
      %v3929 = vadd.f32 %v3840, %v3928
      %v3930 = vpop.f32.mrf.mxu0
      %v3931 = vadd.f32 %v3842, %v3930
      %3932 = vmatmul.bf16.gmra.mxu0 %v3530
      %v3933 = vpop.f32.mrf.mxu0
      %v3934 = vadd.f32 %v3845, %v3933
      %v3935 = vpop.f32.mrf.mxu0
      %v3936 = vadd.f32 %v3847, %v3935
      %3937 = vmatmul.bf16.gmra.mxu0 %v3531
      %v3938 = vpop.f32.mrf.mxu0
      %v3939 = vadd.f32 %v3850, %v3938
      %v3940 = vpop.f32.mrf.mxu0
      %v3941 = vadd.f32 %v3852, %v3940
      %3942 = vmatmul.bf16.gmra.mxu0 %v3532
      %v3943 = vpop.f32.mrf.mxu0
      %v3944 = vadd.f32 %v3855, %v3943
      %v3945 = vpop.f32.mrf.mxu0
      %v3946 = vadd.f32 %v3857, %v3945
      %3947 = vmatmul.bf16.gmra.mxu0 %v3533
      %v3948 = vpop.f32.mrf.mxu0
      %v3949 = vadd.f32 %v3860, %v3948
      %v3950 = vpop.f32.mrf.mxu0
      %v3951 = vadd.f32 %v3862, %v3950
      %3952 = vmatmul.bf16.gmra.mxu0 %v3534
      %v3953 = vpop.f32.mrf.mxu0
      %v3954 = vadd.f32 %v3865, %v3953
      %v3955 = vpop.f32.mrf.mxu0
      %v3956 = vadd.f32 %v3867, %v3955
      %3957 = vmatmul.bf16.gmra.mxu0 %v3535
      %v3958 = vpop.f32.mrf.mxu0
      %v3959 = vadd.f32 %v3870, %v3958
      %v3960 = vpop.f32.mrf.mxu0
      %v3961 = vadd.f32 %v3872, %v3960
      %3962 = vmatmul.bf16.gmra.mxu0 %v3536
      %v3963 = vpop.f32.mrf.mxu0
      %v3964 = vadd.f32 %v3875, %v3963
      %v3965 = vpop.f32.mrf.mxu0
      %v3966 = vadd.f32 %v3877, %v3965
      %3967 = vmatmul.bf16.gmra.mxu0 %v3537
      %v3968 = vpop.f32.mrf.mxu0
      %v3969 = vadd.f32 %v3880, %v3968
      %v3970 = vpop.f32.mrf.mxu0
      %v3971 = vadd.f32 %v3882, %v3970
      %3972 = vmatmul.bf16.gmra.mxu0 %v3538
      %v3973 = vpop.f32.mrf.mxu0
      %v3974 = vadd.f32 %v3885, %v3973
      %v3975 = vpop.f32.mrf.mxu0
      %v3976 = vadd.f32 %v3887, %v3975
      %3977 = vmatmul.bf16.gmra.mxu0 %v3539
      %v3978 = vpop.f32.mrf.mxu0
      %v3979 = vadd.f32 %v3890, %v3978
      %v3980 = vpop.f32.mrf.mxu0
      %v3981 = vadd.f32 %v3892, %v3980
      %3982 = vmatmul.bf16.gmra.mxu0 %v3540
      %v3983 = vpop.f32.mrf.mxu0
      %v3984 = vadd.f32 %v3895, %v3983
      %v3985 = vpop.f32.mrf.mxu0
      %v3986 = vadd.f32 %v3897, %v3985
      %3987 = vmatmul.bf16.gmra.mxu0 %v3541
      %v3988 = vpop.f32.mrf.mxu0
      %v3989 = vadd.f32 %v3900, %v3988
      %v3990 = vpop.f32.mrf.mxu0
      %v3991 = vadd.f32 %v3902, %v3990
      %3992 = vdwg.mxu0
      %3993 = vmatpush.bf16.msra.mxu0 %v3790
      %3994 = vmatpush.bf16.msra.mxu0 %v3789
      %3995 = vmatpush.bf16.msra.mxu0 %v3788
      %3996 = vmatpush.bf16.msra.mxu0 %v3787
      %3997 = vmatpush.bf16.msra.mxu0 %v3786
      %3998 = vmatpush.bf16.msra.mxu0 %v3785
      %3999 = vmatpush.bf16.msra.mxu0 %v3784
      %4000 = vmatpush.bf16.msra.mxu0 %v3783
      %4001 = vmatmul.bf16.gmra.mxu0 %v3590
      %v4002 = vpop.f32.mrf.mxu0
      %v4003 = vadd.f32 %v3914, %v4002
      %v4004 = vpop.f32.mrf.mxu0
      %v4005 = vadd.f32 %v3916, %v4004
      %4006 = vmatmul.bf16.gmra.mxu0 %v3591
      %v4007 = vpop.f32.mrf.mxu0
      %v4008 = vadd.f32 %v3919, %v4007
      %v4009 = vpop.f32.mrf.mxu0
      %v4010 = vadd.f32 %v3921, %v4009
      %4011 = vmatmul.bf16.gmra.mxu0 %v3592
      %v4012 = vpop.f32.mrf.mxu0
      %v4013 = vadd.f32 %v3924, %v4012
      %v4014 = vpop.f32.mrf.mxu0
      %v4015 = vadd.f32 %v3926, %v4014
      %4016 = vmatmul.bf16.gmra.mxu0 %v3593
      %v4017 = vpop.f32.mrf.mxu0
      %v4018 = vadd.f32 %v3929, %v4017
      %v4019 = vpop.f32.mrf.mxu0
      %v4020 = vadd.f32 %v3931, %v4019
      %4021 = vmatmul.bf16.gmra.mxu0 %v3594
      %v4022 = vpop.f32.mrf.mxu0
      %v4023 = vadd.f32 %v3934, %v4022
      %v4024 = vpop.f32.mrf.mxu0
      %v4025 = vadd.f32 %v3936, %v4024
      %4026 = vmatmul.bf16.gmra.mxu0 %v3595
      %v4027 = vpop.f32.mrf.mxu0
      %v4028 = vadd.f32 %v3939, %v4027
      %v4029 = vpop.f32.mrf.mxu0
      %v4030 = vadd.f32 %v3941, %v4029
      %4031 = vmatmul.bf16.gmra.mxu0 %v3596
      %v4032 = vpop.f32.mrf.mxu0
      %v4033 = vadd.f32 %v3944, %v4032
      %v4034 = vpop.f32.mrf.mxu0
      %v4035 = vadd.f32 %v3946, %v4034
      %4036 = vmatmul.bf16.gmra.mxu0 %v3597
      %v4037 = vpop.f32.mrf.mxu0
      %v4038 = vadd.f32 %v3949, %v4037
      %v4039 = vpop.f32.mrf.mxu0
      %v4040 = vadd.f32 %v3951, %v4039
      %4041 = vmatmul.bf16.gmra.mxu0 %v3598
      %v4042 = vpop.f32.mrf.mxu0
      %v4043 = vadd.f32 %v3954, %v4042
      %v4044 = vpop.f32.mrf.mxu0
      %v4045 = vadd.f32 %v3956, %v4044
      %4046 = vmatmul.bf16.gmra.mxu0 %v3599
      %v4047 = vpop.f32.mrf.mxu0
      %v4048 = vadd.f32 %v3959, %v4047
      %v4049 = vpop.f32.mrf.mxu0
      %v4050 = vadd.f32 %v3961, %v4049
      %4051 = vmatmul.bf16.gmra.mxu0 %v3600
      %v4052 = vpop.f32.mrf.mxu0
      %v4053 = vadd.f32 %v3964, %v4052
      %v4054 = vpop.f32.mrf.mxu0
      %v4055 = vadd.f32 %v3966, %v4054
      %4056 = vmatmul.bf16.gmra.mxu0 %v3601
      %v4057 = vpop.f32.mrf.mxu0
      %v4058 = vadd.f32 %v3969, %v4057
      %v4059 = vpop.f32.mrf.mxu0
      %v4060 = vadd.f32 %v3971, %v4059
      %4061 = vmatmul.bf16.gmra.mxu0 %v3602
      %v4062 = vpop.f32.mrf.mxu0
      %v4063 = vadd.f32 %v3974, %v4062
      %v4064 = vpop.f32.mrf.mxu0
      %v4065 = vadd.f32 %v3976, %v4064
      %4066 = vmatmul.bf16.gmra.mxu0 %v3603
      %v4067 = vpop.f32.mrf.mxu0
      %v4068 = vadd.f32 %v3979, %v4067
      %v4069 = vpop.f32.mrf.mxu0
      %v4070 = vadd.f32 %v3981, %v4069
      %4071 = vmatmul.bf16.gmra.mxu0 %v3604
      %v4072 = vpop.f32.mrf.mxu0
      %v4073 = vadd.f32 %v3984, %v4072
      %v4074 = vpop.f32.mrf.mxu0
      %v4075 = vadd.f32 %v3986, %v4074
      %4076 = vmatmul.bf16.gmra.mxu0 %v3605
      %v4077 = vpop.f32.mrf.mxu0
      %v4078 = vadd.f32 %v3989, %v4077
      %v4079 = vpop.f32.mrf.mxu0
      %v4080 = vadd.f32 %v3991, %v4079
      %4081 = vdwg.mxu0
      %v4082 = vld [vmem:[#allocation2] sm:$0xff]
      %v4083 = vld [vmem:[#allocation2 + $0x8] sm:$0xff]
      %v4084 = vld [vmem:[#allocation2 + $0x10] sm:$0xff]
      %v4085 = vld [vmem:[#allocation2 + $0x18] sm:$0xff]
      %v4086 = vld [vmem:[#allocation2 + $0x20] sm:$0xff]
      %v4087 = vld [vmem:[#allocation2 + $0x28] sm:$0xff]
      %v4088 = vld [vmem:[#allocation2 + $0x30] sm:$0xff]
      %v4089 = vld [vmem:[#allocation2 + $0x38] sm:$0xff]
      %v4090 = vld [vmem:[#allocation2 + $0x40] sm:$0xff]
      %v4091 = vld [vmem:[#allocation2 + $0x48] sm:$0xff]
      %v4092 = vld [vmem:[#allocation2 + $0x50] sm:$0xff]
      %v4093 = vld [vmem:[#allocation2 + $0x58] sm:$0xff]
      %v4094 = vld [vmem:[#allocation2 + $0x60] sm:$0xff]
      %v4095 = vld [vmem:[#allocation2 + $0x68] sm:$0xff]
      %v4096 = vld [vmem:[#allocation2 + $0x70] sm:$0xff]
      %v4097 = vld [vmem:[#allocation2 + $0x78] sm:$0xff]
      %v4098 = vld [vmem:[#allocation2 + $0x80] sm:$0xff]
      %v4099 = vld [vmem:[#allocation2 + $0x88] sm:$0xff]
      %v4100 = vld [vmem:[#allocation2 + $0x90] sm:$0xff]
      %v4101 = vld [vmem:[#allocation2 + $0x98] sm:$0xff]
      %v4102 = vld [vmem:[#allocation2 + $0xa0] sm:$0xff]
      %v4103 = vld [vmem:[#allocation2 + $0xa8] sm:$0xff]
      %v4104 = vld [vmem:[#allocation2 + $0xb0] sm:$0xff]
      %v4105 = vld [vmem:[#allocation2 + $0xb8] sm:$0xff]
      %v4106 = vld [vmem:[#allocation2 + $0xc0] sm:$0xff]
      %v4107 = vld [vmem:[#allocation2 + $0xc8] sm:$0xff]
      %v4108 = vld [vmem:[#allocation2 + $0xd0] sm:$0xff]
      %v4109 = vld [vmem:[#allocation2 + $0xd8] sm:$0xff]
      %v4110 = vld [vmem:[#allocation2 + $0xe0] sm:$0xff]
      %v4111 = vld [vmem:[#allocation2 + $0xe8] sm:$0xff]
      %v4112 = vld [vmem:[#allocation2 + $0xf0] sm:$0xff]
      %v4113 = vld [vmem:[#allocation2 + $0xf8] sm:$0xff]
      %v4114 = vadd.f32 %v4082, %v4003
      %v4115 = vadd.f32 %v4083, %v4005
      %v4116 = vadd.f32 %v4084, %v4008
      %v4117 = vadd.f32 %v4085, %v4010
      %v4118 = vadd.f32 %v4086, %v4013
      %v4119 = vadd.f32 %v4087, %v4015
      %v4120 = vadd.f32 %v4088, %v4018
      %v4121 = vadd.f32 %v4089, %v4020
      %v4122 = vadd.f32 %v4090, %v4023
      %v4123 = vadd.f32 %v4091, %v4025
      %v4124 = vadd.f32 %v4092, %v4028
      %v4125 = vadd.f32 %v4093, %v4030
      %v4126 = vadd.f32 %v4094, %v4033
      %v4127 = vadd.f32 %v4095, %v4035
      %v4128 = vadd.f32 %v4096, %v4038
      %v4129 = vadd.f32 %v4097, %v4040
      %v4130 = vadd.f32 %v4098, %v4043
      %v4131 = vadd.f32 %v4099, %v4045
      %v4132 = vadd.f32 %v4100, %v4048
      %v4133 = vadd.f32 %v4101, %v4050
      %v4134 = vadd.f32 %v4102, %v4053
      %v4135 = vadd.f32 %v4103, %v4055
      %v4136 = vadd.f32 %v4104, %v4058
      %v4137 = vadd.f32 %v4105, %v4060
      %v4138 = vadd.f32 %v4106, %v4063
      %v4139 = vadd.f32 %v4107, %v4065
      %v4140 = vadd.f32 %v4108, %v4068
      %v4141 = vadd.f32 %v4109, %v4070
      %v4142 = vadd.f32 %v4110, %v4073
      %v4143 = vadd.f32 %v4111, %v4075
      %v4144 = vadd.f32 %v4112, %v4078
      %v4145 = vadd.f32 %v4113, %v4080
      %4146 = vst [vmem:[#allocation2] sm:$0xff] %v4114
      %4147 = vst [vmem:[#allocation2 + $0x8] sm:$0xff] %v4115
      %4148 = vst [vmem:[#allocation2 + $0x10] sm:$0xff] %v4116
      %4149 = vst [vmem:[#allocation2 + $0x18] sm:$0xff] %v4117
      %4150 = vst [vmem:[#allocation2 + $0x20] sm:$0xff] %v4118
      %4151 = vst [vmem:[#allocation2 + $0x28] sm:$0xff] %v4119
      %4152 = vst [vmem:[#allocation2 + $0x30] sm:$0xff] %v4120
      %4153 = vst [vmem:[#allocation2 + $0x38] sm:$0xff] %v4121
      %4154 = vst [vmem:[#allocation2 + $0x40] sm:$0xff] %v4122
      %4155 = vst [vmem:[#allocation2 + $0x48] sm:$0xff] %v4123
      %4156 = vst [vmem:[#allocation2 + $0x50] sm:$0xff] %v4124
      %4157 = vst [vmem:[#allocation2 + $0x58] sm:$0xff] %v4125
      %4158 = vst [vmem:[#allocation2 + $0x60] sm:$0xff] %v4126
      %4159 = vst [vmem:[#allocation2 + $0x68] sm:$0xff] %v4127
      %4160 = vst [vmem:[#allocation2 + $0x70] sm:$0xff] %v4128
      %4161 = vst [vmem:[#allocation2 + $0x78] sm:$0xff] %v4129
      %4162 = vst [vmem:[#allocation2 + $0x80] sm:$0xff] %v4130
      %4163 = vst [vmem:[#allocation2 + $0x88] sm:$0xff] %v4131
      %4164 = vst [vmem:[#allocation2 + $0x90] sm:$0xff] %v4132
      %4165 = vst [vmem:[#allocation2 + $0x98] sm:$0xff] %v4133
      %4166 = vst [vmem:[#allocation2 + $0xa0] sm:$0xff] %v4134
      %4167 = vst [vmem:[#allocation2 + $0xa8] sm:$0xff] %v4135
      %4168 = vst [vmem:[#allocation2 + $0xb0] sm:$0xff] %v4136
      %4169 = vst [vmem:[#allocation2 + $0xb8] sm:$0xff] %v4137
      %4170 = vst [vmem:[#allocation2 + $0xc0] sm:$0xff] %v4138
      %4171 = vst [vmem:[#allocation2 + $0xc8] sm:$0xff] %v4139
      %4172 = vst [vmem:[#allocation2 + $0xd0] sm:$0xff] %v4140
      %4173 = vst [vmem:[#allocation2 + $0xd8] sm:$0xff] %v4141
      %4174 = vst [vmem:[#allocation2 + $0xe0] sm:$0xff] %v4142
      %4175 = vst [vmem:[#allocation2 + $0xe8] sm:$0xff] %v4143
      %4176 = vst [vmem:[#allocation2 + $0xf0] sm:$0xff] %v4144
      %4177 = vst [vmem:[#allocation2 + $0xf8] sm:$0xff] %v4145
      %v4178 = vld [vmem:[#allocation2] sm:$0xff]
      %v4179 = vld [vmem:[#allocation2 + $0x8] sm:$0xff]
      %v4180 = vld [vmem:[#allocation2 + $0x10] sm:$0xff]
      %v4181 = vld [vmem:[#allocation2 + $0x18] sm:$0xff]
      %v4182 = vld [vmem:[#allocation2 + $0x20] sm:$0xff]
      %v4183 = vld [vmem:[#allocation2 + $0x28] sm:$0xff]
      %v4184 = vld [vmem:[#allocation2 + $0x30] sm:$0xff]
      %v4185 = vld [vmem:[#allocation2 + $0x38] sm:$0xff]
      %v4186 = vld [vmem:[#allocation2 + $0x40] sm:$0xff]
      %v4187 = vld [vmem:[#allocation2 + $0x48] sm:$0xff]
      %v4188 = vld [vmem:[#allocation2 + $0x50] sm:$0xff]
      %v4189 = vld [vmem:[#allocation2 + $0x58] sm:$0xff]
      %v4190 = vld [vmem:[#allocation2 + $0x60] sm:$0xff]
      %v4191 = vld [vmem:[#allocation2 + $0x68] sm:$0xff]
      %v4192 = vld [vmem:[#allocation2 + $0x70] sm:$0xff]
      %v4193 = vld [vmem:[#allocation2 + $0x78] sm:$0xff]
      %v4194 = vld [vmem:[#allocation2 + $0x80] sm:$0xff]
      %v4195 = vld [vmem:[#allocation2 + $0x88] sm:$0xff]
      %v4196 = vld [vmem:[#allocation2 + $0x90] sm:$0xff]
      %v4197 = vld [vmem:[#allocation2 + $0x98] sm:$0xff]
      %v4198 = vld [vmem:[#allocation2 + $0xa0] sm:$0xff]
      %v4199 = vld [vmem:[#allocation2 + $0xa8] sm:$0xff]
      %v4200 = vld [vmem:[#allocation2 + $0xb0] sm:$0xff]
      %v4201 = vld [vmem:[#allocation2 + $0xb8] sm:$0xff]
      %v4202 = vld [vmem:[#allocation2 + $0xc0] sm:$0xff]
      %v4203 = vld [vmem:[#allocation2 + $0xc8] sm:$0xff]
      %v4204 = vld [vmem:[#allocation2 + $0xd0] sm:$0xff]
      %v4205 = vld [vmem:[#allocation2 + $0xd8] sm:$0xff]
      %v4206 = vld [vmem:[#allocation2 + $0xe0] sm:$0xff]
      %v4207 = vld [vmem:[#allocation2 + $0xe8] sm:$0xff]
      %v4208 = vld [vmem:[#allocation2 + $0xf0] sm:$0xff]
      %v4209 = vld [vmem:[#allocation2 + $0xf8] sm:$0xff]
      %v4210 = vpack.c.bf16 %v4178, %v4178
      %v4211 = vpack.c.bf16 %v4179, %v4179
      %v4212 = vpack.c.bf16 %v4180, %v4180
      %v4213 = vpack.c.bf16 %v4181, %v4181
      %v4214 = vpack.c.bf16 %v4182, %v4182
      %v4215 = vpack.c.bf16 %v4183, %v4183
      %v4216 = vpack.c.bf16 %v4184, %v4184
      %v4217 = vpack.c.bf16 %v4185, %v4185
      %v4218 = vpack.c.bf16 %v4186, %v4186
      %v4219 = vpack.c.bf16 %v4187, %v4187
      %v4220 = vpack.c.bf16 %v4188, %v4188
      %v4221 = vpack.c.bf16 %v4189, %v4189
      %v4222 = vpack.c.bf16 %v4190, %v4190
      %v4223 = vpack.c.bf16 %v4191, %v4191
      %v4224 = vpack.c.bf16 %v4192, %v4192
      %v4225 = vpack.c.bf16 %v4193, %v4193
      %v4226 = vpack.c.bf16 %v4194, %v4194
      %v4227 = vpack.c.bf16 %v4195, %v4195
      %v4228 = vpack.c.bf16 %v4196, %v4196
      %v4229 = vpack.c.bf16 %v4197, %v4197
      %v4230 = vpack.c.bf16 %v4198, %v4198
      %v4231 = vpack.c.bf16 %v4199, %v4199
      %v4232 = vpack.c.bf16 %v4200, %v4200
      %v4233 = vpack.c.bf16 %v4201, %v4201
      %v4234 = vpack.c.bf16 %v4202, %v4202
      %v4235 = vpack.c.bf16 %v4203, %v4203
      %v4236 = vpack.c.bf16 %v4204, %v4204
      %v4237 = vpack.c.bf16 %v4205, %v4205
      %v4238 = vpack.c.bf16 %v4206, %v4206
      %v4239 = vpack.c.bf16 %v4207, %v4207
      %v4240 = vpack.c.bf16 %v4208, %v4208
      %v4241 = vpack.c.bf16 %v4209, %v4209
      %4242 = vst [vmem:[%s196] sm:$0xf] %v4210
      %4243 = vst [vmem:[%s196 + $0x4] sm:$0xf] %v4211
      %4244 = vst [vmem:[%s196 + $0x8] sm:$0xf] %v4212
      %4245 = vst [vmem:[%s196 + $0xc] sm:$0xf] %v4213
      %4246 = vst [vmem:[%s196 + $0x10] sm:$0xf] %v4214
      %4247 = vst [vmem:[%s196 + $0x14] sm:$0xf] %v4215
      %4248 = vst [vmem:[%s196 + $0x18] sm:$0xf] %v4216
      %4249 = vst [vmem:[%s196 + $0x1c] sm:$0xf] %v4217
      %4250 = vst [vmem:[%s196 + $0x20] sm:$0xf] %v4218
      %4251 = vst [vmem:[%s196 + $0x24] sm:$0xf] %v4219
      %4252 = vst [vmem:[%s196 + $0x28] sm:$0xf] %v4220
      %4253 = vst [vmem:[%s196 + $0x2c] sm:$0xf] %v4221
      %4254 = vst [vmem:[%s196 + $0x30] sm:$0xf] %v4222
      %4255 = vst [vmem:[%s196 + $0x34] sm:$0xf] %v4223
      %4256 = vst [vmem:[%s196 + $0x38] sm:$0xf] %v4224
      %4257 = vst [vmem:[%s196 + $0x3c] sm:$0xf] %v4225
      %4258 = vst [vmem:[%s196 + $0x40] sm:$0xf] %v4226
      %4259 = vst [vmem:[%s196 + $0x44] sm:$0xf] %v4227
      %4260 = vst [vmem:[%s196 + $0x48] sm:$0xf] %v4228
      %4261 = vst [vmem:[%s196 + $0x4c] sm:$0xf] %v4229
      %4262 = vst [vmem:[%s196 + $0x50] sm:$0xf] %v4230
      %4263 = vst [vmem:[%s196 + $0x54] sm:$0xf] %v4231
      %4264 = vst [vmem:[%s196 + $0x58] sm:$0xf] %v4232
      %4265 = vst [vmem:[%s196 + $0x5c] sm:$0xf] %v4233
      %4266 = vst [vmem:[%s196 + $0x60] sm:$0xf] %v4234
      %4267 = vst [vmem:[%s196 + $0x64] sm:$0xf] %v4235
      %4268 = vst [vmem:[%s196 + $0x68] sm:$0xf] %v4236
      %4269 = vst [vmem:[%s196 + $0x6c] sm:$0xf] %v4237
      %4270 = vst [vmem:[%s196 + $0x70] sm:$0xf] %v4238
      %4271 = vst [vmem:[%s196 + $0x74] sm:$0xf] %v4239
      %4272 = vst [vmem:[%s196 + $0x78] sm:$0xf] %v4240
      %4273 = vst [vmem:[%s196 + $0x7c] sm:$0xf] %v4241
      %v4274 = vadd.f32 %v4178, %v4179
      %v4275 = vadd.f32 %v4274, %v4180
      %v4276 = vadd.f32 %v4275, %v4181
      %v4277 = vadd.f32 %v4276, %v4182
      %v4278 = vadd.f32 %v4277, %v4183
      %v4279 = vadd.f32 %v4278, %v4184
      %v4280 = vadd.f32 %v4279, %v4185
      %v4281 = vadd.f32 %v4280, %v4186
      %v4282 = vadd.f32 %v4281, %v4187
      %v4283 = vadd.f32 %v4282, %v4188
      %v4284 = vadd.f32 %v4283, %v4189
      %v4285 = vadd.f32 %v4284, %v4190
      %v4286 = vadd.f32 %v4285, %v4191
      %v4287 = vadd.f32 %v4286, %v4192
      %v4288 = vadd.f32 %v4287, %v4193
      %v4289 = vadd.f32 %v4288, %v4194
      %v4290 = vadd.f32 %v4289, %v4195
      %v4291 = vadd.f32 %v4290, %v4196
      %v4292 = vadd.f32 %v4291, %v4197
      %v4293 = vadd.f32 %v4292, %v4198
      %v4294 = vadd.f32 %v4293, %v4199
      %v4295 = vadd.f32 %v4294, %v4200
      %v4296 = vadd.f32 %v4295, %v4201
      %v4297 = vadd.f32 %v4296, %v4202
      %v4298 = vadd.f32 %v4297, %v4203
      %v4299 = vadd.f32 %v4298, %v4204
      %v4300 = vadd.f32 %v4299, %v4205
      %v4301 = vadd.f32 %v4300, %v4206
      %v4302 = vadd.f32 %v4301, %v4207
      %v4303 = vadd.f32 %v4302, %v4208
      %v4304 = vadd.f32 %v4303, %v4209
      %v4305 = vrot.slane %v4304, 4
      %v4306 = vadd.f32 %v4304, %v4305
      %v4307 = vrot.slane %v4306, 2
      %v4308 = vadd.f32 %v4306, %v4307
      %v4309 = vrot.slane %v4308, 1
      %v4310 = vadd.f32 %v4308, %v4309
      %4311 = vst [vmem:[%s203] sm:$0x1] %v4310
      %v4312 = vmul.f32 %v4178, %v4178
      %v4313 = vmul.f32 %v4179, %v4179
      %v4314 = vmul.f32 %v4180, %v4180
      %v4315 = vmul.f32 %v4181, %v4181
      %v4316 = vmul.f32 %v4182, %v4182
      %v4317 = vmul.f32 %v4183, %v4183
      %v4318 = vmul.f32 %v4184, %v4184
      %v4319 = vmul.f32 %v4185, %v4185
      %v4320 = vmul.f32 %v4186, %v4186
      %v4321 = vmul.f32 %v4187, %v4187
      %v4322 = vmul.f32 %v4188, %v4188
      %v4323 = vmul.f32 %v4189, %v4189
      %v4324 = vmul.f32 %v4190, %v4190
      %v4325 = vmul.f32 %v4191, %v4191
      %v4326 = vmul.f32 %v4192, %v4192
      %v4327 = vmul.f32 %v4193, %v4193
      %v4328 = vmul.f32 %v4194, %v4194
      %v4329 = vmul.f32 %v4195, %v4195
      %v4330 = vmul.f32 %v4196, %v4196
      %v4331 = vmul.f32 %v4197, %v4197
      %v4332 = vmul.f32 %v4198, %v4198
      %v4333 = vmul.f32 %v4199, %v4199
      %v4334 = vmul.f32 %v4200, %v4200
      %v4335 = vmul.f32 %v4201, %v4201
      %v4336 = vmul.f32 %v4202, %v4202
      %v4337 = vmul.f32 %v4203, %v4203
      %v4338 = vmul.f32 %v4204, %v4204
      %v4339 = vmul.f32 %v4205, %v4205
      %v4340 = vmul.f32 %v4206, %v4206
      %v4341 = vmul.f32 %v4207, %v4207
      %v4342 = vmul.f32 %v4208, %v4208
      %v4343 = vmul.f32 %v4209, %v4209
      %v4344 = vadd.f32 %v4312, %v4313
      %v4345 = vadd.f32 %v4344, %v4314
      %v4346 = vadd.f32 %v4345, %v4315
      %v4347 = vadd.f32 %v4346, %v4316
      %v4348 = vadd.f32 %v4347, %v4317
      %v4349 = vadd.f32 %v4348, %v4318
      %v4350 = vadd.f32 %v4349, %v4319
      %v4351 = vadd.f32 %v4350, %v4320
      %v4352 = vadd.f32 %v4351, %v4321
      %v4353 = vadd.f32 %v4352, %v4322
      %v4354 = vadd.f32 %v4353, %v4323
      %v4355 = vadd.f32 %v4354, %v4324
      %v4356 = vadd.f32 %v4355, %v4325
      %v4357 = vadd.f32 %v4356, %v4326
      %v4358 = vadd.f32 %v4357, %v4327
      %v4359 = vadd.f32 %v4358, %v4328
      %v4360 = vadd.f32 %v4359, %v4329
      %v4361 = vadd.f32 %v4360, %v4330
      %v4362 = vadd.f32 %v4361, %v4331
      %v4363 = vadd.f32 %v4362, %v4332
      %v4364 = vadd.f32 %v4363, %v4333
      %v4365 = vadd.f32 %v4364, %v4334
      %v4366 = vadd.f32 %v4365, %v4335
      %v4367 = vadd.f32 %v4366, %v4336
      %v4368 = vadd.f32 %v4367, %v4337
      %v4369 = vadd.f32 %v4368, %v4338
      %v4370 = vadd.f32 %v4369, %v4339
      %v4371 = vadd.f32 %v4370, %v4340
      %v4372 = vadd.f32 %v4371, %v4341
      %v4373 = vadd.f32 %v4372, %v4342
      %v4374 = vadd.f32 %v4373, %v4343
      %v4375 = vrot.slane %v4374, 4
      %v4376 = vadd.f32 %v4374, %v4375
      %v4377 = vrot.slane %v4376, 2
      %v4378 = vadd.f32 %v4376, %v4377
      %v4379 = vrot.slane %v4378, 1
      %v4380 = vadd.f32 %v4378, %v4379
      %4381 = vst [vmem:[%s203 + $0x1] sm:$0x1] %v4380
      %s4382 = sadd.s32 %s19, %s20
      %s4383 = smul.u32 32, %s4382
      %p4384 = scmp.lt.s32.totalorder %s4383, 63
      %s4385 = scalar_select %p4384, %s4383, 63
      %s4386 = smul.addr %s4385, 4
      %s4387 = scalar_lea.vmem %s2, %s4386
      %s4388 = sadd.s32 %s19, %s20
      %p4389 = scmp.lt.s32.totalorder %s4388, 1
      %s4390 = scalar_select %p4389, %s4388, 1
      %s4391 = smul.addr %s4390, 2
      %s4392 = scalar_lea.vmem %s3, %s4391
      // Predicated region
      $region29: #{resbn_forward.5} parent=27 // pred_check
        %p4393 = pneg %p94
      $region30: #{resbn_forward.5} parent=27 // pred_check_branch
        %4395 = sbr.rel (%p4393) target = $region32
      $region31: #{resbn_forward.5} parent=27 // pred_region
        %s4396 = sadd.s32 %s19, %s20
        %s4397 = smul.u32 32, %s4396
      $region32: #{resbn_forward.5} parent=27 // pred_fallthru
        _
      // Predicated region
      $region33: #{resbn_forward.5} parent=27 // pred_check
        %p4398 = pneg %p122
      $region34: #{resbn_forward.5} parent=27 // pred_check_branch
        %4400 = sbr.rel (%p4398) target = $region36
      $region35: #{resbn_forward.5} parent=27 // pred_region
        %s4401 = sadd.s32 %s19, %s20
      $region36: #{resbn_forward.5} parent=27 // pred_fallthru
        _
    $region28: #{resbn_forward.5} parent=5 // pred_fallthru
      _
    %p4402 = scmp.le.s32.totalorder 2, %s10
    // Predicated region
    $region37: #{resbn_forward.5} parent=5 // pred_check
      %p4403 = pneg %p4402
    $region38: #{resbn_forward.5} parent=5 // pred_check_branch
      %4405 = sbr.rel (%p4403) target = $region40
    $region39: #{resbn_forward.5} parent=5 // pred_region
      %s4406 = ssub.s32 %s10, 2
      // Predicated region
      $region41: #{resbn_forward.5} parent=39 // pred_check
        %p4407 = pneg %p100
      $region42: #{resbn_forward.5} parent=39 // pred_check_branch
        %4409 = sbr.rel (%p4407) target = $region44
      $region43: #{resbn_forward.5} parent=39 // pred_region
        %s4410 = sadd.s32 %s21, %s22
        %s4411 = smul.u32 32, %s4410
        %p4412 = scmp.lt.s32.totalorder %s4411, 63
        %s4413 = scalar_select %p4412, %s4411, 63
        %s4414 = smul.addr %s4413, 4
        %s4415 = scalar_lea.vmem %s2, %s4414
      $region44: #{resbn_forward.5} parent=39 // pred_fallthru
        _
      // Predicated region
      $region45: #{resbn_forward.5} parent=39 // pred_check
        %p4416 = pneg %p128
      $region46: #{resbn_forward.5} parent=39 // pred_check_branch
        %4418 = sbr.rel (%p4416) target = $region48
      $region47: #{resbn_forward.5} parent=39 // pred_region
        %s4419 = sadd.s32 %s21, %s22
        %p4420 = scmp.lt.s32.totalorder %s4419, 1
        %s4421 = scalar_select %p4420, %s4419, 1
        %s4422 = smul.addr %s4421, 2
        %s4423 = scalar_lea.vmem %s3, %s4422
      $region48: #{resbn_forward.5} parent=39 // pred_fallthru
        _
    $region40: #{resbn_forward.5} parent=5 // pred_fallthru
      _
  $region6: #{resbn_forward.5} parent=0 // loop_footer
    %s14 = sadd.s32 1, %s10
  $region7: #{resbn_forward.5} parent=0 // loop_footer_branch
    %9 = sbr.rel target = $region3
  $region8: #{resbn_forward.5} parent=0 // loop_exit
    _

</llo_original>
